<compile_context>
chip_gen: v5e
topology: v5e:2x2
jax: 0.10.0
libtpu: 0.0.40
codegen_flags: <defaults>
</compile_context>

<pallas_src>
import functools

import jax
import jax.numpy as jnp
from jax.experimental import pallas as pl
from jax.experimental.pallas import tpu as pltpu


# ---------------------------------------------------------------------------
# Pallas kernel: one row tile of the fused 3x3 conv (+BN bias, +optional shortcut)
# ---------------------------------------------------------------------------
def _conv_kernel(*refs, tm, halo_pad, taps, relu, has_shortcut):
    if has_shortcut:
        body_ref, halo_ref, w_ref, b_ref, xs_ref, ws_ref, o_ref, win_ref = refs
    else:
        body_ref, halo_ref, w_ref, b_ref, o_ref, win_ref = refs

    # Assemble the halo'd input window for this tile (VMEM-only copies).
    win_ref[pl.ds(0, tm), :] = body_ref[...]
    win_ref[pl.ds(tm, halo_pad), :] = halo_ref[...]

    ng = o_ref.shape[-1]
    acc = jnp.zeros((tm, ng), jnp.float32)
    # 9 shifted-slice matmuls == in-kernel im2col (offsets are static Python ints).
    for t, off in enumerate(taps):
        acc = acc + jnp.dot(win_ref[pl.ds(off, tm), :], w_ref[t],
                            preferred_element_type=jnp.float32)
    if has_shortcut:
        # Fused 1x1-conv projection (or identity) shortcut.
        acc = acc + jnp.dot(xs_ref[...], ws_ref[...],
                            preferred_element_type=jnp.float32)
    acc = acc + b_ref[...]
    if relu:
        acc = jnp.maximum(acc, 0.0)
    o_ref[...] = acc.astype(o_ref.dtype)


# ---------------------------------------------------------------------------
# Pallas wrapper
# ---------------------------------------------------------------------------
def _round_up(x, m):
    return (x + m - 1) // m * m


def _vmem_limit_bytes():
    """Generation-aware scoped-VMEM limit (~3/4 of physical, capped at 100 MiB)."""
    try:
        cap = int(pltpu.get_tpu_info().vmem_capacity_bytes)
    except Exception:  # noqa: BLE001 - conservative fallback if query unavailable
        cap = 64 * 1024 * 1024
    return max(32 * 1024 * 1024, min(cap * 3 // 4, 100 * 1024 * 1024))


def _choose_tm(rows, n, halo_pad):
    """Row tile: multiple of halo_pad (itself a multiple of 16), <= 512 rows,
    shrunk until the grid has >= 4 steps when possible."""
    tm = max(halo_pad, min(512, rows) // halo_pad * halo_pad)
    while n * pl.cdiv(rows, tm) < 4 and tm > halo_pad:
        tm -= halo_pad
    return tm


def _conv3x3(xflat, wtaps, bias, *, n, t_steps, tm, halo_pad, taps, relu,
             xs=None, ws=None, out_dtype=jnp.bfloat16):
    """Fused 3x3 conv over the padded-width row raster.

    xflat: (N, RIN, C) bf16 flattened zero-padded input (RIN = T*tm + halo_pad).
    wtaps: (9, C, Ng) bf16 per-tap weights (BN scale folded, columns padded to Ng).
    bias : (1, Ng) f32.
    xs/ws: optional shortcut input (N, T*tm, Cs) bf16 and weight (Cs, Ng) bf16.
    """
    c = xflat.shape[2]
    ng = wtaps.shape[-1]
    rout = t_steps * tm
    r = tm // halo_pad  # halo blocks per body tile

    in_specs = [
        pl.BlockSpec((None, tm, c), lambda i, j: (i, j, 0)),            # body tile
        pl.BlockSpec((None, halo_pad, c), lambda i, j: (i, (j + 1) * r, 0)),  # halo
        pl.BlockSpec((9, c, ng), lambda i, j: (0, 0, 0)),                # weights
        pl.BlockSpec((1, ng), lambda i, j: (0, 0)),                      # bias
    ]
    args = [xflat, xflat, wtaps, bias]
    if xs is not None:
        cs = xs.shape[-1]
        in_specs += [
            pl.BlockSpec((None, tm, cs), lambda i, j: (i, j, 0)),        # shortcut rows
            pl.BlockSpec((cs, ng), lambda i, j: (0, 0)),                 # shortcut weight
        ]
        args += [xs, ws]

    kernel = functools.partial(_conv_kernel, tm=tm, halo_pad=halo_pad, taps=taps,
                               relu=relu, has_shortcut=xs is not None)
    return pl.pallas_call(
        kernel,
        out_shape=jax.ShapeDtypeStruct((n, rout, ng), out_dtype),
        grid=(n, t_steps),
        in_specs=in_specs,
        out_specs=pl.BlockSpec((None, tm, ng), lambda i, j: (i, j, 0)),
        scratch_shapes=[pltpu.VMEM((tm + halo_pad, c), xflat.dtype)],
        compiler_params=pltpu.CompilerParams(
            dimension_semantics=("parallel", "parallel"),
            vmem_limit_bytes=_vmem_limit_bytes(),
        ),
    )(*args)


# ---------------------------------------------------------------------------
# Glue: layout helpers, BN folding, parameter init, forward pass
# ---------------------------------------------------------------------------
def _to_flat_padded(x_nhwc, rin):
    """(N,H,W,C) -> (N, RIN, C): zero-pad spatial by 1, flatten (H+2)*(W+2) rows."""
    n, h, w, c = x_nhwc.shape
    xp = jnp.pad(x_nhwc, ((0, 0), (1, 1), (1, 1), (0, 0)))
    xf = xp.reshape(n, (h + 2) * (w + 2), c)
    return jnp.pad(xf, ((0, 0), (0, rin - (h + 2) * (w + 2)), (0, 0)))


def _to_flat_sc(x_nhwc, rout):
    """(N,H,W,C) -> (N, ROUT, C): padded-width raster aligned with output rows."""
    n, h, w, c = x_nhwc.shape
    xp = jnp.pad(x_nhwc, ((0, 0), (0, 0), (0, 2), (0, 0)))
    xf = xp.reshape(n, h * (w + 2), c)
    return jnp.pad(xf, ((0, 0), (0, rout - h * (w + 2)), (0, 0)))


def _from_flat(yflat, n, h, w):
    """(N, ROUT, Ng) padded-width raster -> (N, H, W, Ng)."""
    y = yflat[:, :h * (w + 2), :].reshape(n, h, w + 2, -1)
    return y[:, :, :w, :]


def _fold_bn(gamma, beta, conv_bias, eps=1e-5):
    # Eval-mode BN with init-time running stats (mean = 0, var = 1).
    scale = gamma / jnp.sqrt(1.0 + eps)
    bias = conv_bias * scale + beta
    return scale, bias


def _fold_conv3x3(w_oihw, scale, ng):
    """(Cout, Cin, 3, 3) -> (9, Cin, Ng) bf16 with BN scale folded, columns padded."""
    cout, cin = w_oihw.shape[:2]
    w = jnp.transpose(w_oihw, (2, 3, 1, 0)).reshape(9, cin, cout) * scale[None, None, :]
    w = jnp.pad(w, ((0, 0), (0, 0), (0, ng - cout)))
    return w.astype(jnp.bfloat16)


def _pad_bias(b, ng):
    return jnp.pad(b, (0, ng - b.shape[0])).reshape(1, ng).astype(jnp.float32)


def init_params(key, cin, cout):
    ks = jax.random.split(key, 12)
    p = {
        "w1": jax.random.normal(ks[0], (cout, cin, 3, 3), jnp.float32) * 0.1,
        "b1": jax.random.normal(ks[1], (cout,), jnp.float32) * 0.1,
        "g1": 1.0 + 0.1 * jax.random.normal(ks[2], (cout,), jnp.float32),
        "beta1": 0.1 * jax.random.normal(ks[3], (cout,), jnp.float32),
        "w2": jax.random.normal(ks[4], (cout, cout, 3, 3), jnp.float32) * 0.1,
        "b2": jax.random.normal(ks[5], (cout,), jnp.float32) * 0.1,
        "g2": 1.0 + 0.1 * jax.random.normal(ks[6], (cout,), jnp.float32),
        "beta2": 0.1 * jax.random.normal(ks[7], (cout,), jnp.float32),
    }
    if cin != cout:
        p.update({
            "ws": jax.random.normal(ks[8], (cout, cin, 1, 1), jnp.float32) * 0.1,
            "bs": jax.random.normal(ks[9], (cout,), jnp.float32) * 0.1,
            "gs": 1.0 + 0.1 * jax.random.normal(ks[10], (cout,), jnp.float32),
            "betas": 0.1 * jax.random.normal(ks[11], (cout,), jnp.float32),
        })
    return p


def residual_block_forward(x_nchw, p, *, cin, cout):
    n, _, h, w = x_nchw.shape
    wp = w + 2
    rows = h * wp                         # real output rows per image (padded-width raster)
    halo = 2 * wp + 2                     # max tap offset within the flat raster
    halo_pad = _round_up(halo, 16)
    tm = _choose_tm(rows, n, halo_pad)
    t_steps = pl.cdiv(rows, tm)
    rout = t_steps * tm
    rin = rout + halo_pad
    taps = tuple(kh * wp + kw for kh in range(3) for kw in range(3))
    ng = max(_round_up(cout, 128), 128)   # lane-dense output width

    x = jnp.transpose(x_nchw, (0, 2, 3, 1)).astype(jnp.bfloat16)   # NHWC, bf16

    # --- conv1 + bn1 + relu ---
    s1, b1 = _fold_bn(p["g1"], p["beta1"], p["b1"])
    w1 = _fold_conv3x3(p["w1"], s1, ng)
    h1 = _conv3x3(_to_flat_padded(x, rin), w1, _pad_bias(b1, ng),
                  n=n, t_steps=t_steps, tm=tm, halo_pad=halo_pad,
                  taps=taps, relu=True)
    h_nhwc = _from_flat(h1, n, h, w)[..., :cout]                   # (N,H,W,cout) bf16

    # --- conv2 + bn2 + fused shortcut + relu (single kernel) ---
    s2, b2 = _fold_bn(p["g2"], p["beta2"], p["b2"])
    w2 = _fold_conv3x3(p["w2"], s2, ng)
    if cin != cout:
        ss, bs = _fold_bn(p["gs"], p["betas"], p["bs"])
        ws = p["ws"][:, :, 0, 0].T * ss[None, :]                   # (cin, cout)
        ws = jnp.pad(ws, ((0, 0), (0, ng - cout))).astype(jnp.bfloat16)
        btot = _pad_bias(b2 + bs, ng)
    else:
        ws = jnp.pad(jnp.eye(cin, dtype=jnp.float32),
                     ((0, 0), (0, ng - cout))).astype(jnp.bfloat16)
        btot = _pad_bias(b2, ng)

    out_flat = _conv3x3(_to_flat_padded(h_nhwc, rin), w2, btot,
                        n=n, t_steps=t_steps, tm=tm, halo_pad=halo_pad,
                        taps=taps, relu=True,
                        xs=_to_flat_sc(x, rout), ws=ws)
    out_nhwc = _from_flat(out_flat, n, h, w)[..., :cout]
    return jnp.transpose(out_nhwc, (0, 3, 1, 2)).astype(jnp.float32)  # NCHW f32


# ---------------------------------------------------------------------------
if __name__ == "__main__":
    key = jax.random.PRNGKey(0)
    kx, kp = jax.random.split(key)

    N, Cin, Cout, H, W = 2, 4, 8, 16, 16
    x = jax.random.normal(kx, (N, Cin, H, W), jnp.float32)
    params = init_params(kp, Cin, Cout)

    fwd = jax.jit(functools.partial(residual_block_forward, cin=Cin, cout=Cout))
    out = jax.block_until_ready(fwd(x, params))

    assert out.shape == (N, Cout, H, W), out.shape
    assert bool(jnp.all(out >= 0.0))      # final ReLU
    assert bool(jnp.all(jnp.isfinite(out)))
    print("KERNEL_OK")
</pallas_src>

<mosaic_0001>
module attributes {stable_mosaic.version = 11 : i64} {
  func.func @_conv_kernel(%arg0: i32, %arg1: i32, %arg2: memref<1x240x4xbf16, #tpu.memory_space<vmem>>, %arg3: memref<1x48x4xbf16, #tpu.memory_space<vmem>>, %arg4: memref<9x4x128xbf16, #tpu.memory_space<vmem>>, %arg5: memref<1x128xf32, #tpu.memory_space<vmem>>, %arg6: memref<1x240x128xbf16, #tpu.memory_space<vmem>>, %arg7: memref<288x4xbf16, #tpu.memory_space<vmem>>) attributes {dimension_semantics = [#tpu.dimension_semantics<parallel>, #tpu.dimension_semantics<parallel>], iteration_bounds = array<i64: 2, 2>, scalar_prefetch = 0 : i64, scratch_operands = 1 : i64, tpu.core_type = #tpu.core_type<tc>, window_params = [{transform_indices = @transform_0, window_bounds = array<i64: 1, 240, 4>}, {transform_indices = @transform_1, window_bounds = array<i64: 1, 48, 4>}, {pipeline_mode = #tpu.pipeline_mode<synchronous>, transform_indices = @transform_2, window_bounds = array<i64: 9, 4, 128>}, {pipeline_mode = #tpu.pipeline_mode<synchronous>, transform_indices = @transform_3, window_bounds = array<i64: 1, 128>}, {transform_indices = @transform_4, window_bounds = array<i64: 1, 240, 128>}]} {
    %c0 = arith.constant 0 : index
    %c0_0 = arith.constant 0 : index
    %c0_1 = arith.constant 0 : index
    %0 = vector.load %arg2[%c0, %c0_0, %c0_1] : memref<1x240x4xbf16, #tpu.memory_space<vmem>>, vector<1x240x4xbf16>
    %1 = vector.shape_cast %0 : vector<1x240x4xbf16> to vector<240x4xbf16>
    %c0_2 = arith.constant 0 : index
    %c0_3 = arith.constant 0 : index
    %2 = vector.load %arg7[%c0_2, %c0_3] : memref<288x4xbf16, #tpu.memory_space<vmem>>, vector<240x4xbf16>
    tpu.vector_store %arg7[%c0_2, %c0_3], %1 {strides = array<i32>} : memref<288x4xbf16, #tpu.memory_space<vmem>>, vector<240x4xbf16>,
    %c0_4 = arith.constant 0 : index
    %c0_5 = arith.constant 0 : index
    %c0_6 = arith.constant 0 : index
    %3 = vector.load %arg3[%c0_4, %c0_5, %c0_6] : memref<1x48x4xbf16, #tpu.memory_space<vmem>>, vector<1x48x4xbf16>
    %4 = vector.shape_cast %3 : vector<1x48x4xbf16> to vector<48x4xbf16>
    %c240 = arith.constant 240 : index
    %c0_7 = arith.constant 0 : index
    %5 = vector.load %arg7[%c240, %c0_7] : memref<288x4xbf16, #tpu.memory_space<vmem>>, vector<48x4xbf16>
    tpu.vector_store %arg7[%c240, %c0_7], %4 {strides = array<i32>} : memref<288x4xbf16, #tpu.memory_space<vmem>>, vector<48x4xbf16>,
    %cst = arith.constant 0.000000e+00 : f32
    %6 = vector.broadcast %cst : f32 to vector<240x128xf32>
    %c0_8 = arith.constant 0 : index
    %c0_9 = arith.constant 0 : index
    %7 = vector.load %arg7[%c0_8, %c0_9] : memref<288x4xbf16, #tpu.memory_space<vmem>>, vector<240x4xbf16>
    %c0_10 = arith.constant 0 : index
    %c0_11 = arith.constant 0 : index
    %c0_12 = arith.constant 0 : index
    %8 = vector.load %arg4[%c0_10, %c0_11, %c0_12] : memref<9x4x128xbf16, #tpu.memory_space<vmem>>, vector<1x4x128xbf16>
    %9 = vector.shape_cast %8 : vector<1x4x128xbf16> to vector<4x128xbf16>
    %cst_13 = arith.constant dense<0.000000e+00> : vector<240x128xf32>
    %10 = tpu.matmul %7, %9, %cst_13 {dimension_numbers = #tpu.dot_dimension_numbers<[1], [0], [0], [1], [0, 0, 1, 1], [], []>} : vector<240x4xbf16>, vector<4x128xbf16>, vector<240x128xf32> -> vector<240x128xf32>
    %11 = arith.addf %6, %10 : vector<240x128xf32>
    %c1 = arith.constant 1 : index
    %c0_14 = arith.constant 0 : index
    %12 = vector.load %arg7[%c1, %c0_14] : memref<288x4xbf16, #tpu.memory_space<vmem>>, vector<240x4xbf16>
    %c1_15 = arith.constant 1 : index
    %c0_16 = arith.constant 0 : index
    %c0_17 = arith.constant 0 : index
    %13 = vector.load %arg4[%c1_15, %c0_16, %c0_17] : memref<9x4x128xbf16, #tpu.memory_space<vmem>>, vector<1x4x128xbf16>
    %14 = vector.shape_cast %13 : vector<1x4x128xbf16> to vector<4x128xbf16>
    %cst_18 = arith.constant dense<0.000000e+00> : vector<240x128xf32>
    %15 = tpu.matmul %12, %14, %cst_18 {dimension_numbers = #tpu.dot_dimension_numbers<[1], [0], [0], [1], [0, 0, 1, 1], [], []>} : vector<240x4xbf16>, vector<4x128xbf16>, vector<240x128xf32> -> vector<240x128xf32>
    %16 = arith.addf %11, %15 : vector<240x128xf32>
    %c2 = arith.constant 2 : index
    %c0_19 = arith.constant 0 : index
    %17 = vector.load %arg7[%c2, %c0_19] : memref<288x4xbf16, #tpu.memory_space<vmem>>, vector<240x4xbf16>
    %c2_20 = arith.constant 2 : index
    %c0_21 = arith.constant 0 : index
    %c0_22 = arith.constant 0 : index
    %18 = vector.load %arg4[%c2_20, %c0_21, %c0_22] : memref<9x4x128xbf16, #tpu.memory_space<vmem>>, vector<1x4x128xbf16>
    %19 = vector.shape_cast %18 : vector<1x4x128xbf16> to vector<4x128xbf16>
    %cst_23 = arith.constant dense<0.000000e+00> : vector<240x128xf32>
    %20 = tpu.matmul %17, %19, %cst_23 {dimension_numbers = #tpu.dot_dimension_numbers<[1], [0], [0], [1], [0, 0, 1, 1], [], []>} : vector<240x4xbf16>, vector<4x128xbf16>, vector<240x128xf32> -> vector<240x128xf32>
    %21 = arith.addf %16, %20 : vector<240x128xf32>
    %c18 = arith.constant 18 : index
    %c0_24 = arith.constant 0 : index
    %22 = vector.load %arg7[%c18, %c0_24] : memref<288x4xbf16, #tpu.memory_space<vmem>>, vector<240x4xbf16>
    %c3 = arith.constant 3 : index
    %c0_25 = arith.constant 0 : index
    %c0_26 = arith.constant 0 : index
    %23 = vector.load %arg4[%c3, %c0_25, %c0_26] : memref<9x4x128xbf16, #tpu.memory_space<vmem>>, vector<1x4x128xbf16>
    %24 = vector.shape_cast %23 : vector<1x4x128xbf16> to vector<4x128xbf16>
    %cst_27 = arith.constant dense<0.000000e+00> : vector<240x128xf32>
    %25 = tpu.matmul %22, %24, %cst_27 {dimension_numbers = #tpu.dot_dimension_numbers<[1], [0], [0], [1], [0, 0, 1, 1], [], []>} : vector<240x4xbf16>, vector<4x128xbf16>, vector<240x128xf32> -> vector<240x128xf32>
    %26 = arith.addf %21, %25 : vector<240x128xf32>
    %c19 = arith.constant 19 : index
    %c0_28 = arith.constant 0 : index
    %27 = vector.load %arg7[%c19, %c0_28] : memref<288x4xbf16, #tpu.memory_space<vmem>>, vector<240x4xbf16>
    %c4 = arith.constant 4 : index
    %c0_29 = arith.constant 0 : index
    %c0_30 = arith.constant 0 : index
    %28 = vector.load %arg4[%c4, %c0_29, %c0_30] : memref<9x4x128xbf16, #tpu.memory_space<vmem>>, vector<1x4x128xbf16>
    %29 = vector.shape_cast %28 : vector<1x4x128xbf16> to vector<4x128xbf16>
    %cst_31 = arith.constant dense<0.000000e+00> : vector<240x128xf32>
    %30 = tpu.matmul %27, %29, %cst_31 {dimension_numbers = #tpu.dot_dimension_numbers<[1], [0], [0], [1], [0, 0, 1, 1], [], []>} : vector<240x4xbf16>, vector<4x128xbf16>, vector<240x128xf32> -> vector<240x128xf32>
    %31 = arith.addf %26, %30 : vector<240x128xf32>
    %c20 = arith.constant 20 : index
    %c0_32 = arith.constant 0 : index
    %32 = vector.load %arg7[%c20, %c0_32] : memref<288x4xbf16, #tpu.memory_space<vmem>>, vector<240x4xbf16>
    %c5 = arith.constant 5 : index
    %c0_33 = arith.constant 0 : index
    %c0_34 = arith.constant 0 : index
    %33 = vector.load %arg4[%c5, %c0_33, %c0_34] : memref<9x4x128xbf16, #tpu.memory_space<vmem>>, vector<1x4x128xbf16>
    %34 = vector.shape_cast %33 : vector<1x4x128xbf16> to vector<4x128xbf16>
    %cst_35 = arith.constant dense<0.000000e+00> : vector<240x128xf32>
    %35 = tpu.matmul %32, %34, %cst_35 {dimension_numbers = #tpu.dot_dimension_numbers<[1], [0], [0], [1], [0, 0, 1, 1], [], []>} : vector<240x4xbf16>, vector<4x128xbf16>, vector<240x128xf32> -> vector<240x128xf32>
    %36 = arith.addf %31, %35 : vector<240x128xf32>
    %c36 = arith.constant 36 : index
    %c0_36 = arith.constant 0 : index
    %37 = vector.load %arg7[%c36, %c0_36] : memref<288x4xbf16, #tpu.memory_space<vmem>>, vector<240x4xbf16>
    %c6 = arith.constant 6 : index
    %c0_37 = arith.constant 0 : index
    %c0_38 = arith.constant 0 : index
    %38 = vector.load %arg4[%c6, %c0_37, %c0_38] : memref<9x4x128xbf16, #tpu.memory_space<vmem>>, vector<1x4x128xbf16>
    %39 = vector.shape_cast %38 : vector<1x4x128xbf16> to vector<4x128xbf16>
    %cst_39 = arith.constant dense<0.000000e+00> : vector<240x128xf32>
    %40 = tpu.matmul %37, %39, %cst_39 {dimension_numbers = #tpu.dot_dimension_numbers<[1], [0], [0], [1], [0, 0, 1, 1], [], []>} : vector<240x4xbf16>, vector<4x128xbf16>, vector<240x128xf32> -> vector<240x128xf32>
    %41 = arith.addf %36, %40 : vector<240x128xf32>
    %c37 = arith.constant 37 : index
    %c0_40 = arith.constant 0 : index
    %42 = vector.load %arg7[%c37, %c0_40] : memref<288x4xbf16, #tpu.memory_space<vmem>>, vector<240x4xbf16>
    %c7 = arith.constant 7 : index
    %c0_41 = arith.constant 0 : index
    %c0_42 = arith.constant 0 : index
    %43 = vector.load %arg4[%c7, %c0_41, %c0_42] : memref<9x4x128xbf16, #tpu.memory_space<vmem>>, vector<1x4x128xbf16>
    %44 = vector.shape_cast %43 : vector<1x4x128xbf16> to vector<4x128xbf16>
    %cst_43 = arith.constant dense<0.000000e+00> : vector<240x128xf32>
    %45 = tpu.matmul %42, %44, %cst_43 {dimension_numbers = #tpu.dot_dimension_numbers<[1], [0], [0], [1], [0, 0, 1, 1], [], []>} : vector<240x4xbf16>, vector<4x128xbf16>, vector<240x128xf32> -> vector<240x128xf32>
    %46 = arith.addf %41, %45 : vector<240x128xf32>
    %c38 = arith.constant 38 : index
    %c0_44 = arith.constant 0 : index
    %47 = vector.load %arg7[%c38, %c0_44] : memref<288x4xbf16, #tpu.memory_space<vmem>>, vector<240x4xbf16>
    %c8 = arith.constant 8 : index
    %c0_45 = arith.constant 0 : index
    %c0_46 = arith.constant 0 : index
    %48 = vector.load %arg4[%c8, %c0_45, %c0_46] : memref<9x4x128xbf16, #tpu.memory_space<vmem>>, vector<1x4x128xbf16>
    %49 = vector.shape_cast %48 : vector<1x4x128xbf16> to vector<4x128xbf16>
    %cst_47 = arith.constant dense<0.000000e+00> : vector<240x128xf32>
    %50 = tpu.matmul %47, %49, %cst_47 {dimension_numbers = #tpu.dot_dimension_numbers<[1], [0], [0], [1], [0, 0, 1, 1], [], []>} : vector<240x4xbf16>, vector<4x128xbf16>, vector<240x128xf32> -> vector<240x128xf32>
    %51 = arith.addf %46, %50 : vector<240x128xf32>
    %c0_48 = arith.constant 0 : index
    %c0_49 = arith.constant 0 : index
    %52 = vector.load %arg5[%c0_48, %c0_49] : memref<1x128xf32, #tpu.memory_space<vmem>>, vector<1x128xf32>
    %53 = vector.broadcast %52 : vector<1x128xf32> to vector<240x128xf32>
    %54 = arith.addf %51, %53 : vector<240x128xf32>
    %cst_50 = arith.constant 0.000000e+00 : f32
    %55 = vector.broadcast %cst_50 : f32 to vector<240x128xf32>
    %56 = arith.maximumf %54, %55 : vector<240x128xf32>
    %57 = arith.truncf %56 : vector<240x128xf32> to vector<240x128xbf16>
    %c0_51 = arith.constant 0 : index
    %c0_52 = arith.constant 0 : index
    %c0_53 = arith.constant 0 : index
    %58 = vector.load %arg6[%c0_51, %c0_52, %c0_53] : memref<1x240x128xbf16, #tpu.memory_space<vmem>>, vector<1x240x128xbf16>
    %59 = vector.shape_cast %58 : vector<1x240x128xbf16> to vector<240x128xbf16>
    %60 = vector.shape_cast %57 : vector<240x128xbf16> to vector<1x240x128xbf16>
    tpu.vector_store %arg6[%c0_51, %c0_52, %c0_53], %60 {strides = array<i32>} : memref<1x240x128xbf16, #tpu.memory_space<vmem>>, vector<1x240x128xbf16>,
    return
  }
  func.func @transform_0(%arg0: i32, %arg1: i32) -> (i32, i32, i32) {
    %c0_i32 = arith.constant 0 : i32
    %c0_i32_0 = arith.constant 0 : i32
    return %arg0, %arg1, %c0_i32 : i32, i32, i32
  }
  func.func @transform_1(%arg0: i32, %arg1: i32) -> (i32, i32, i32) {
    %c1_i32 = arith.constant 1 : i32
    %0 = arith.addi %arg1, %c1_i32 : i32
    %c5_i32 = arith.constant 5 : i32
    %1 = arith.muli %0, %c5_i32 : i32
    %c0_i32 = arith.constant 0 : i32
    %c0_i32_0 = arith.constant 0 : i32
    return %arg0, %1, %c0_i32 : i32, i32, i32
  }
  func.func @transform_2(%arg0: i32, %arg1: i32) -> (i32, i32, i32) {
    %c0_i32 = arith.constant 0 : i32
    %c0_i32_0 = arith.constant 0 : i32
    %c0_i32_1 = arith.constant 0 : i32
    %c0_i32_2 = arith.constant 0 : i32
    return %c0_i32, %c0_i32_0, %c0_i32_1 : i32, i32, i32
  }
  func.func @transform_3(%arg0: i32, %arg1: i32) -> (i32, i32) {
    %c0_i32 = arith.constant 0 : i32
    %c0_i32_0 = arith.constant 0 : i32
    %c0_i32_1 = arith.constant 0 : i32
    return %c0_i32, %c0_i32_0 : i32, i32
  }
  func.func @transform_4(%arg0: i32, %arg1: i32) -> (i32, i32, i32) {
    %c0_i32 = arith.constant 0 : i32
    %c0_i32_0 = arith.constant 0 : i32
    return %arg0, %arg1, %c0_i32 : i32, i32, i32
  }
}

module attributes {stable_mosaic.version = 11 : i64} {
  func.func @_conv_kernel(%arg0: i32, %arg1: i32, %arg2: memref<1x240x8xbf16, #tpu.memory_space<vmem>>, %arg3: memref<1x48x8xbf16, #tpu.memory_space<vmem>>, %arg4: memref<9x8x128xbf16, #tpu.memory_space<vmem>>, %arg5: memref<1x128xf32, #tpu.memory_space<vmem>>, %arg6: memref<1x240x4xbf16, #tpu.memory_space<vmem>>, %arg7: memref<4x128xbf16, #tpu.memory_space<vmem>>, %arg8: memref<1x240x128xbf16, #tpu.memory_space<vmem>>, %arg9: memref<288x8xbf16, #tpu.memory_space<vmem>>) attributes {dimension_semantics = [#tpu.dimension_semantics<parallel>, #tpu.dimension_semantics<parallel>], iteration_bounds = array<i64: 2, 2>, scalar_prefetch = 0 : i64, scratch_operands = 1 : i64, tpu.core_type = #tpu.core_type<tc>, window_params = [{transform_indices = @transform_0, window_bounds = array<i64: 1, 240, 8>}, {transform_indices = @transform_1, window_bounds = array<i64: 1, 48, 8>}, {pipeline_mode = #tpu.pipeline_mode<synchronous>, transform_indices = @transform_2, window_bounds = array<i64: 9, 8, 128>}, {pipeline_mode = #tpu.pipeline_mode<synchronous>, transform_indices = @transform_3, window_bounds = array<i64: 1, 128>}, {transform_indices = @transform_4, window_bounds = array<i64: 1, 240, 4>}, {pipeline_mode = #tpu.pipeline_mode<synchronous>, transform_indices = @transform_5, window_bounds = array<i64: 4, 128>}, {transform_indices = @transform_6, window_bounds = array<i64: 1, 240, 128>}]} {
    %c0 = arith.constant 0 : index
    %c0_0 = arith.constant 0 : index
    %c0_1 = arith.constant 0 : index
    %0 = vector.load %arg2[%c0, %c0_0, %c0_1] : memref<1x240x8xbf16, #tpu.memory_space<vmem>>, vector<1x240x8xbf16>
    %1 = vector.shape_cast %0 : vector<1x240x8xbf16> to vector<240x8xbf16>
    %c0_2 = arith.constant 0 : index
    %c0_3 = arith.constant 0 : index
    %2 = vector.load %arg9[%c0_2, %c0_3] : memref<288x8xbf16, #tpu.memory_space<vmem>>, vector<240x8xbf16>
    tpu.vector_store %arg9[%c0_2, %c0_3], %1 {strides = array<i32>} : memref<288x8xbf16, #tpu.memory_space<vmem>>, vector<240x8xbf16>,
    %c0_4 = arith.constant 0 : index
    %c0_5 = arith.constant 0 : index
    %c0_6 = arith.constant 0 : index
    %3 = vector.load %arg3[%c0_4, %c0_5, %c0_6] : memref<1x48x8xbf16, #tpu.memory_space<vmem>>, vector<1x48x8xbf16>
    %4 = vector.shape_cast %3 : vector<1x48x8xbf16> to vector<48x8xbf16>
    %c240 = arith.constant 240 : index
    %c0_7 = arith.constant 0 : index
    %5 = vector.load %arg9[%c240, %c0_7] : memref<288x8xbf16, #tpu.memory_space<vmem>>, vector<48x8xbf16>
    tpu.vector_store %arg9[%c240, %c0_7], %4 {strides = array<i32>} : memref<288x8xbf16, #tpu.memory_space<vmem>>, vector<48x8xbf16>,
    %cst = arith.constant 0.000000e+00 : f32
    %6 = vector.broadcast %cst : f32 to vector<240x128xf32>
    %c0_8 = arith.constant 0 : index
    %c0_9 = arith.constant 0 : index
    %7 = vector.load %arg9[%c0_8, %c0_9] : memref<288x8xbf16, #tpu.memory_space<vmem>>, vector<240x8xbf16>
    %c0_10 = arith.constant 0 : index
    %c0_11 = arith.constant 0 : index
    %c0_12 = arith.constant 0 : index
    %8 = vector.load %arg4[%c0_10, %c0_11, %c0_12] : memref<9x8x128xbf16, #tpu.memory_space<vmem>>, vector<1x8x128xbf16>
    %9 = vector.shape_cast %8 : vector<1x8x128xbf16> to vector<8x128xbf16>
    %cst_13 = arith.constant dense<0.000000e+00> : vector<240x128xf32>
    %10 = tpu.matmul %7, %9, %cst_13 {dimension_numbers = #tpu.dot_dimension_numbers<[1], [0], [0], [1], [0, 0, 1, 1], [], []>} : vector<240x8xbf16>, vector<8x128xbf16>, vector<240x128xf32> -> vector<240x128xf32>
    %11 = arith.addf %6, %10 : vector<240x128xf32>
    %c1 = arith.constant 1 : index
    %c0_14 = arith.constant 0 : index
    %12 = vector.load %arg9[%c1, %c0_14] : memref<288x8xbf16, #tpu.memory_space<vmem>>, vector<240x8xbf16>
    %c1_15 = arith.constant 1 : index
    %c0_16 = arith.constant 0 : index
    %c0_17 = arith.constant 0 : index
    %13 = vector.load %arg4[%c1_15, %c0_16, %c0_17] : memref<9x8x128xbf16, #tpu.memory_space<vmem>>, vector<1x8x128xbf16>
    %14 = vector.shape_cast %13 : vector<1x8x128xbf16> to vector<8x128xbf16>
    %cst_18 = arith.constant dense<0.000000e+00> : vector<240x128xf32>
    %15 = tpu.matmul %12, %14, %cst_18 {dimension_numbers = #tpu.dot_dimension_numbers<[1], [0], [0], [1], [0, 0, 1, 1], [], []>} : vector<240x8xbf16>, vector<8x128xbf16>, vector<240x128xf32> -> vector<240x128xf32>
    %16 = arith.addf %11, %15 : vector<240x128xf32>
    %c2 = arith.constant 2 : index
    %c0_19 = arith.constant 0 : index
    %17 = vector.load %arg9[%c2, %c0_19] : memref<288x8xbf16, #tpu.memory_space<vmem>>, vector<240x8xbf16>
    %c2_20 = arith.constant 2 : index
    %c0_21 = arith.constant 0 : index
    %c0_22 = arith.constant 0 : index
    %18 = vector.load %arg4[%c2_20, %c0_21, %c0_22] : memref<9x8x128xbf16, #tpu.memory_space<vmem>>, vector<1x8x128xbf16>
    %19 = vector.shape_cast %18 : vector<1x8x128xbf16> to vector<8x128xbf16>
    %cst_23 = arith.constant dense<0.000000e+00> : vector<240x128xf32>
    %20 = tpu.matmul %17, %19, %cst_23 {dimension_numbers = #tpu.dot_dimension_numbers<[1], [0], [0], [1], [0, 0, 1, 1], [], []>} : vector<240x8xbf16>, vector<8x128xbf16>, vector<240x128xf32> -> vector<240x128xf32>
    %21 = arith.addf %16, %20 : vector<240x128xf32>
    %c18 = arith.constant 18 : index
    %c0_24 = arith.constant 0 : index
    %22 = vector.load %arg9[%c18, %c0_24] : memref<288x8xbf16, #tpu.memory_space<vmem>>, vector<240x8xbf16>
    %c3 = arith.constant 3 : index
    %c0_25 = arith.constant 0 : index
    %c0_26 = arith.constant 0 : index
    %23 = vector.load %arg4[%c3, %c0_25, %c0_26] : memref<9x8x128xbf16, #tpu.memory_space<vmem>>, vector<1x8x128xbf16>
    %24 = vector.shape_cast %23 : vector<1x8x128xbf16> to vector<8x128xbf16>
    %cst_27 = arith.constant dense<0.000000e+00> : vector<240x128xf32>
    %25 = tpu.matmul %22, %24, %cst_27 {dimension_numbers = #tpu.dot_dimension_numbers<[1], [0], [0], [1], [0, 0, 1, 1], [], []>} : vector<240x8xbf16>, vector<8x128xbf16>, vector<240x128xf32> -> vector<240x128xf32>
    %26 = arith.addf %21, %25 : vector<240x128xf32>
    %c19 = arith.constant 19 : index
    %c0_28 = arith.constant 0 : index
    %27 = vector.load %arg9[%c19, %c0_28] : memref<288x8xbf16, #tpu.memory_space<vmem>>, vector<240x8xbf16>
    %c4 = arith.constant 4 : index
    %c0_29 = arith.constant 0 : index
    %c0_30 = arith.constant 0 : index
    %28 = vector.load %arg4[%c4, %c0_29, %c0_30] : memref<9x8x128xbf16, #tpu.memory_space<vmem>>, vector<1x8x128xbf16>
    %29 = vector.shape_cast %28 : vector<1x8x128xbf16> to vector<8x128xbf16>
    %cst_31 = arith.constant dense<0.000000e+00> : vector<240x128xf32>
    %30 = tpu.matmul %27, %29, %cst_31 {dimension_numbers = #tpu.dot_dimension_numbers<[1], [0], [0], [1], [0, 0, 1, 1], [], []>} : vector<240x8xbf16>, vector<8x128xbf16>, vector<240x128xf32> -> vector<240x128xf32>
    %31 = arith.addf %26, %30 : vector<240x128xf32>
    %c20 = arith.constant 20 : index
    %c0_32 = arith.constant 0 : index
    %32 = vector.load %arg9[%c20, %c0_32] : memref<288x8xbf16, #tpu.memory_space<vmem>>, vector<240x8xbf16>
    %c5 = arith.constant 5 : index
    %c0_33 = arith.constant 0 : index
    %c0_34 = arith.constant 0 : index
    %33 = vector.load %arg4[%c5, %c0_33, %c0_34] : memref<9x8x128xbf16, #tpu.memory_space<vmem>>, vector<1x8x128xbf16>
    %34 = vector.shape_cast %33 : vector<1x8x128xbf16> to vector<8x128xbf16>
    %cst_35 = arith.constant dense<0.000000e+00> : vector<240x128xf32>
    %35 = tpu.matmul %32, %34, %cst_35 {dimension_numbers = #tpu.dot_dimension_numbers<[1], [0], [0], [1], [0, 0, 1, 1], [], []>} : vector<240x8xbf16>, vector<8x128xbf16>, vector<240x128xf32> -> vector<240x128xf32>
    %36 = arith.addf %31, %35 : vector<240x128xf32>
    %c36 = arith.constant 36 : index
    %c0_36 = arith.constant 0 : index
    %37 = vector.load %arg9[%c36, %c0_36] : memref<288x8xbf16, #tpu.memory_space<vmem>>, vector<240x8xbf16>
    %c6 = arith.constant 6 : index
    %c0_37 = arith.constant 0 : index
    %c0_38 = arith.constant 0 : index
    %38 = vector.load %arg4[%c6, %c0_37, %c0_38] : memref<9x8x128xbf16, #tpu.memory_space<vmem>>, vector<1x8x128xbf16>
    %39 = vector.shape_cast %38 : vector<1x8x128xbf16> to vector<8x128xbf16>
    %cst_39 = arith.constant dense<0.000000e+00> : vector<240x128xf32>
    %40 = tpu.matmul %37, %39, %cst_39 {dimension_numbers = #tpu.dot_dimension_numbers<[1], [0], [0], [1], [0, 0, 1, 1], [], []>} : vector<240x8xbf16>, vector<8x128xbf16>, vector<240x128xf32> -> vector<240x128xf32>
    %41 = arith.addf %36, %40 : vector<240x128xf32>
    %c37 = arith.constant 37 : index
    %c0_40 = arith.constant 0 : index
    %42 = vector.load %arg9[%c37, %c0_40] : memref<288x8xbf16, #tpu.memory_space<vmem>>, vector<240x8xbf16>
    %c7 = arith.constant 7 : index
    %c0_41 = arith.constant 0 : index
    %c0_42 = arith.constant 0 : index
    %43 = vector.load %arg4[%c7, %c0_41, %c0_42] : memref<9x8x128xbf16, #tpu.memory_space<vmem>>, vector<1x8x128xbf16>
    %44 = vector.shape_cast %43 : vector<1x8x128xbf16> to vector<8x128xbf16>
    %cst_43 = arith.constant dense<0.000000e+00> : vector<240x128xf32>
    %45 = tpu.matmul %42, %44, %cst_43 {dimension_numbers = #tpu.dot_dimension_numbers<[1], [0], [0], [1], [0, 0, 1, 1], [], []>} : vector<240x8xbf16>, vector<8x128xbf16>, vector<240x128xf32> -> vector<240x128xf32>
    %46 = arith.addf %41, %45 : vector<240x128xf32>
    %c38 = arith.constant 38 : index
    %c0_44 = arith.constant 0 : index
    %47 = vector.load %arg9[%c38, %c0_44] : memref<288x8xbf16, #tpu.memory_space<vmem>>, vector<240x8xbf16>
    %c8 = arith.constant 8 : index
    %c0_45 = arith.constant 0 : index
    %c0_46 = arith.constant 0 : index
    %48 = vector.load %arg4[%c8, %c0_45, %c0_46] : memref<9x8x128xbf16, #tpu.memory_space<vmem>>, vector<1x8x128xbf16>
    %49 = vector.shape_cast %48 : vector<1x8x128xbf16> to vector<8x128xbf16>
    %cst_47 = arith.constant dense<0.000000e+00> : vector<240x128xf32>
    %50 = tpu.matmul %47, %49, %cst_47 {dimension_numbers = #tpu.dot_dimension_numbers<[1], [0], [0], [1], [0, 0, 1, 1], [], []>} : vector<240x8xbf16>, vector<8x128xbf16>, vector<240x128xf32> -> vector<240x128xf32>
    %51 = arith.addf %46, %50 : vector<240x128xf32>
    %c0_48 = arith.constant 0 : index
    %c0_49 = arith.constant 0 : index
    %c0_50 = arith.constant 0 : index
    %52 = vector.load %arg6[%c0_48, %c0_49, %c0_50] : memref<1x240x4xbf16, #tpu.memory_space<vmem>>, vector<1x240x4xbf16>
    %53 = vector.shape_cast %52 : vector<1x240x4xbf16> to vector<240x4xbf16>
    %c0_51 = arith.constant 0 : index
    %c0_52 = arith.constant 0 : index
    %54 = vector.load %arg7[%c0_51, %c0_52] : memref<4x128xbf16, #tpu.memory_space<vmem>>, vector<4x128xbf16>
    %cst_53 = arith.constant dense<0.000000e+00> : vector<240x128xf32>
    %55 = tpu.matmul %53, %54, %cst_53 {dimension_numbers = #tpu.dot_dimension_numbers<[1], [0], [0], [1], [0, 0, 1, 1], [], []>} : vector<240x4xbf16>, vector<4x128xbf16>, vector<240x128xf32> -> vector<240x128xf32>
    %56 = arith.addf %51, %55 : vector<240x128xf32>
    %c0_54 = arith.constant 0 : index
    %c0_55 = arith.constant 0 : index
    %57 = vector.load %arg5[%c0_54, %c0_55] : memref<1x128xf32, #tpu.memory_space<vmem>>, vector<1x128xf32>
    %58 = vector.broadcast %57 : vector<1x128xf32> to vector<240x128xf32>
    %59 = arith.addf %56, %58 : vector<240x128xf32>
    %cst_56 = arith.constant 0.000000e+00 : f32
    %60 = vector.broadcast %cst_56 : f32 to vector<240x128xf32>
    %61 = arith.maximumf %59, %60 : vector<240x128xf32>
    %62 = arith.truncf %61 : vector<240x128xf32> to vector<240x128xbf16>
    %c0_57 = arith.constant 0 : index
    %c0_58 = arith.constant 0 : index
    %c0_59 = arith.constant 0 : index
    %63 = vector.load %arg8[%c0_57, %c0_58, %c0_59] : memref<1x240x128xbf16, #tpu.memory_space<vmem>>, vector<1x240x128xbf16>
    %64 = vector.shape_cast %63 : vector<1x240x128xbf16> to vector<240x128xbf16>
    %65 = vector.shape_cast %62 : vector<240x128xbf16> to vector<1x240x128xbf16>
    tpu.vector_store %arg8[%c0_57, %c0_58, %c0_59], %65 {strides = array<i32>} : memref<1x240x128xbf16, #tpu.memory_space<vmem>>, vector<1x240x128xbf16>,
    return
  }
  func.func @transform_0(%arg0: i32, %arg1: i32) -> (i32, i32, i32) {
    %c0_i32 = arith.constant 0 : i32
    %c0_i32_0 = arith.constant 0 : i32
    return %arg0, %arg1, %c0_i32 : i32, i32, i32
  }
  func.func @transform_1(%arg0: i32, %arg1: i32) -> (i32, i32, i32) {
    %c1_i32 = arith.constant 1 : i32
    %0 = arith.addi %arg1, %c1_i32 : i32
    %c5_i32 = arith.constant 5 : i32
    %1 = arith.muli %0, %c5_i32 : i32
    %c0_i32 = arith.constant 0 : i32
    %c0_i32_0 = arith.constant 0 : i32
    return %arg0, %1, %c0_i32 : i32, i32, i32
  }
  func.func @transform_2(%arg0: i32, %arg1: i32) -> (i32, i32, i32) {
    %c0_i32 = arith.constant 0 : i32
    %c0_i32_0 = arith.constant 0 : i32
    %c0_i32_1 = arith.constant 0 : i32
    %c0_i32_2 = arith.constant 0 : i32
    return %c0_i32, %c0_i32_0, %c0_i32_1 : i32, i32, i32
  }
  func.func @transform_3(%arg0: i32, %arg1: i32) -> (i32, i32) {
    %c0_i32 = arith.constant 0 : i32
    %c0_i32_0 = arith.constant 0 : i32
    %c0_i32_1 = arith.constant 0 : i32
    return %c0_i32, %c0_i32_0 : i32, i32
  }
  func.func @transform_4(%arg0: i32, %arg1: i32) -> (i32, i32, i32) {
    %c0_i32 = arith.constant 0 : i32
    %c0_i32_0 = arith.constant 0 : i32
    return %arg0, %arg1, %c0_i32 : i32, i32, i32
  }
  func.func @transform_5(%arg0: i32, %arg1: i32) -> (i32, i32) {
    %c0_i32 = arith.constant 0 : i32
    %c0_i32_0 = arith.constant 0 : i32
    %c0_i32_1 = arith.constant 0 : i32
    return %c0_i32, %c0_i32_0 : i32, i32
  }
  func.func @transform_6(%arg0: i32, %arg1: i32) -> (i32, i32, i32) {
    %c0_i32 = arith.constant 0 : i32
    %c0_i32_0 = arith.constant 0 : i32
    return %arg0, %arg1, %c0_i32 : i32, i32, i32
  }
}

</mosaic_0001>

<llo_original>
// kernel: residual_block_forward.2
$region0: #{residual_block_forward.2}
  #allocation0 [shape = 'u32[]', space=smem, size = 0x4, offset = 0x4, fixed_abs, tag = 'smem constant byte address 0x4 - core index']
  #allocation1 [shape = 'u32[72,128]{1,0:T(1,128)}', space=vmem, size = 0x9000, scoped, tag = 'internal scratch']
  #allocation2 [shape = 'bf16[288,4]{1,0:T(8,128)(2,1)}', space=vmem, size = 0x12000, scoped, tag = 'scratch operand']
  %s0 = inlined_call_operand.vmem [shape: bf16[2,528,4], index: 0, kind: input, shape index: {}, may-alias: {0,1}]
  %s1 = inlined_call_operand.vmem [shape: bf16[2,528,4], index: 1, kind: input, shape index: {}, may-alias: {0,1}]
  %s2 = inlined_call_operand.vmem [shape: bf16[9,4,128], index: 2, kind: input, shape index: {}]
  %s3 = inlined_call_operand.vmem [shape: f32[1,128], index: 3, kind: input, shape index: {}]
  %s4 = inlined_call_operand.vmem [shape: bf16[2,480,128], index: 4, kind: output, shape index: {}]
  %s5 = sld [smem:[#allocation0]]
  $region49: #{residual_block_forward.2} parent=0
    _
  %s7 = ssub.s32 1, %s5
  %s8 = scalar_select 0, %s7, %s5
  loop: start=0, step=1, limit=6
  $region2: #{residual_block_forward.2} parent=0 // loop_pre_header
    _
  $region3: #{residual_block_forward.2} parent=0 // loop_header
    %s10 = sphi 0, %s14
    %p11 = scmp.ge.s32.totalorder %s10, 6
    %s17 = sphi 0, %s29
    %s18 = sphi 0, %s25
    %s19 = sphi 0, %s17
    %s20 = sphi 0, %s18
    %s21 = sphi 0, %s19
    %s22 = sphi 0, %s20
    %s34 = sphi 0, %s36
    %s37 = sphi 0, %s34
    %s38 = sphi 0, %s37
    %s54 = sphi 0, %s38
    %s66 = sphi 0, %s68
    %s69 = sphi 0, %s66
    %s70 = sphi 0, %s69
    %s86 = sphi 0, %s70
    %s90 = sphi 0, %s90
    %s92 = sphi 0, %s90
    %s93 = sphi 0, %s92
    %s107 = sphi 0, %s93
    %s111 = sphi 0, %s111
    %s113 = sphi 0, %s111
    %s114 = sphi 0, %s113
    %s128 = sphi 0, %s114
    %s136 = sphi 0, %s138
    %s139 = sphi 0, %s136
    %s140 = sphi 0, %s139
    %s156 = sphi 0, %s140
  $region4: #{residual_block_forward.2} parent=0 // loop_header_branch
    %13 = sbr.rel (%p11) target = $region8
  $region5: #{residual_block_forward.2} parent=0 // loop_body
    %s15 = ssub.s32 %s10, 1
    %s16 = ssub.s32 %s10, 2
    %s23 = sadd.s32 1, %s18
    %p24 = scmp.ge.s32.totalorder %s23, 2
    %s25 = scalar_select %p24, 0, %s23
    %s26 = sadd.s32 1, %s17
    %s27 = scalar_select %p24, %s26, %s17
    %p28 = scmp.ge.s32.totalorder %s27, 2
    %s29 = scalar_select %p28, 0, %s27
    %s30 = ssub.s32 %s17, %s29
    %s31 = ssub.s32 %s18, %s25
    %s32 = sor.u32 %s30, %s31
    %p33 = scmp.eq.s32.totalorder %s32, 0
    %s35 = sadd.s32 %s34, 1
    %s36 = scalar_select %p33, %s34, %s35
    %p39 = pneg %p33
    %p40 = scmp.eq.s32.totalorder %s10, 3
    %p41 = por %p39, %p40
    %p42 = scmp.ne.s32.totalorder %s34, %s37
    %p43 = scmp.eq.s32.totalorder %s10, 0
    %p44 = por %p42, %p43
    %p45 = scmp.ne.s32.totalorder %s34, %s37
    %p46 = scmp.eq.s32.totalorder %s15, 3
    %p47 = por %p45, %p46
    %p48 = scmp.ne.s32.totalorder %s37, %s38
    %p49 = scmp.eq.s32.totalorder %s15, 0
    %p50 = por %p48, %p49
    %p51 = scmp.ne.s32.totalorder %s37, %s38
    %p52 = scmp.eq.s32.totalorder %s16, 3
    %p53 = por %p51, %p52
    %p55 = scmp.ne.s32.totalorder %s38, %s54
    %p56 = scmp.eq.s32.totalorder %s16, 0
    %p57 = por %p55, %p56
    %s58 = sadd.s32 %s18, 1
    %s59 = smul.u32 %s58, 5
    %s60 = sadd.s32 %s25, 1
    %s61 = smul.u32 %s60, 5
    %s62 = ssub.s32 %s17, %s29
    %s63 = ssub.s32 %s59, %s61
    %s64 = sor.u32 %s62, %s63
    %p65 = scmp.eq.s32.totalorder %s64, 0
    %s67 = sadd.s32 %s66, 1
    %s68 = scalar_select %p65, %s66, %s67
    %p71 = pneg %p65
    %p72 = scmp.eq.s32.totalorder %s10, 3
    %p73 = por %p71, %p72
    %p74 = scmp.ne.s32.totalorder %s66, %s69
    %p75 = scmp.eq.s32.totalorder %s10, 0
    %p76 = por %p74, %p75
    %p77 = scmp.ne.s32.totalorder %s66, %s69
    %p78 = scmp.eq.s32.totalorder %s15, 3
    %p79 = por %p77, %p78
    %p80 = scmp.ne.s32.totalorder %s69, %s70
    %p81 = scmp.eq.s32.totalorder %s15, 0
    %p82 = por %p80, %p81
    %p83 = scmp.ne.s32.totalorder %s69, %s70
    %p84 = scmp.eq.s32.totalorder %s16, 3
    %p85 = por %p83, %p84
    %p87 = scmp.ne.s32.totalorder %s70, %s86
    %p88 = scmp.eq.s32.totalorder %s16, 0
    %p89 = por %p87, %p88
    %s91 = sadd.s32 %s90, 1
    %p94 = scmp.eq.s32.totalorder %s10, 3
    %p95 = scmp.ne.s32.totalorder %s90, %s92
    %p96 = scmp.eq.s32.totalorder %s10, 0
    %p97 = por %p95, %p96
    %p98 = scmp.ne.s32.totalorder %s90, %s92
    %p99 = scmp.eq.s32.totalorder %s15, 3
    %p100 = por %p98, %p99
    %p101 = scmp.ne.s32.totalorder %s92, %s93
    %p102 = scmp.eq.s32.totalorder %s15, 0
    %p103 = por %p101, %p102
    %p104 = scmp.ne.s32.totalorder %s92, %s93
    %p105 = scmp.eq.s32.totalorder %s16, 3
    %p106 = por %p104, %p105
    %p108 = scmp.ne.s32.totalorder %s93, %s107
    %p109 = scmp.eq.s32.totalorder %s16, 0
    %p110 = por %p108, %p109
    %s112 = sadd.s32 %s111, 1
    %p115 = scmp.eq.s32.totalorder %s10, 3
    %p116 = scmp.ne.s32.totalorder %s111, %s113
    %p117 = scmp.eq.s32.totalorder %s10, 0
    %p118 = por %p116, %p117
    %p119 = scmp.ne.s32.totalorder %s111, %s113
    %p120 = scmp.eq.s32.totalorder %s15, 3
    %p121 = por %p119, %p120
    %p122 = scmp.ne.s32.totalorder %s113, %s114
    %p123 = scmp.eq.s32.totalorder %s15, 0
    %p124 = por %p122, %p123
    %p125 = scmp.ne.s32.totalorder %s113, %s114
    %p126 = scmp.eq.s32.totalorder %s16, 3
    %p127 = por %p125, %p126
    %p129 = scmp.ne.s32.totalorder %s114, %s128
    %p130 = scmp.eq.s32.totalorder %s16, 0
    %p131 = por %p129, %p130
    %s132 = ssub.s32 %s17, %s29
    %s133 = ssub.s32 %s18, %s25
    %s134 = sor.u32 %s132, %s133
    %p135 = scmp.eq.s32.totalorder %s134, 0
    %s137 = sadd.s32 %s136, 1
    %s138 = scalar_select %p135, %s136, %s137
    %p141 = pneg %p135
    %p142 = scmp.eq.s32.totalorder %s10, 3
    %p143 = por %p141, %p142
    %p144 = scmp.ne.s32.totalorder %s136, %s139
    %p145 = scmp.eq.s32.totalorder %s10, 0
    %p146 = por %p144, %p145
    %p147 = scmp.ne.s32.totalorder %s136, %s139
    %p148 = scmp.eq.s32.totalorder %s15, 3
    %p149 = por %p147, %p148
    %p150 = scmp.ne.s32.totalorder %s139, %s140
    %p151 = scmp.eq.s32.totalorder %s15, 0
    %p152 = por %p150, %p151
    %p153 = scmp.ne.s32.totalorder %s139, %s140
    %p154 = scmp.eq.s32.totalorder %s16, 3
    %p155 = por %p153, %p154
    %p157 = scmp.ne.s32.totalorder %s140, %s156
    %p158 = scmp.eq.s32.totalorder %s16, 0
    %p159 = por %p157, %p158
    %p160 = scmp.le.s32.totalorder 1, %s10
    %p161 = scmp.lt.s32.totalorder %s10, 5
    %p162 = pnand %p160, %p161
    %p163 = pneg %p162
    // Predicated region
    $region9: #{residual_block_forward.2} parent=5 // pred_check
      _
    $region10: #{residual_block_forward.2} parent=5 // pred_check_branch
      %165 = sbr.rel (%p162) target = $region12
    $region11: #{residual_block_forward.2} parent=5 // pred_region
      %s166 = ssub.s32 %s10, 1
      // Predicated region
      $region13: #{residual_block_forward.2} parent=11 // pred_check
        %p167 = pneg %p103
      $region14: #{residual_block_forward.2} parent=11 // pred_check_branch
        %169 = sbr.rel (%p167) target = $region16
      $region15: #{residual_block_forward.2} parent=11 // pred_region
        _
      $region16: #{residual_block_forward.2} parent=11 // pred_fallthru
        _
      // Predicated region
      $region17: #{residual_block_forward.2} parent=11 // pred_check
        %p170 = pneg %p124
      $region18: #{residual_block_forward.2} parent=11 // pred_check_branch
        %172 = sbr.rel (%p170) target = $region20
      $region19: #{residual_block_forward.2} parent=11 // pred_region
        _
      $region20: #{residual_block_forward.2} parent=11 // pred_fallthru
        _
    $region12: #{residual_block_forward.2} parent=5 // pred_fallthru
      _
    %p173 = scmp.lt.s32.totalorder %s10, 4
    // Predicated region
    $region21: #{residual_block_forward.2} parent=5 // pred_check
      %p174 = pneg %p173
    $region22: #{residual_block_forward.2} parent=5 // pred_check_branch
      %176 = sbr.rel (%p174) target = $region24
    $region23: #{residual_block_forward.2} parent=5 // pred_region
      // Predicated region
      $region25: #{residual_block_forward.2} parent=23 // pred_check
        %p177 = pneg %p44
      $region26: #{residual_block_forward.2} parent=23 // pred_check_branch
        %179 = sbr.rel (%p177) target = $region28
      $region27: #{residual_block_forward.2} parent=23 // pred_region
        %s180 = smul.u32 30, %s18
        %s181 = ssub.s32 66, %s180
        %p182 = scmp.lt.s32.totalorder %s181, 30
        %s183 = scalar_select %p182, %s181, 30
        %s184 = smul.u32 4, %s183
        %p185 = scmp.lt.s32.totalorder %s17, 1
        %s186 = scalar_select %p185, %s17, 1
        %p187 = scmp.lt.s32.totalorder %s180, 65
        %s188 = scalar_select %p187, %s180, 65
        %s189 = smul.addr %s186, 66
        %s190 = sadd.s32 %s188, %s189
        %s191 = smul.addr %s190, 4
        %s192 = scalar_lea.vmem %s0, %s191
        %s193 = smul.u32 30, %s18
        %s194 = ssub.s32 66, %s193
        %p195 = scmp.lt.s32.totalorder %s194, 30
        %s196 = scalar_select %p195, %s194, 30
        %s197 = smul.u32 4, %s196
      $region28: #{residual_block_forward.2} parent=23 // pred_fallthru
        _
      // Predicated region
      $region29: #{residual_block_forward.2} parent=23 // pred_check
        %p198 = pneg %p76
      $region30: #{residual_block_forward.2} parent=23 // pred_check_branch
        %200 = sbr.rel (%p198) target = $region32
      $region31: #{residual_block_forward.2} parent=23 // pred_region
        %s201 = sadd.s32 %s18, 1
        %s202 = smul.u32 %s201, 5
        %s203 = smul.u32 6, %s202
        %p204 = scmp.lt.s32.totalorder %s17, 1
        %s205 = scalar_select %p204, %s17, 1
        %p206 = scmp.lt.s32.totalorder %s203, 65
        %s207 = scalar_select %p206, %s203, 65
        %s208 = smul.addr %s205, 66
        %s209 = sadd.s32 %s207, %s208
        %s210 = smul.addr %s209, 4
        %s211 = scalar_lea.vmem %s1, %s210
        %s212 = sadd.s32 %s18, 1
        %s213 = smul.u32 %s212, 5
        %s214 = smul.u32 6, %s213
      $region32: #{residual_block_forward.2} parent=23 // pred_fallthru
        _
    $region24: #{residual_block_forward.2} parent=5 // pred_fallthru
      _
    %p215 = scmp.le.s32.totalorder 1, %s10
    %p216 = scmp.lt.s32.totalorder %s10, 5
    %p217 = pnand %p215, %p216
    %p218 = pneg %p217
    // Predicated region
    $region33: #{residual_block_forward.2} parent=5 // pred_check
      _
    $region34: #{residual_block_forward.2} parent=5 // pred_check_branch
      %220 = sbr.rel (%p217) target = $region36
    $region35: #{residual_block_forward.2} parent=5 // pred_region
      %s221 = ssub.s32 %s10, 1
      %s222 = smul.u32 30, %s20
      %s223 = ssub.s32 66, %s222
      %p224 = scmp.lt.s32.totalorder %s223, 30
      %s225 = scalar_select %p224, %s223, 30
      %s226 = smul.u32 4, %s225
      %p227 = scmp.lt.s32.totalorder %s19, 1
      %s228 = scalar_select %p227, %s19, 1
      %p229 = scmp.lt.s32.totalorder %s222, 65
      %s230 = scalar_select %p229, %s222, 65
      %s231 = smul.addr %s228, 66
      %s232 = sadd.s32 %s230, %s231
      %s233 = smul.addr %s232, 4
      %s234 = scalar_lea.vmem %s0, %s233
      %p235 = pneg %p50
      %p236 = pneg %p47
      %s237 = sadd.s32 %s20, 1
      %s238 = smul.u32 %s237, 5
      %s239 = smul.u32 6, %s238
      %p240 = scmp.lt.s32.totalorder %s19, 1
      %s241 = scalar_select %p240, %s19, 1
      %p242 = scmp.lt.s32.totalorder %s239, 65
      %s243 = scalar_select %p242, %s239, 65
      %s244 = smul.addr %s241, 66
      %s245 = sadd.s32 %s243, %s244
      %s246 = smul.addr %s245, 4
      %s247 = scalar_lea.vmem %s1, %s246
      %p248 = pneg %p82
      %p249 = pneg %p79
      %p250 = pneg %p103
      %p251 = pneg %p100
      %p252 = pneg %p124
      %p253 = pneg %p121
      %p254 = pneg %p152
      %p255 = pneg %p149
      %s256 = smul.u32 30, %s20
      %p257 = scmp.lt.s32.totalorder %s19, 1
      %s258 = scalar_select %p257, %s19, 1
      %p259 = scmp.lt.s32.totalorder %s256, 59
      %s260 = scalar_select %p259, %s256, 59
      %s261 = smul.addr %s258, 60
      %s262 = sadd.s32 %s260, %s261
      %s263 = smul.addr %s262, 4
      %s264 = scalar_lea.vmem %s4, %s263
      %s265 = smul.u32 30, %s20
      %s266 = ssub.s32 66, %s265
      %p267 = scmp.lt.s32.totalorder %s266, 30
      %s268 = scalar_select %p267, %s266, 30
      %s269 = smul.u32 4, %s268
      %p270 = scmp.lt.s32.totalorder %s19, 1
      %s271 = scalar_select %p270, %s19, 1
      %p272 = scmp.lt.s32.totalorder %s265, 65
      %s273 = scalar_select %p272, %s265, 65
      %s274 = smul.addr %s271, 66
      %s275 = sadd.s32 %s273, %s274
      %s276 = smul.addr %s275, 4
      %s277 = scalar_lea.vmem %s0, %s276
      %s278 = smul.u32 30, %s20
      %s279 = ssub.s32 66, %s278
      %p280 = scmp.lt.s32.totalorder %s279, 30
      %s281 = scalar_select %p280, %s279, 30
      %s282 = smul.u32 4, %s281
      %s283 = sadd.s32 %s20, 1
      %s284 = smul.u32 %s283, 5
      %s285 = smul.u32 6, %s284
      %p286 = scmp.lt.s32.totalorder %s19, 1
      %s287 = scalar_select %p286, %s19, 1
      %p288 = scmp.lt.s32.totalorder %s285, 65
      %s289 = scalar_select %p288, %s285, 65
      %s290 = smul.addr %s287, 66
      %s291 = sadd.s32 %s289, %s290
      %s292 = smul.addr %s291, 4
      %s293 = scalar_lea.vmem %s1, %s292
      %s294 = sadd.s32 %s20, 1
      %s295 = smul.u32 %s294, 5
      %s296 = smul.u32 6, %s295
      %s297 = smul.u32 30, %s20
      %p298 = scmp.lt.s32.totalorder %s19, 1
      %s299 = scalar_select %p298, %s19, 1
      %p300 = scmp.lt.s32.totalorder %s297, 59
      %s301 = scalar_select %p300, %s297, 59
      %s302 = smul.addr %s299, 60
      %s303 = sadd.s32 %s301, %s302
      %s304 = smul.addr %s303, 4
      %s305 = scalar_lea.vmem %s4, %s304
      %s306 = smul.u32 30, %s20
      %v308 = vld [vmem:[%s277] sm:$0xf]
      %v309 = vld [vmem:[%s277 + $0x4] sm:$0xf]
      %v310 = vld [vmem:[%s277 + $0x8] sm:$0xf]
      %v311 = vld [vmem:[%s277 + $0xc] sm:$0xf]
      %v312 = vld [vmem:[%s277 + $0x10] sm:$0xf]
      %v313 = vld [vmem:[%s277 + $0x14] sm:$0xf]
      %v314 = vld [vmem:[%s277 + $0x18] sm:$0xf]
      %v315 = vld [vmem:[%s277 + $0x1c] sm:$0xf]
      %v316 = vld [vmem:[%s277 + $0x20] sm:$0xf]
      %v317 = vld [vmem:[%s277 + $0x24] sm:$0xf]
      %v318 = vld [vmem:[%s277 + $0x28] sm:$0xf]
      %v319 = vld [vmem:[%s277 + $0x2c] sm:$0xf]
      %v320 = vld [vmem:[%s277 + $0x30] sm:$0xf]
      %v321 = vld [vmem:[%s277 + $0x34] sm:$0xf]
      %v322 = vld [vmem:[%s277 + $0x38] sm:$0xf]
      %v323 = vld [vmem:[%s277 + $0x3c] sm:$0xf]
      %v324 = vld [vmem:[%s277 + $0x40] sm:$0xf]
      %v325 = vld [vmem:[%s277 + $0x44] sm:$0xf]
      %v326 = vld [vmem:[%s277 + $0x48] sm:$0xf]
      %v327 = vld [vmem:[%s277 + $0x4c] sm:$0xf]
      %v328 = vld [vmem:[%s277 + $0x50] sm:$0xf]
      %v329 = vld [vmem:[%s277 + $0x54] sm:$0xf]
      %v330 = vld [vmem:[%s277 + $0x58] sm:$0xf]
      %v331 = vld [vmem:[%s277 + $0x5c] sm:$0xf]
      %v332 = vld [vmem:[%s277 + $0x60] sm:$0xf]
      %v333 = vld [vmem:[%s277 + $0x64] sm:$0xf]
      %v334 = vld [vmem:[%s277 + $0x68] sm:$0xf]
      %v335 = vld [vmem:[%s277 + $0x6c] sm:$0xf]
      %v336 = vld [vmem:[%s277 + $0x70] sm:$0xf]
      %v337 = vld [vmem:[%s277 + $0x74] sm:$0xf]
      %vm338 = vcmask 27648
      %339 = vst.msk [vmem:[#allocation2] sm:$0xf] %vm338, %v308
      %340 = vst.msk [vmem:[#allocation2 + $0x4] sm:$0xf] %vm338, %v309
      %341 = vst.msk [vmem:[#allocation2 + $0x8] sm:$0xf] %vm338, %v310
      %342 = vst.msk [vmem:[#allocation2 + $0xc] sm:$0xf] %vm338, %v311
      %343 = vst.msk [vmem:[#allocation2 + $0x10] sm:$0xf] %vm338, %v312
      %344 = vst.msk [vmem:[#allocation2 + $0x14] sm:$0xf] %vm338, %v313
      %345 = vst.msk [vmem:[#allocation2 + $0x18] sm:$0xf] %vm338, %v314
      %346 = vst.msk [vmem:[#allocation2 + $0x1c] sm:$0xf] %vm338, %v315
      %347 = vst.msk [vmem:[#allocation2 + $0x20] sm:$0xf] %vm338, %v316
      %348 = vst.msk [vmem:[#allocation2 + $0x24] sm:$0xf] %vm338, %v317
      %349 = vst.msk [vmem:[#allocation2 + $0x28] sm:$0xf] %vm338, %v318
      %350 = vst.msk [vmem:[#allocation2 + $0x2c] sm:$0xf] %vm338, %v319
      %351 = vst.msk [vmem:[#allocation2 + $0x30] sm:$0xf] %vm338, %v320
      %352 = vst.msk [vmem:[#allocation2 + $0x34] sm:$0xf] %vm338, %v321
      %353 = vst.msk [vmem:[#allocation2 + $0x38] sm:$0xf] %vm338, %v322
      %354 = vst.msk [vmem:[#allocation2 + $0x3c] sm:$0xf] %vm338, %v323
      %355 = vst.msk [vmem:[#allocation2 + $0x40] sm:$0xf] %vm338, %v324
      %356 = vst.msk [vmem:[#allocation2 + $0x44] sm:$0xf] %vm338, %v325
      %357 = vst.msk [vmem:[#allocation2 + $0x48] sm:$0xf] %vm338, %v326
      %358 = vst.msk [vmem:[#allocation2 + $0x4c] sm:$0xf] %vm338, %v327
      %359 = vst.msk [vmem:[#allocation2 + $0x50] sm:$0xf] %vm338, %v328
      %360 = vst.msk [vmem:[#allocation2 + $0x54] sm:$0xf] %vm338, %v329
      %361 = vst.msk [vmem:[#allocation2 + $0x58] sm:$0xf] %vm338, %v330
      %362 = vst.msk [vmem:[#allocation2 + $0x5c] sm:$0xf] %vm338, %v331
      %363 = vst.msk [vmem:[#allocation2 + $0x60] sm:$0xf] %vm338, %v332
      %364 = vst.msk [vmem:[#allocation2 + $0x64] sm:$0xf] %vm338, %v333
      %365 = vst.msk [vmem:[#allocation2 + $0x68] sm:$0xf] %vm338, %v334
      %366 = vst.msk [vmem:[#allocation2 + $0x6c] sm:$0xf] %vm338, %v335
      %367 = vst.msk [vmem:[#allocation2 + $0x70] sm:$0xf] %vm338, %v336
      %368 = vst.msk [vmem:[#allocation2 + $0x74] sm:$0xf] %vm338, %v337
      %v369 = vld [vmem:[%s293] sm:$0xf]
      %v370 = vld [vmem:[%s293 + $0x4] sm:$0xf]
      %v371 = vld [vmem:[%s293 + $0x8] sm:$0xf]
      %v372 = vld [vmem:[%s293 + $0xc] sm:$0xf]
      %v373 = vld [vmem:[%s293 + $0x10] sm:$0xf]
      %v374 = vld [vmem:[%s293 + $0x14] sm:$0xf]
      %375 = vst.msk [vmem:[#allocation2 + $0x78] sm:$0xf] %vm338, %v369
      %376 = vst.msk [vmem:[#allocation2 + $0x7c] sm:$0xf] %vm338, %v370
      %377 = vst.msk [vmem:[#allocation2 + $0x80] sm:$0xf] %vm338, %v371
      %378 = vst.msk [vmem:[#allocation2 + $0x84] sm:$0xf] %vm338, %v372
      %379 = vst.msk [vmem:[#allocation2 + $0x88] sm:$0xf] %vm338, %v373
      %380 = vst.msk [vmem:[#allocation2 + $0x8c] sm:$0xf] %vm338, %v374
      %v381 = vld [vmem:[#allocation2] sm:$0xf]
      %v382 = vld [vmem:[#allocation2 + $0x4] sm:$0xf]
      %v383 = vld [vmem:[#allocation2 + $0x8] sm:$0xf]
      %v384 = vld [vmem:[#allocation2 + $0xc] sm:$0xf]
      %v385 = vld [vmem:[#allocation2 + $0x10] sm:$0xf]
      %v386 = vld [vmem:[#allocation2 + $0x14] sm:$0xf]
      %v387 = vld [vmem:[#allocation2 + $0x18] sm:$0xf]
      %v388 = vld [vmem:[#allocation2 + $0x1c] sm:$0xf]
      %v389 = vld [vmem:[#allocation2 + $0x20] sm:$0xf]
      %v390 = vld [vmem:[#allocation2 + $0x24] sm:$0xf]
      %v391 = vld [vmem:[#allocation2 + $0x28] sm:$0xf]
      %v392 = vld [vmem:[#allocation2 + $0x2c] sm:$0xf]
      %v393 = vld [vmem:[#allocation2 + $0x30] sm:$0xf]
      %v394 = vld [vmem:[#allocation2 + $0x34] sm:$0xf]
      %v395 = vld [vmem:[#allocation2 + $0x38] sm:$0xf]
      %v396 = vld [vmem:[#allocation2 + $0x3c] sm:$0xf]
      %v397 = vld [vmem:[#allocation2 + $0x40] sm:$0xf]
      %v398 = vld [vmem:[#allocation2 + $0x44] sm:$0xf]
      %v399 = vld [vmem:[#allocation2 + $0x48] sm:$0xf]
      %v400 = vld [vmem:[#allocation2 + $0x4c] sm:$0xf]
      %v401 = vld [vmem:[#allocation2 + $0x50] sm:$0xf]
      %v402 = vld [vmem:[#allocation2 + $0x54] sm:$0xf]
      %v403 = vld [vmem:[#allocation2 + $0x58] sm:$0xf]
      %v404 = vld [vmem:[#allocation2 + $0x5c] sm:$0xf]
      %v405 = vld [vmem:[#allocation2 + $0x60] sm:$0xf]
      %v406 = vld [vmem:[#allocation2 + $0x64] sm:$0xf]
      %v407 = vld [vmem:[#allocation2 + $0x68] sm:$0xf]
      %v408 = vld [vmem:[#allocation2 + $0x6c] sm:$0xf]
      %v409 = vld [vmem:[#allocation2 + $0x70] sm:$0xf]
      %v410 = vld [vmem:[#allocation2 + $0x74] sm:$0xf]
      %v411 = vld [vmem:[%s2] sm:$0x3]
      %v412 = vld [vmem:[#allocation2 + $0x78] sm:$0x1]
      %s413 = scalar_lea.vmem %s2, 2
      %v414 = vld [vmem:[%s413] sm:$0x3]
      %v446 = vunpack.c.l.b16 %v381
      %v447 = vunpack.c.l.b16 %v382
      %v448 = vunpack.c.l.b16 %v383
      %v449 = vunpack.c.l.b16 %v384
      %v450 = vunpack.c.l.b16 %v385
      %v451 = vunpack.c.l.b16 %v386
      %v452 = vunpack.c.l.b16 %v387
      %v453 = vunpack.c.l.b16 %v388
      %v454 = vunpack.c.l.b16 %v389
      %v455 = vunpack.c.l.b16 %v390
      %v456 = vunpack.c.l.b16 %v391
      %v457 = vunpack.c.l.b16 %v392
      %v458 = vunpack.c.l.b16 %v393
      %v459 = vunpack.c.l.b16 %v394
      %v460 = vunpack.c.l.b16 %v395
      %v461 = vunpack.c.l.b16 %v396
      %v462 = vunpack.c.l.b16 %v397
      %v463 = vunpack.c.l.b16 %v398
      %v464 = vunpack.c.l.b16 %v399
      %v465 = vunpack.c.l.b16 %v400
      %v466 = vunpack.c.l.b16 %v401
      %v467 = vunpack.c.l.b16 %v402
      %v468 = vunpack.c.l.b16 %v403
      %v469 = vunpack.c.l.b16 %v404
      %v470 = vunpack.c.l.b16 %v405
      %v471 = vunpack.c.l.b16 %v406
      %v472 = vunpack.c.l.b16 %v407
      %v473 = vunpack.c.l.b16 %v408
      %v474 = vunpack.c.l.b16 %v409
      %v475 = vunpack.c.l.b16 %v410
      %v476 = vunpack.c.l.b16 %v412
      %v477 = vpack.c.b16 %v447, %v446
      %v478 = vpack.c.b16 %v449, %v448
      %v479 = vpack.c.b16 %v451, %v450
      %v480 = vpack.c.b16 %v453, %v452
      %v481 = vpack.c.b16 %v455, %v454
      %v482 = vpack.c.b16 %v457, %v456
      %v483 = vpack.c.b16 %v459, %v458
      %v484 = vpack.c.b16 %v461, %v460
      %v485 = vpack.c.b16 %v463, %v462
      %v486 = vpack.c.b16 %v465, %v464
      %v487 = vpack.c.b16 %v467, %v466
      %v488 = vpack.c.b16 %v469, %v468
      %v489 = vpack.c.b16 %v471, %v470
      %v490 = vpack.c.b16 %v473, %v472
      %v491 = vpack.c.b16 %v475, %v474
      %v492 = vpack.c.b16 %v476, %v476
      %vm493 = vsmask.f32 7424
      %v495 = vshrl.u32 %v477, 16
      %v497 = vshll.u32 %v477, 16
      %v499 = vrot.slane %v497, 1
      %v500 = vor.u32 %v495, %v499
      %v502 = vshll.u32 %v478, 16
      %v504 = vrot.slane %v502, 1
      %v505 = vsel %vm493, %v500, %v504
      %v506 = vshrl.u32 %v478, 16
      %v508 = vor.u32 %v506, %v504
      %v510 = vshll.u32 %v479, 16
      %v512 = vrot.slane %v510, 1
      %v513 = vsel %vm493, %v508, %v512
      %v514 = vshrl.u32 %v479, 16
      %v516 = vor.u32 %v514, %v512
      %v518 = vshll.u32 %v480, 16
      %v520 = vrot.slane %v518, 1
      %v521 = vsel %vm493, %v516, %v520
      %v522 = vshrl.u32 %v480, 16
      %v524 = vor.u32 %v522, %v520
      %v526 = vshll.u32 %v481, 16
      %v528 = vrot.slane %v526, 1
      %v529 = vsel %vm493, %v524, %v528
      %v530 = vshrl.u32 %v481, 16
      %v532 = vor.u32 %v530, %v528
      %v534 = vshll.u32 %v482, 16
      %v536 = vrot.slane %v534, 1
      %v537 = vsel %vm493, %v532, %v536
      %v538 = vshrl.u32 %v482, 16
      %v540 = vor.u32 %v538, %v536
      %v542 = vshll.u32 %v483, 16
      %v544 = vrot.slane %v542, 1
      %v545 = vsel %vm493, %v540, %v544
      %v546 = vshrl.u32 %v483, 16
      %v548 = vor.u32 %v546, %v544
      %v550 = vshll.u32 %v484, 16
      %v552 = vrot.slane %v550, 1
      %v553 = vsel %vm493, %v548, %v552
      %v554 = vshrl.u32 %v484, 16
      %v556 = vor.u32 %v554, %v552
      %v558 = vshll.u32 %v485, 16
      %v560 = vrot.slane %v558, 1
      %v561 = vsel %vm493, %v556, %v560
      %v562 = vshrl.u32 %v485, 16
      %v564 = vor.u32 %v562, %v560
      %v566 = vshll.u32 %v486, 16
      %v568 = vrot.slane %v566, 1
      %v569 = vsel %vm493, %v564, %v568
      %v570 = vshrl.u32 %v486, 16
      %v572 = vor.u32 %v570, %v568
      %v574 = vshll.u32 %v487, 16
      %v576 = vrot.slane %v574, 1
      %v577 = vsel %vm493, %v572, %v576
      %v578 = vshrl.u32 %v487, 16
      %v580 = vor.u32 %v578, %v576
      %v582 = vshll.u32 %v488, 16
      %v584 = vrot.slane %v582, 1
      %v585 = vsel %vm493, %v580, %v584
      %v586 = vshrl.u32 %v488, 16
      %v588 = vor.u32 %v586, %v584
      %v590 = vshll.u32 %v489, 16
      %v592 = vrot.slane %v590, 1
      %v593 = vsel %vm493, %v588, %v592
      %v594 = vshrl.u32 %v489, 16
      %v596 = vor.u32 %v594, %v592
      %v598 = vshll.u32 %v490, 16
      %v600 = vrot.slane %v598, 1
      %v601 = vsel %vm493, %v596, %v600
      %v602 = vshrl.u32 %v490, 16
      %v604 = vor.u32 %v602, %v600
      %v606 = vshll.u32 %v491, 16
      %v608 = vrot.slane %v606, 1
      %v609 = vsel %vm493, %v604, %v608
      %v610 = vshrl.u32 %v491, 16
      %v612 = vor.u32 %v610, %v608
      %v614 = vshll.u32 %v492, 16
      %v616 = vrot.slane %v614, 1
      %v617 = vsel %vm493, %v612, %v616
      %vm618 = vcmask 31744
      %v620 = vsel %vm618, %v505, 0
      %v623 = vsel %vm618, %v513, 0
      %v626 = vsel %vm618, %v521, 0
      %v629 = vsel %vm618, %v529, 0
      %v632 = vsel %vm618, %v537, 0
      %v635 = vsel %vm618, %v545, 0
      %v638 = vsel %vm618, %v553, 0
      %v641 = vsel %vm618, %v561, 0
      %v644 = vsel %vm618, %v569, 0
      %v647 = vsel %vm618, %v577, 0
      %v650 = vsel %vm618, %v585, 0
      %v653 = vsel %vm618, %v593, 0
      %v656 = vsel %vm618, %v601, 0
      %v659 = vsel %vm618, %v609, 0
      %v662 = vsel %vm618, %v617, 0
      %vm664 = vcmask 1041408
      %v666 = vsel %vm664, %v414, 0
      %668 = vmatpush.bf16.msra.mxu0 0
      %669 = vmatpush.bf16.msra.mxu0 0
      %670 = vmatpush.bf16.msra.mxu0 0
      %671 = vmatpush.bf16.msra.mxu0 0
      %672 = vmatpush.bf16.msra.mxu0 0
      %673 = vmatpush.bf16.msra.mxu0 0
      %674 = vmatpush.bf16.msra.mxu0 0
      %675 = vmatpush.bf16.msra.mxu0 %v666
      %676 = vmatmul.bf16.gmra.mxu0 %v620
      %v677 = vpop.f32.mrf.mxu0
      %v678 = vadd.f32 0.0, %v677
      %v679 = vpop.f32.mrf.mxu0
      %v680 = vadd.f32 0.0, %v679
      %681 = vmatmul.bf16.gmra.mxu0 %v623
      %v682 = vpop.f32.mrf.mxu0
      %v683 = vadd.f32 0.0, %v682
      %v684 = vpop.f32.mrf.mxu0
      %v685 = vadd.f32 0.0, %v684
      %686 = vmatmul.bf16.gmra.mxu0 %v626
      %v687 = vpop.f32.mrf.mxu0
      %v688 = vadd.f32 0.0, %v687
      %v689 = vpop.f32.mrf.mxu0
      %v690 = vadd.f32 0.0, %v689
      %691 = vmatmul.bf16.gmra.mxu0 %v629
      %v692 = vpop.f32.mrf.mxu0
      %v693 = vadd.f32 0.0, %v692
      %v694 = vpop.f32.mrf.mxu0
      %v695 = vadd.f32 0.0, %v694
      %696 = vmatmul.bf16.gmra.mxu0 %v632
      %v697 = vpop.f32.mrf.mxu0
      %v698 = vadd.f32 0.0, %v697
      %v699 = vpop.f32.mrf.mxu0
      %v700 = vadd.f32 0.0, %v699
      %701 = vmatmul.bf16.gmra.mxu0 %v635
      %v702 = vpop.f32.mrf.mxu0
      %v703 = vadd.f32 0.0, %v702
      %v704 = vpop.f32.mrf.mxu0
      %v705 = vadd.f32 0.0, %v704
      %706 = vmatmul.bf16.gmra.mxu0 %v638
      %v707 = vpop.f32.mrf.mxu0
      %v708 = vadd.f32 0.0, %v707
      %v709 = vpop.f32.mrf.mxu0
      %v710 = vadd.f32 0.0, %v709
      %711 = vmatmul.bf16.gmra.mxu0 %v641
      %v712 = vpop.f32.mrf.mxu0
      %v713 = vadd.f32 0.0, %v712
      %v714 = vpop.f32.mrf.mxu0
      %v715 = vadd.f32 0.0, %v714
      %716 = vmatmul.bf16.gmra.mxu0 %v644
      %v717 = vpop.f32.mrf.mxu0
      %v718 = vadd.f32 0.0, %v717
      %v719 = vpop.f32.mrf.mxu0
      %v720 = vadd.f32 0.0, %v719
      %721 = vmatmul.bf16.gmra.mxu0 %v647
      %v722 = vpop.f32.mrf.mxu0
      %v723 = vadd.f32 0.0, %v722
      %v724 = vpop.f32.mrf.mxu0
      %v725 = vadd.f32 0.0, %v724
      %726 = vmatmul.bf16.gmra.mxu0 %v650
      %v727 = vpop.f32.mrf.mxu0
      %v728 = vadd.f32 0.0, %v727
      %v729 = vpop.f32.mrf.mxu0
      %v730 = vadd.f32 0.0, %v729
      %731 = vmatmul.bf16.gmra.mxu0 %v653
      %v732 = vpop.f32.mrf.mxu0
      %v733 = vadd.f32 0.0, %v732
      %v734 = vpop.f32.mrf.mxu0
      %v735 = vadd.f32 0.0, %v734
      %736 = vmatmul.bf16.gmra.mxu0 %v656
      %v737 = vpop.f32.mrf.mxu0
      %v738 = vadd.f32 0.0, %v737
      %v739 = vpop.f32.mrf.mxu0
      %v740 = vadd.f32 0.0, %v739
      %741 = vmatmul.bf16.gmra.mxu0 %v659
      %v742 = vpop.f32.mrf.mxu0
      %v743 = vadd.f32 0.0, %v742
      %v744 = vpop.f32.mrf.mxu0
      %v745 = vadd.f32 0.0, %v744
      %746 = vmatmul.bf16.gmra.mxu0 %v662
      %v747 = vpop.f32.mrf.mxu0
      %v748 = vadd.f32 0.0, %v747
      %v749 = vpop.f32.mrf.mxu0
      %v750 = vadd.f32 0.0, %v749
      %751 = vdwg.mxu0
      %v752 = vsel %vm618, %v477, 0
      %v754 = vsel %vm618, %v478, 0
      %v756 = vsel %vm618, %v479, 0
      %v758 = vsel %vm618, %v480, 0
      %v760 = vsel %vm618, %v481, 0
      %v762 = vsel %vm618, %v482, 0
      %v764 = vsel %vm618, %v483, 0
      %v766 = vsel %vm618, %v484, 0
      %v768 = vsel %vm618, %v485, 0
      %v770 = vsel %vm618, %v486, 0
      %v772 = vsel %vm618, %v487, 0
      %v774 = vsel %vm618, %v488, 0
      %v776 = vsel %vm618, %v489, 0
      %v778 = vsel %vm618, %v490, 0
      %v780 = vsel %vm618, %v491, 0
      %v783 = vsel %vm664, %v411, 0
      %785 = vmatpush.bf16.msra.mxu0 0
      %786 = vmatpush.bf16.msra.mxu0 0
      %787 = vmatpush.bf16.msra.mxu0 0
      %788 = vmatpush.bf16.msra.mxu0 0
      %789 = vmatpush.bf16.msra.mxu0 0
      %790 = vmatpush.bf16.msra.mxu0 0
      %791 = vmatpush.bf16.msra.mxu0 0
      %792 = vmatpush.bf16.msra.mxu0 %v783
      %793 = vmatmul.bf16.gmra.mxu0 %v752
      %v794 = vpop.f32.mrf.mxu0
      %v795 = vadd.f32 %v678, %v794
      %v796 = vpop.f32.mrf.mxu0
      %v797 = vadd.f32 %v680, %v796
      %798 = vmatmul.bf16.gmra.mxu0 %v754
      %v799 = vpop.f32.mrf.mxu0
      %v800 = vadd.f32 %v683, %v799
      %v801 = vpop.f32.mrf.mxu0
      %v802 = vadd.f32 %v685, %v801
      %803 = vmatmul.bf16.gmra.mxu0 %v756
      %v804 = vpop.f32.mrf.mxu0
      %v805 = vadd.f32 %v688, %v804
      %v806 = vpop.f32.mrf.mxu0
      %v807 = vadd.f32 %v690, %v806
      %808 = vmatmul.bf16.gmra.mxu0 %v758
      %v809 = vpop.f32.mrf.mxu0
      %v810 = vadd.f32 %v693, %v809
      %v811 = vpop.f32.mrf.mxu0
      %v812 = vadd.f32 %v695, %v811
      %813 = vmatmul.bf16.gmra.mxu0 %v760
      %v814 = vpop.f32.mrf.mxu0
      %v815 = vadd.f32 %v698, %v814
      %v816 = vpop.f32.mrf.mxu0
      %v817 = vadd.f32 %v700, %v816
      %818 = vmatmul.bf16.gmra.mxu0 %v762
      %v819 = vpop.f32.mrf.mxu0
      %v820 = vadd.f32 %v703, %v819
      %v821 = vpop.f32.mrf.mxu0
      %v822 = vadd.f32 %v705, %v821
      %823 = vmatmul.bf16.gmra.mxu0 %v764
      %v824 = vpop.f32.mrf.mxu0
      %v825 = vadd.f32 %v708, %v824
      %v826 = vpop.f32.mrf.mxu0
      %v827 = vadd.f32 %v710, %v826
      %828 = vmatmul.bf16.gmra.mxu0 %v766
      %v829 = vpop.f32.mrf.mxu0
      %v830 = vadd.f32 %v713, %v829
      %v831 = vpop.f32.mrf.mxu0
      %v832 = vadd.f32 %v715, %v831
      %833 = vmatmul.bf16.gmra.mxu0 %v768
      %v834 = vpop.f32.mrf.mxu0
      %v835 = vadd.f32 %v718, %v834
      %v836 = vpop.f32.mrf.mxu0
      %v837 = vadd.f32 %v720, %v836
      %838 = vmatmul.bf16.gmra.mxu0 %v770
      %v839 = vpop.f32.mrf.mxu0
      %v840 = vadd.f32 %v723, %v839
      %v841 = vpop.f32.mrf.mxu0
      %v842 = vadd.f32 %v725, %v841
      %843 = vmatmul.bf16.gmra.mxu0 %v772
      %v844 = vpop.f32.mrf.mxu0
      %v845 = vadd.f32 %v728, %v844
      %v846 = vpop.f32.mrf.mxu0
      %v847 = vadd.f32 %v730, %v846
      %848 = vmatmul.bf16.gmra.mxu0 %v774
      %v849 = vpop.f32.mrf.mxu0
      %v850 = vadd.f32 %v733, %v849
      %v851 = vpop.f32.mrf.mxu0
      %v852 = vadd.f32 %v735, %v851
      %853 = vmatmul.bf16.gmra.mxu0 %v776
      %v854 = vpop.f32.mrf.mxu0
      %v855 = vadd.f32 %v738, %v854
      %v856 = vpop.f32.mrf.mxu0
      %v857 = vadd.f32 %v740, %v856
      %858 = vmatmul.bf16.gmra.mxu0 %v778
      %v859 = vpop.f32.mrf.mxu0
      %v860 = vadd.f32 %v743, %v859
      %v861 = vpop.f32.mrf.mxu0
      %v862 = vadd.f32 %v745, %v861
      %863 = vmatmul.bf16.gmra.mxu0 %v780
      %v864 = vpop.f32.mrf.mxu0
      %v865 = vadd.f32 %v748, %v864
      %v866 = vpop.f32.mrf.mxu0
      %v867 = vadd.f32 %v750, %v866
      %868 = vdwg.mxu0
      %v869 = vld [vmem:[#allocation2] sm:$0xe]
      %s870 = scalar_lea.vmem %s2, 4
      %v871 = vld [vmem:[%s870] sm:$0x3]
      %v873 = vunpack.c.l.b16 %v869
      %v874 = vpack.c.b16 %v447, %v873
      %vm875 = vcmask 1046528
      %v876 = vrot.slane %v874, 1
      %v877 = vrot.slane %v478, 1
      %v878 = vsel %vm875, %v876, %v877
      %v879 = vrot.slane %v479, 1
      %v880 = vsel %vm875, %v877, %v879
      %v881 = vrot.slane %v480, 1
      %v882 = vsel %vm875, %v879, %v881
      %v883 = vrot.slane %v481, 1
      %v884 = vsel %vm875, %v881, %v883
      %v885 = vrot.slane %v482, 1
      %v886 = vsel %vm875, %v883, %v885
      %v887 = vrot.slane %v483, 1
      %v888 = vsel %vm875, %v885, %v887
      %v889 = vrot.slane %v484, 1
      %v890 = vsel %vm875, %v887, %v889
      %v891 = vrot.slane %v485, 1
      %v892 = vsel %vm875, %v889, %v891
      %v893 = vrot.slane %v486, 1
      %v894 = vsel %vm875, %v891, %v893
      %v895 = vrot.slane %v487, 1
      %v896 = vsel %vm875, %v893, %v895
      %v897 = vrot.slane %v488, 1
      %v898 = vsel %vm875, %v895, %v897
      %v899 = vrot.slane %v489, 1
      %v900 = vsel %vm875, %v897, %v899
      %v901 = vrot.slane %v490, 1
      %v902 = vsel %vm875, %v899, %v901
      %v903 = vrot.slane %v491, 1
      %v904 = vsel %vm875, %v901, %v903
      %v905 = vrot.slane %v492, 1
      %v906 = vsel %vm875, %v903, %v905
      %v908 = vsel %vm618, %v878, 0
      %v911 = vsel %vm618, %v880, 0
      %v914 = vsel %vm618, %v882, 0
      %v917 = vsel %vm618, %v884, 0
      %v920 = vsel %vm618, %v886, 0
      %v923 = vsel %vm618, %v888, 0
      %v926 = vsel %vm618, %v890, 0
      %v929 = vsel %vm618, %v892, 0
      %v932 = vsel %vm618, %v894, 0
      %v935 = vsel %vm618, %v896, 0
      %v938 = vsel %vm618, %v898, 0
      %v941 = vsel %vm618, %v900, 0
      %v944 = vsel %vm618, %v902, 0
      %v947 = vsel %vm618, %v904, 0
      %v950 = vsel %vm618, %v906, 0
      %v953 = vsel %vm664, %v871, 0
      %955 = vmatpush.bf16.msra.mxu0 0
      %956 = vmatpush.bf16.msra.mxu0 0
      %957 = vmatpush.bf16.msra.mxu0 0
      %958 = vmatpush.bf16.msra.mxu0 0
      %959 = vmatpush.bf16.msra.mxu0 0
      %960 = vmatpush.bf16.msra.mxu0 0
      %961 = vmatpush.bf16.msra.mxu0 0
      %962 = vmatpush.bf16.msra.mxu0 %v953
      %963 = vmatmul.bf16.gmra.mxu0 %v908
      %v964 = vpop.f32.mrf.mxu0
      %v965 = vadd.f32 0.0, %v964
      %v966 = vpop.f32.mrf.mxu0
      %v967 = vadd.f32 0.0, %v966
      %968 = vmatmul.bf16.gmra.mxu0 %v911
      %v969 = vpop.f32.mrf.mxu0
      %v970 = vadd.f32 0.0, %v969
      %v971 = vpop.f32.mrf.mxu0
      %v972 = vadd.f32 0.0, %v971
      %973 = vmatmul.bf16.gmra.mxu0 %v914
      %v974 = vpop.f32.mrf.mxu0
      %v975 = vadd.f32 0.0, %v974
      %v976 = vpop.f32.mrf.mxu0
      %v977 = vadd.f32 0.0, %v976
      %978 = vmatmul.bf16.gmra.mxu0 %v917
      %v979 = vpop.f32.mrf.mxu0
      %v980 = vadd.f32 0.0, %v979
      %v981 = vpop.f32.mrf.mxu0
      %v982 = vadd.f32 0.0, %v981
      %983 = vmatmul.bf16.gmra.mxu0 %v920
      %v984 = vpop.f32.mrf.mxu0
      %v985 = vadd.f32 0.0, %v984
      %v986 = vpop.f32.mrf.mxu0
      %v987 = vadd.f32 0.0, %v986
      %988 = vmatmul.bf16.gmra.mxu0 %v923
      %v989 = vpop.f32.mrf.mxu0
      %v990 = vadd.f32 0.0, %v989
      %v991 = vpop.f32.mrf.mxu0
      %v992 = vadd.f32 0.0, %v991
      %993 = vmatmul.bf16.gmra.mxu0 %v926
      %v994 = vpop.f32.mrf.mxu0
      %v995 = vadd.f32 0.0, %v994
      %v996 = vpop.f32.mrf.mxu0
      %v997 = vadd.f32 0.0, %v996
      %998 = vmatmul.bf16.gmra.mxu0 %v929
      %v999 = vpop.f32.mrf.mxu0
      %v1000 = vadd.f32 0.0, %v999
      %v1001 = vpop.f32.mrf.mxu0
      %v1002 = vadd.f32 0.0, %v1001
      %1003 = vmatmul.bf16.gmra.mxu0 %v932
      %v1004 = vpop.f32.mrf.mxu0
      %v1005 = vadd.f32 0.0, %v1004
      %v1006 = vpop.f32.mrf.mxu0
      %v1007 = vadd.f32 0.0, %v1006
      %1008 = vmatmul.bf16.gmra.mxu0 %v935
      %v1009 = vpop.f32.mrf.mxu0
      %v1010 = vadd.f32 0.0, %v1009
      %v1011 = vpop.f32.mrf.mxu0
      %v1012 = vadd.f32 0.0, %v1011
      %1013 = vmatmul.bf16.gmra.mxu0 %v938
      %v1014 = vpop.f32.mrf.mxu0
      %v1015 = vadd.f32 0.0, %v1014
      %v1016 = vpop.f32.mrf.mxu0
      %v1017 = vadd.f32 0.0, %v1016
      %1018 = vmatmul.bf16.gmra.mxu0 %v941
      %v1019 = vpop.f32.mrf.mxu0
      %v1020 = vadd.f32 0.0, %v1019
      %v1021 = vpop.f32.mrf.mxu0
      %v1022 = vadd.f32 0.0, %v1021
      %1023 = vmatmul.bf16.gmra.mxu0 %v944
      %v1024 = vpop.f32.mrf.mxu0
      %v1025 = vadd.f32 0.0, %v1024
      %v1026 = vpop.f32.mrf.mxu0
      %v1027 = vadd.f32 0.0, %v1026
      %1028 = vmatmul.bf16.gmra.mxu0 %v947
      %v1029 = vpop.f32.mrf.mxu0
      %v1030 = vadd.f32 0.0, %v1029
      %v1031 = vpop.f32.mrf.mxu0
      %v1032 = vadd.f32 0.0, %v1031
      %1033 = vmatmul.bf16.gmra.mxu0 %v950
      %v1034 = vpop.f32.mrf.mxu0
      %v1035 = vadd.f32 0.0, %v1034
      %v1036 = vpop.f32.mrf.mxu0
      %v1037 = vadd.f32 0.0, %v1036
      %1038 = vdwg.mxu0
      %v1039 = vadd.f32 %v795, %v965
      %v1040 = vadd.f32 %v797, %v967
      %v1041 = vadd.f32 %v800, %v970
      %v1042 = vadd.f32 %v802, %v972
      %v1043 = vadd.f32 %v805, %v975
      %v1044 = vadd.f32 %v807, %v977
      %v1045 = vadd.f32 %v810, %v980
      %v1046 = vadd.f32 %v812, %v982
      %v1047 = vadd.f32 %v815, %v985
      %v1048 = vadd.f32 %v817, %v987
      %v1049 = vadd.f32 %v820, %v990
      %v1050 = vadd.f32 %v822, %v992
      %v1051 = vadd.f32 %v825, %v995
      %v1052 = vadd.f32 %v827, %v997
      %v1053 = vadd.f32 %v830, %v1000
      %v1054 = vadd.f32 %v832, %v1002
      %v1055 = vadd.f32 %v835, %v1005
      %v1056 = vadd.f32 %v837, %v1007
      %v1057 = vadd.f32 %v840, %v1010
      %v1058 = vadd.f32 %v842, %v1012
      %v1059 = vadd.f32 %v845, %v1015
      %v1060 = vadd.f32 %v847, %v1017
      %v1061 = vadd.f32 %v850, %v1020
      %v1062 = vadd.f32 %v852, %v1022
      %v1063 = vadd.f32 %v855, %v1025
      %v1064 = vadd.f32 %v857, %v1027
      %v1065 = vadd.f32 %v860, %v1030
      %v1066 = vadd.f32 %v862, %v1032
      %v1067 = vadd.f32 %v865, %v1035
      %v1068 = vadd.f32 %v867, %v1037
      %v1069 = vld [vmem:[#allocation2 + $0x8] sm:$0xe]
      %v1070 = vld [vmem:[#allocation2 + $0xc] sm:$0xf]
      %v1071 = vld [vmem:[#allocation2 + $0x10] sm:$0xf]
      %v1072 = vld [vmem:[#allocation2 + $0x14] sm:$0xf]
      %v1073 = vld [vmem:[#allocation2 + $0x18] sm:$0xf]
      %v1074 = vld [vmem:[#allocation2 + $0x1c] sm:$0xf]
      %v1075 = vld [vmem:[#allocation2 + $0x20] sm:$0xf]
      %v1076 = vld [vmem:[#allocation2 + $0x24] sm:$0xf]
      %v1077 = vld [vmem:[#allocation2 + $0x28] sm:$0xf]
      %v1078 = vld [vmem:[#allocation2 + $0x2c] sm:$0xf]
      %v1079 = vld [vmem:[#allocation2 + $0x30] sm:$0xf]
      %v1080 = vld [vmem:[#allocation2 + $0x34] sm:$0xf]
      %v1081 = vld [vmem:[#allocation2 + $0x38] sm:$0xf]
      %v1082 = vld [vmem:[#allocation2 + $0x3c] sm:$0xf]
      %v1083 = vld [vmem:[#allocation2 + $0x40] sm:$0xf]
      %v1084 = vld [vmem:[#allocation2 + $0x44] sm:$0xf]
      %v1085 = vld [vmem:[#allocation2 + $0x48] sm:$0xf]
      %v1086 = vld [vmem:[#allocation2 + $0x4c] sm:$0xf]
      %v1087 = vld [vmem:[#allocation2 + $0x50] sm:$0xf]
      %v1088 = vld [vmem:[#allocation2 + $0x54] sm:$0xf]
      %v1089 = vld [vmem:[#allocation2 + $0x58] sm:$0xf]
      %v1090 = vld [vmem:[#allocation2 + $0x5c] sm:$0xf]
      %v1091 = vld [vmem:[#allocation2 + $0x60] sm:$0xf]
      %v1092 = vld [vmem:[#allocation2 + $0x64] sm:$0xf]
      %v1093 = vld [vmem:[#allocation2 + $0x68] sm:$0xf]
      %v1094 = vld [vmem:[#allocation2 + $0x6c] sm:$0xf]
      %v1095 = vld [vmem:[#allocation2 + $0x70] sm:$0xf]
      %v1096 = vld [vmem:[#allocation2 + $0x74] sm:$0xf]
      %v1097 = vld [vmem:[#allocation2 + $0x78] sm:$0xf]
      %v1098 = vld [vmem:[#allocation2 + $0x7c] sm:$0xf]
      %v1099 = vld [vmem:[#allocation2 + $0x80] sm:$0x1]
      %s1100 = scalar_lea.vmem %s2, 6
      %v1101 = vld [vmem:[%s1100] sm:$0x3]
      %v1133 = vunpack.c.l.b16 %v1069
      %v1134 = vunpack.c.l.b16 %v1070
      %v1135 = vunpack.c.l.b16 %v1071
      %v1136 = vunpack.c.l.b16 %v1072
      %v1137 = vunpack.c.l.b16 %v1073
      %v1138 = vunpack.c.l.b16 %v1074
      %v1139 = vunpack.c.l.b16 %v1075
      %v1140 = vunpack.c.l.b16 %v1076
      %v1141 = vunpack.c.l.b16 %v1077
      %v1142 = vunpack.c.l.b16 %v1078
      %v1143 = vunpack.c.l.b16 %v1079
      %v1144 = vunpack.c.l.b16 %v1080
      %v1145 = vunpack.c.l.b16 %v1081
      %v1146 = vunpack.c.l.b16 %v1082
      %v1147 = vunpack.c.l.b16 %v1083
      %v1148 = vunpack.c.l.b16 %v1084
      %v1149 = vunpack.c.l.b16 %v1085
      %v1150 = vunpack.c.l.b16 %v1086
      %v1151 = vunpack.c.l.b16 %v1087
      %v1152 = vunpack.c.l.b16 %v1088
      %v1153 = vunpack.c.l.b16 %v1089
      %v1154 = vunpack.c.l.b16 %v1090
      %v1155 = vunpack.c.l.b16 %v1091
      %v1156 = vunpack.c.l.b16 %v1092
      %v1157 = vunpack.c.l.b16 %v1093
      %v1158 = vunpack.c.l.b16 %v1094
      %v1159 = vunpack.c.l.b16 %v1095
      %v1160 = vunpack.c.l.b16 %v1096
      %v1161 = vunpack.c.l.b16 %v1097
      %v1162 = vunpack.c.l.b16 %v1098
      %v1163 = vunpack.c.l.b16 %v1099
      %v1164 = vpack.c.b16 %v1134, %v1133
      %v1165 = vpack.c.b16 %v1136, %v1135
      %v1166 = vpack.c.b16 %v1138, %v1137
      %v1167 = vpack.c.b16 %v1140, %v1139
      %v1168 = vpack.c.b16 %v1142, %v1141
      %v1169 = vpack.c.b16 %v1144, %v1143
      %v1170 = vpack.c.b16 %v1146, %v1145
      %v1171 = vpack.c.b16 %v1148, %v1147
      %v1172 = vpack.c.b16 %v1150, %v1149
      %v1173 = vpack.c.b16 %v1152, %v1151
      %v1174 = vpack.c.b16 %v1154, %v1153
      %v1175 = vpack.c.b16 %v1156, %v1155
      %v1176 = vpack.c.b16 %v1158, %v1157
      %v1177 = vpack.c.b16 %v1160, %v1159
      %v1178 = vpack.c.b16 %v1162, %v1161
      %v1179 = vpack.c.b16 %v1163, %v1163
      %v1180 = vrot.slane %v1164, 1
      %v1181 = vrot.slane %v1165, 1
      %v1182 = vsel %vm875, %v1180, %v1181
      %v1183 = vrot.slane %v1166, 1
      %v1184 = vsel %vm875, %v1181, %v1183
      %v1185 = vrot.slane %v1167, 1
      %v1186 = vsel %vm875, %v1183, %v1185
      %v1187 = vrot.slane %v1168, 1
      %v1188 = vsel %vm875, %v1185, %v1187
      %v1189 = vrot.slane %v1169, 1
      %v1190 = vsel %vm875, %v1187, %v1189
      %v1191 = vrot.slane %v1170, 1
      %v1192 = vsel %vm875, %v1189, %v1191
      %v1193 = vrot.slane %v1171, 1
      %v1194 = vsel %vm875, %v1191, %v1193
      %v1195 = vrot.slane %v1172, 1
      %v1196 = vsel %vm875, %v1193, %v1195
      %v1197 = vrot.slane %v1173, 1
      %v1198 = vsel %vm875, %v1195, %v1197
      %v1199 = vrot.slane %v1174, 1
      %v1200 = vsel %vm875, %v1197, %v1199
      %v1201 = vrot.slane %v1175, 1
      %v1202 = vsel %vm875, %v1199, %v1201
      %v1203 = vrot.slane %v1176, 1
      %v1204 = vsel %vm875, %v1201, %v1203
      %v1205 = vrot.slane %v1177, 1
      %v1206 = vsel %vm875, %v1203, %v1205
      %v1207 = vrot.slane %v1178, 1
      %v1208 = vsel %vm875, %v1205, %v1207
      %v1209 = vrot.slane %v1179, 1
      %v1210 = vsel %vm875, %v1207, %v1209
      %v1212 = vsel %vm618, %v1182, 0
      %v1215 = vsel %vm618, %v1184, 0
      %v1218 = vsel %vm618, %v1186, 0
      %v1221 = vsel %vm618, %v1188, 0
      %v1224 = vsel %vm618, %v1190, 0
      %v1227 = vsel %vm618, %v1192, 0
      %v1230 = vsel %vm618, %v1194, 0
      %v1233 = vsel %vm618, %v1196, 0
      %v1236 = vsel %vm618, %v1198, 0
      %v1239 = vsel %vm618, %v1200, 0
      %v1242 = vsel %vm618, %v1202, 0
      %v1245 = vsel %vm618, %v1204, 0
      %v1248 = vsel %vm618, %v1206, 0
      %v1251 = vsel %vm618, %v1208, 0
      %v1254 = vsel %vm618, %v1210, 0
      %v1257 = vsel %vm664, %v1101, 0
      %1259 = vmatpush.bf16.msra.mxu0 0
      %1260 = vmatpush.bf16.msra.mxu0 0
      %1261 = vmatpush.bf16.msra.mxu0 0
      %1262 = vmatpush.bf16.msra.mxu0 0
      %1263 = vmatpush.bf16.msra.mxu0 0
      %1264 = vmatpush.bf16.msra.mxu0 0
      %1265 = vmatpush.bf16.msra.mxu0 0
      %1266 = vmatpush.bf16.msra.mxu0 %v1257
      %1267 = vmatmul.bf16.gmra.mxu0 %v1212
      %v1268 = vpop.f32.mrf.mxu0
      %v1269 = vadd.f32 0.0, %v1268
      %v1270 = vpop.f32.mrf.mxu0
      %v1271 = vadd.f32 0.0, %v1270
      %1272 = vmatmul.bf16.gmra.mxu0 %v1215
      %v1273 = vpop.f32.mrf.mxu0
      %v1274 = vadd.f32 0.0, %v1273
      %v1275 = vpop.f32.mrf.mxu0
      %v1276 = vadd.f32 0.0, %v1275
      %1277 = vmatmul.bf16.gmra.mxu0 %v1218
      %v1278 = vpop.f32.mrf.mxu0
      %v1279 = vadd.f32 0.0, %v1278
      %v1280 = vpop.f32.mrf.mxu0
      %v1281 = vadd.f32 0.0, %v1280
      %1282 = vmatmul.bf16.gmra.mxu0 %v1221
      %v1283 = vpop.f32.mrf.mxu0
      %v1284 = vadd.f32 0.0, %v1283
      %v1285 = vpop.f32.mrf.mxu0
      %v1286 = vadd.f32 0.0, %v1285
      %1287 = vmatmul.bf16.gmra.mxu0 %v1224
      %v1288 = vpop.f32.mrf.mxu0
      %v1289 = vadd.f32 0.0, %v1288
      %v1290 = vpop.f32.mrf.mxu0
      %v1291 = vadd.f32 0.0, %v1290
      %1292 = vmatmul.bf16.gmra.mxu0 %v1227
      %v1293 = vpop.f32.mrf.mxu0
      %v1294 = vadd.f32 0.0, %v1293
      %v1295 = vpop.f32.mrf.mxu0
      %v1296 = vadd.f32 0.0, %v1295
      %1297 = vmatmul.bf16.gmra.mxu0 %v1230
      %v1298 = vpop.f32.mrf.mxu0
      %v1299 = vadd.f32 0.0, %v1298
      %v1300 = vpop.f32.mrf.mxu0
      %v1301 = vadd.f32 0.0, %v1300
      %1302 = vmatmul.bf16.gmra.mxu0 %v1233
      %v1303 = vpop.f32.mrf.mxu0
      %v1304 = vadd.f32 0.0, %v1303
      %v1305 = vpop.f32.mrf.mxu0
      %v1306 = vadd.f32 0.0, %v1305
      %1307 = vmatmul.bf16.gmra.mxu0 %v1236
      %v1308 = vpop.f32.mrf.mxu0
      %v1309 = vadd.f32 0.0, %v1308
      %v1310 = vpop.f32.mrf.mxu0
      %v1311 = vadd.f32 0.0, %v1310
      %1312 = vmatmul.bf16.gmra.mxu0 %v1239
      %v1313 = vpop.f32.mrf.mxu0
      %v1314 = vadd.f32 0.0, %v1313
      %v1315 = vpop.f32.mrf.mxu0
      %v1316 = vadd.f32 0.0, %v1315
      %1317 = vmatmul.bf16.gmra.mxu0 %v1242
      %v1318 = vpop.f32.mrf.mxu0
      %v1319 = vadd.f32 0.0, %v1318
      %v1320 = vpop.f32.mrf.mxu0
      %v1321 = vadd.f32 0.0, %v1320
      %1322 = vmatmul.bf16.gmra.mxu0 %v1245
      %v1323 = vpop.f32.mrf.mxu0
      %v1324 = vadd.f32 0.0, %v1323
      %v1325 = vpop.f32.mrf.mxu0
      %v1326 = vadd.f32 0.0, %v1325
      %1327 = vmatmul.bf16.gmra.mxu0 %v1248
      %v1328 = vpop.f32.mrf.mxu0
      %v1329 = vadd.f32 0.0, %v1328
      %v1330 = vpop.f32.mrf.mxu0
      %v1331 = vadd.f32 0.0, %v1330
      %1332 = vmatmul.bf16.gmra.mxu0 %v1251
      %v1333 = vpop.f32.mrf.mxu0
      %v1334 = vadd.f32 0.0, %v1333
      %v1335 = vpop.f32.mrf.mxu0
      %v1336 = vadd.f32 0.0, %v1335
      %1337 = vmatmul.bf16.gmra.mxu0 %v1254
      %v1338 = vpop.f32.mrf.mxu0
      %v1339 = vadd.f32 0.0, %v1338
      %v1340 = vpop.f32.mrf.mxu0
      %v1341 = vadd.f32 0.0, %v1340
      %1342 = vdwg.mxu0
      %v1343 = vadd.f32 %v1039, %v1269
      %v1344 = vadd.f32 %v1040, %v1271
      %v1345 = vadd.f32 %v1041, %v1274
      %v1346 = vadd.f32 %v1042, %v1276
      %v1347 = vadd.f32 %v1043, %v1279
      %v1348 = vadd.f32 %v1044, %v1281
      %v1349 = vadd.f32 %v1045, %v1284
      %v1350 = vadd.f32 %v1046, %v1286
      %v1351 = vadd.f32 %v1047, %v1289
      %v1352 = vadd.f32 %v1048, %v1291
      %v1353 = vadd.f32 %v1049, %v1294
      %v1354 = vadd.f32 %v1050, %v1296
      %v1355 = vadd.f32 %v1051, %v1299
      %v1356 = vadd.f32 %v1052, %v1301
      %v1357 = vadd.f32 %v1053, %v1304
      %v1358 = vadd.f32 %v1054, %v1306
      %v1359 = vadd.f32 %v1055, %v1309
      %v1360 = vadd.f32 %v1056, %v1311
      %v1361 = vadd.f32 %v1057, %v1314
      %v1362 = vadd.f32 %v1058, %v1316
      %v1363 = vadd.f32 %v1059, %v1319
      %v1364 = vadd.f32 %v1060, %v1321
      %v1365 = vadd.f32 %v1061, %v1324
      %v1366 = vadd.f32 %v1062, %v1326
      %v1367 = vadd.f32 %v1063, %v1329
      %v1368 = vadd.f32 %v1064, %v1331
      %v1369 = vadd.f32 %v1065, %v1334
      %v1370 = vadd.f32 %v1066, %v1336
      %v1371 = vadd.f32 %v1067, %v1339
      %v1372 = vadd.f32 %v1068, %v1341
      %v1373 = vld [vmem:[#allocation2 + $0x80] sm:$0x3]
      %s1374 = scalar_lea.vmem %s2, 8
      %v1375 = vld [vmem:[%s1374] sm:$0x3]
      %v1377 = vunpack.c.l.b16 %v1373
      %v1378 = vpack.c.b16 %v1377, %v1377
      %vm1379 = vsmask.f32 6400
      %v1381 = vshrl.u32 %v1164, 16
      %v1383 = vrot.slane %v1381, 1
      %v1384 = vshll.u32 %v1164, 16
      %v1386 = vrot.slane %v1384, 2
      %v1387 = vor.u32 %v1383, %v1386
      %v1389 = vshrl.u32 %v1165, 16
      %v1391 = vrot.slane %v1389, 1
      %v1392 = vshll.u32 %v1165, 16
      %v1394 = vrot.slane %v1392, 2
      %v1395 = vor.u32 %v1391, %v1394
      %v1396 = vsel %vm1379, %v1387, %v1395
      %v1398 = vshrl.u32 %v1166, 16
      %v1400 = vrot.slane %v1398, 1
      %v1401 = vshll.u32 %v1166, 16
      %v1403 = vrot.slane %v1401, 2
      %v1404 = vor.u32 %v1400, %v1403
      %v1405 = vsel %vm1379, %v1395, %v1404
      %v1407 = vshrl.u32 %v1167, 16
      %v1409 = vrot.slane %v1407, 1
      %v1410 = vshll.u32 %v1167, 16
      %v1412 = vrot.slane %v1410, 2
      %v1413 = vor.u32 %v1409, %v1412
      %v1414 = vsel %vm1379, %v1404, %v1413
      %v1416 = vshrl.u32 %v1168, 16
      %v1418 = vrot.slane %v1416, 1
      %v1419 = vshll.u32 %v1168, 16
      %v1421 = vrot.slane %v1419, 2
      %v1422 = vor.u32 %v1418, %v1421
      %v1423 = vsel %vm1379, %v1413, %v1422
      %v1425 = vshrl.u32 %v1169, 16
      %v1427 = vrot.slane %v1425, 1
      %v1428 = vshll.u32 %v1169, 16
      %v1430 = vrot.slane %v1428, 2
      %v1431 = vor.u32 %v1427, %v1430
      %v1432 = vsel %vm1379, %v1422, %v1431
      %v1434 = vshrl.u32 %v1170, 16
      %v1436 = vrot.slane %v1434, 1
      %v1437 = vshll.u32 %v1170, 16
      %v1439 = vrot.slane %v1437, 2
      %v1440 = vor.u32 %v1436, %v1439
      %v1441 = vsel %vm1379, %v1431, %v1440
      %v1443 = vshrl.u32 %v1171, 16
      %v1445 = vrot.slane %v1443, 1
      %v1446 = vshll.u32 %v1171, 16
      %v1448 = vrot.slane %v1446, 2
      %v1449 = vor.u32 %v1445, %v1448
      %v1450 = vsel %vm1379, %v1440, %v1449
      %v1452 = vshrl.u32 %v1172, 16
      %v1454 = vrot.slane %v1452, 1
      %v1455 = vshll.u32 %v1172, 16
      %v1457 = vrot.slane %v1455, 2
      %v1458 = vor.u32 %v1454, %v1457
      %v1459 = vsel %vm1379, %v1449, %v1458
      %v1461 = vshrl.u32 %v1173, 16
      %v1463 = vrot.slane %v1461, 1
      %v1464 = vshll.u32 %v1173, 16
      %v1466 = vrot.slane %v1464, 2
      %v1467 = vor.u32 %v1463, %v1466
      %v1468 = vsel %vm1379, %v1458, %v1467
      %v1470 = vshrl.u32 %v1174, 16
      %v1472 = vrot.slane %v1470, 1
      %v1473 = vshll.u32 %v1174, 16
      %v1475 = vrot.slane %v1473, 2
      %v1476 = vor.u32 %v1472, %v1475
      %v1477 = vsel %vm1379, %v1467, %v1476
      %v1479 = vshrl.u32 %v1175, 16
      %v1481 = vrot.slane %v1479, 1
      %v1482 = vshll.u32 %v1175, 16
      %v1484 = vrot.slane %v1482, 2
      %v1485 = vor.u32 %v1481, %v1484
      %v1486 = vsel %vm1379, %v1476, %v1485
      %v1488 = vshrl.u32 %v1176, 16
      %v1490 = vrot.slane %v1488, 1
      %v1491 = vshll.u32 %v1176, 16
      %v1493 = vrot.slane %v1491, 2
      %v1494 = vor.u32 %v1490, %v1493
      %v1495 = vsel %vm1379, %v1485, %v1494
      %v1497 = vshrl.u32 %v1177, 16
      %v1499 = vrot.slane %v1497, 1
      %v1500 = vshll.u32 %v1177, 16
      %v1502 = vrot.slane %v1500, 2
      %v1503 = vor.u32 %v1499, %v1502
      %v1504 = vsel %vm1379, %v1494, %v1503
      %v1506 = vshrl.u32 %v1178, 16
      %v1508 = vrot.slane %v1506, 1
      %v1509 = vshll.u32 %v1178, 16
      %v1511 = vrot.slane %v1509, 2
      %v1512 = vor.u32 %v1508, %v1511
      %v1513 = vsel %vm1379, %v1503, %v1512
      %v1515 = vshrl.u32 %v1378, 16
      %v1517 = vrot.slane %v1515, 1
      %v1518 = vshll.u32 %v1378, 16
      %v1520 = vrot.slane %v1518, 2
      %v1521 = vor.u32 %v1517, %v1520
      %v1522 = vsel %vm1379, %v1512, %v1521
      %v1524 = vsel %vm618, %v1396, 0
      %v1527 = vsel %vm618, %v1405, 0
      %v1530 = vsel %vm618, %v1414, 0
      %v1533 = vsel %vm618, %v1423, 0
      %v1536 = vsel %vm618, %v1432, 0
      %v1539 = vsel %vm618, %v1441, 0
      %v1542 = vsel %vm618, %v1450, 0
      %v1545 = vsel %vm618, %v1459, 0
      %v1548 = vsel %vm618, %v1468, 0
      %v1551 = vsel %vm618, %v1477, 0
      %v1554 = vsel %vm618, %v1486, 0
      %v1557 = vsel %vm618, %v1495, 0
      %v1560 = vsel %vm618, %v1504, 0
      %v1563 = vsel %vm618, %v1513, 0
      %v1566 = vsel %vm618, %v1522, 0
      %v1569 = vsel %vm664, %v1375, 0
      %1571 = vmatpush.bf16.msra.mxu0 0
      %1572 = vmatpush.bf16.msra.mxu0 0
      %1573 = vmatpush.bf16.msra.mxu0 0
      %1574 = vmatpush.bf16.msra.mxu0 0
      %1575 = vmatpush.bf16.msra.mxu0 0
      %1576 = vmatpush.bf16.msra.mxu0 0
      %1577 = vmatpush.bf16.msra.mxu0 0
      %1578 = vmatpush.bf16.msra.mxu0 %v1569
      %1579 = vmatmul.bf16.gmra.mxu0 %v1524
      %v1580 = vpop.f32.mrf.mxu0
      %v1581 = vadd.f32 0.0, %v1580
      %v1582 = vpop.f32.mrf.mxu0
      %v1583 = vadd.f32 0.0, %v1582
      %1584 = vmatmul.bf16.gmra.mxu0 %v1527
      %v1585 = vpop.f32.mrf.mxu0
      %v1586 = vadd.f32 0.0, %v1585
      %v1587 = vpop.f32.mrf.mxu0
      %v1588 = vadd.f32 0.0, %v1587
      %1589 = vmatmul.bf16.gmra.mxu0 %v1530
      %v1590 = vpop.f32.mrf.mxu0
      %v1591 = vadd.f32 0.0, %v1590
      %v1592 = vpop.f32.mrf.mxu0
      %v1593 = vadd.f32 0.0, %v1592
      %1594 = vmatmul.bf16.gmra.mxu0 %v1533
      %v1595 = vpop.f32.mrf.mxu0
      %v1596 = vadd.f32 0.0, %v1595
      %v1597 = vpop.f32.mrf.mxu0
      %v1598 = vadd.f32 0.0, %v1597
      %1599 = vmatmul.bf16.gmra.mxu0 %v1536
      %v1600 = vpop.f32.mrf.mxu0
      %v1601 = vadd.f32 0.0, %v1600
      %v1602 = vpop.f32.mrf.mxu0
      %v1603 = vadd.f32 0.0, %v1602
      %1604 = vmatmul.bf16.gmra.mxu0 %v1539
      %v1605 = vpop.f32.mrf.mxu0
      %v1606 = vadd.f32 0.0, %v1605
      %v1607 = vpop.f32.mrf.mxu0
      %v1608 = vadd.f32 0.0, %v1607
      %1609 = vmatmul.bf16.gmra.mxu0 %v1542
      %v1610 = vpop.f32.mrf.mxu0
      %v1611 = vadd.f32 0.0, %v1610
      %v1612 = vpop.f32.mrf.mxu0
      %v1613 = vadd.f32 0.0, %v1612
      %1614 = vmatmul.bf16.gmra.mxu0 %v1545
      %v1615 = vpop.f32.mrf.mxu0
      %v1616 = vadd.f32 0.0, %v1615
      %v1617 = vpop.f32.mrf.mxu0
      %v1618 = vadd.f32 0.0, %v1617
      %1619 = vmatmul.bf16.gmra.mxu0 %v1548
      %v1620 = vpop.f32.mrf.mxu0
      %v1621 = vadd.f32 0.0, %v1620
      %v1622 = vpop.f32.mrf.mxu0
      %v1623 = vadd.f32 0.0, %v1622
      %1624 = vmatmul.bf16.gmra.mxu0 %v1551
      %v1625 = vpop.f32.mrf.mxu0
      %v1626 = vadd.f32 0.0, %v1625
      %v1627 = vpop.f32.mrf.mxu0
      %v1628 = vadd.f32 0.0, %v1627
      %1629 = vmatmul.bf16.gmra.mxu0 %v1554
      %v1630 = vpop.f32.mrf.mxu0
      %v1631 = vadd.f32 0.0, %v1630
      %v1632 = vpop.f32.mrf.mxu0
      %v1633 = vadd.f32 0.0, %v1632
      %1634 = vmatmul.bf16.gmra.mxu0 %v1557
      %v1635 = vpop.f32.mrf.mxu0
      %v1636 = vadd.f32 0.0, %v1635
      %v1637 = vpop.f32.mrf.mxu0
      %v1638 = vadd.f32 0.0, %v1637
      %1639 = vmatmul.bf16.gmra.mxu0 %v1560
      %v1640 = vpop.f32.mrf.mxu0
      %v1641 = vadd.f32 0.0, %v1640
      %v1642 = vpop.f32.mrf.mxu0
      %v1643 = vadd.f32 0.0, %v1642
      %1644 = vmatmul.bf16.gmra.mxu0 %v1563
      %v1645 = vpop.f32.mrf.mxu0
      %v1646 = vadd.f32 0.0, %v1645
      %v1647 = vpop.f32.mrf.mxu0
      %v1648 = vadd.f32 0.0, %v1647
      %1649 = vmatmul.bf16.gmra.mxu0 %v1566
      %v1650 = vpop.f32.mrf.mxu0
      %v1651 = vadd.f32 0.0, %v1650
      %v1652 = vpop.f32.mrf.mxu0
      %v1653 = vadd.f32 0.0, %v1652
      %1654 = vdwg.mxu0
      %v1655 = vadd.f32 %v1343, %v1581
      %v1656 = vadd.f32 %v1344, %v1583
      %v1657 = vadd.f32 %v1345, %v1586
      %v1658 = vadd.f32 %v1346, %v1588
      %v1659 = vadd.f32 %v1347, %v1591
      %v1660 = vadd.f32 %v1348, %v1593
      %v1661 = vadd.f32 %v1349, %v1596
      %v1662 = vadd.f32 %v1350, %v1598
      %v1663 = vadd.f32 %v1351, %v1601
      %v1664 = vadd.f32 %v1352, %v1603
      %v1665 = vadd.f32 %v1353, %v1606
      %v1666 = vadd.f32 %v1354, %v1608
      %v1667 = vadd.f32 %v1355, %v1611
      %v1668 = vadd.f32 %v1356, %v1613
      %v1669 = vadd.f32 %v1357, %v1616
      %v1670 = vadd.f32 %v1358, %v1618
      %v1671 = vadd.f32 %v1359, %v1621
      %v1672 = vadd.f32 %v1360, %v1623
      %v1673 = vadd.f32 %v1361, %v1626
      %v1674 = vadd.f32 %v1362, %v1628
      %v1675 = vadd.f32 %v1363, %v1631
      %v1676 = vadd.f32 %v1364, %v1633
      %v1677 = vadd.f32 %v1365, %v1636
      %v1678 = vadd.f32 %v1366, %v1638
      %v1679 = vadd.f32 %v1367, %v1641
      %v1680 = vadd.f32 %v1368, %v1643
      %v1681 = vadd.f32 %v1369, %v1646
      %v1682 = vadd.f32 %v1370, %v1648
      %v1683 = vadd.f32 %v1371, %v1651
      %v1684 = vadd.f32 %v1372, %v1653
      %v1685 = vld [vmem:[#allocation2 + $0x8] sm:$0xc]
      %s1686 = scalar_lea.vmem %s2, 10
      %v1687 = vld [vmem:[%s1686] sm:$0x3]
      %v1689 = vunpack.c.l.b16 %v1685
      %v1690 = vpack.c.b16 %v1134, %v1689
      %vm1691 = vcmask 1045504
      %v1692 = vrot.slane %v1690, 2
      %v1693 = vrot.slane %v1165, 2
      %v1694 = vsel %vm1691, %v1692, %v1693
      %v1695 = vrot.slane %v1166, 2
      %v1696 = vsel %vm1691, %v1693, %v1695
      %v1697 = vrot.slane %v1167, 2
      %v1698 = vsel %vm1691, %v1695, %v1697
      %v1699 = vrot.slane %v1168, 2
      %v1700 = vsel %vm1691, %v1697, %v1699
      %v1701 = vrot.slane %v1169, 2
      %v1702 = vsel %vm1691, %v1699, %v1701
      %v1703 = vrot.slane %v1170, 2
      %v1704 = vsel %vm1691, %v1701, %v1703
      %v1705 = vrot.slane %v1171, 2
      %v1706 = vsel %vm1691, %v1703, %v1705
      %v1707 = vrot.slane %v1172, 2
      %v1708 = vsel %vm1691, %v1705, %v1707
      %v1709 = vrot.slane %v1173, 2
      %v1710 = vsel %vm1691, %v1707, %v1709
      %v1711 = vrot.slane %v1174, 2
      %v1712 = vsel %vm1691, %v1709, %v1711
      %v1713 = vrot.slane %v1175, 2
      %v1714 = vsel %vm1691, %v1711, %v1713
      %v1715 = vrot.slane %v1176, 2
      %v1716 = vsel %vm1691, %v1713, %v1715
      %v1717 = vrot.slane %v1177, 2
      %v1718 = vsel %vm1691, %v1715, %v1717
      %v1719 = vrot.slane %v1178, 2
      %v1720 = vsel %vm1691, %v1717, %v1719
      %v1721 = vrot.slane %v1378, 2
      %v1722 = vsel %vm1691, %v1719, %v1721
      %v1724 = vsel %vm618, %v1694, 0
      %v1727 = vsel %vm618, %v1696, 0
      %v1730 = vsel %vm618, %v1698, 0
      %v1733 = vsel %vm618, %v1700, 0
      %v1736 = vsel %vm618, %v1702, 0
      %v1739 = vsel %vm618, %v1704, 0
      %v1742 = vsel %vm618, %v1706, 0
      %v1745 = vsel %vm618, %v1708, 0
      %v1748 = vsel %vm618, %v1710, 0
      %v1751 = vsel %vm618, %v1712, 0
      %v1754 = vsel %vm618, %v1714, 0
      %v1757 = vsel %vm618, %v1716, 0
      %v1760 = vsel %vm618, %v1718, 0
      %v1763 = vsel %vm618, %v1720, 0
      %v1766 = vsel %vm618, %v1722, 0
      %v1769 = vsel %vm664, %v1687, 0
      %1771 = vmatpush.bf16.msra.mxu0 0
      %1772 = vmatpush.bf16.msra.mxu0 0
      %1773 = vmatpush.bf16.msra.mxu0 0
      %1774 = vmatpush.bf16.msra.mxu0 0
      %1775 = vmatpush.bf16.msra.mxu0 0
      %1776 = vmatpush.bf16.msra.mxu0 0
      %1777 = vmatpush.bf16.msra.mxu0 0
      %1778 = vmatpush.bf16.msra.mxu0 %v1769
      %1779 = vmatmul.bf16.gmra.mxu0 %v1724
      %v1780 = vpop.f32.mrf.mxu0
      %v1781 = vadd.f32 0.0, %v1780
      %v1782 = vpop.f32.mrf.mxu0
      %v1783 = vadd.f32 0.0, %v1782
      %1784 = vmatmul.bf16.gmra.mxu0 %v1727
      %v1785 = vpop.f32.mrf.mxu0
      %v1786 = vadd.f32 0.0, %v1785
      %v1787 = vpop.f32.mrf.mxu0
      %v1788 = vadd.f32 0.0, %v1787
      %1789 = vmatmul.bf16.gmra.mxu0 %v1730
      %v1790 = vpop.f32.mrf.mxu0
      %v1791 = vadd.f32 0.0, %v1790
      %v1792 = vpop.f32.mrf.mxu0
      %v1793 = vadd.f32 0.0, %v1792
      %1794 = vmatmul.bf16.gmra.mxu0 %v1733
      %v1795 = vpop.f32.mrf.mxu0
      %v1796 = vadd.f32 0.0, %v1795
      %v1797 = vpop.f32.mrf.mxu0
      %v1798 = vadd.f32 0.0, %v1797
      %1799 = vmatmul.bf16.gmra.mxu0 %v1736
      %v1800 = vpop.f32.mrf.mxu0
      %v1801 = vadd.f32 0.0, %v1800
      %v1802 = vpop.f32.mrf.mxu0
      %v1803 = vadd.f32 0.0, %v1802
      %1804 = vmatmul.bf16.gmra.mxu0 %v1739
      %v1805 = vpop.f32.mrf.mxu0
      %v1806 = vadd.f32 0.0, %v1805
      %v1807 = vpop.f32.mrf.mxu0
      %v1808 = vadd.f32 0.0, %v1807
      %1809 = vmatmul.bf16.gmra.mxu0 %v1742
      %v1810 = vpop.f32.mrf.mxu0
      %v1811 = vadd.f32 0.0, %v1810
      %v1812 = vpop.f32.mrf.mxu0
      %v1813 = vadd.f32 0.0, %v1812
      %1814 = vmatmul.bf16.gmra.mxu0 %v1745
      %v1815 = vpop.f32.mrf.mxu0
      %v1816 = vadd.f32 0.0, %v1815
      %v1817 = vpop.f32.mrf.mxu0
      %v1818 = vadd.f32 0.0, %v1817
      %1819 = vmatmul.bf16.gmra.mxu0 %v1748
      %v1820 = vpop.f32.mrf.mxu0
      %v1821 = vadd.f32 0.0, %v1820
      %v1822 = vpop.f32.mrf.mxu0
      %v1823 = vadd.f32 0.0, %v1822
      %1824 = vmatmul.bf16.gmra.mxu0 %v1751
      %v1825 = vpop.f32.mrf.mxu0
      %v1826 = vadd.f32 0.0, %v1825
      %v1827 = vpop.f32.mrf.mxu0
      %v1828 = vadd.f32 0.0, %v1827
      %1829 = vmatmul.bf16.gmra.mxu0 %v1754
      %v1830 = vpop.f32.mrf.mxu0
      %v1831 = vadd.f32 0.0, %v1830
      %v1832 = vpop.f32.mrf.mxu0
      %v1833 = vadd.f32 0.0, %v1832
      %1834 = vmatmul.bf16.gmra.mxu0 %v1757
      %v1835 = vpop.f32.mrf.mxu0
      %v1836 = vadd.f32 0.0, %v1835
      %v1837 = vpop.f32.mrf.mxu0
      %v1838 = vadd.f32 0.0, %v1837
      %1839 = vmatmul.bf16.gmra.mxu0 %v1760
      %v1840 = vpop.f32.mrf.mxu0
      %v1841 = vadd.f32 0.0, %v1840
      %v1842 = vpop.f32.mrf.mxu0
      %v1843 = vadd.f32 0.0, %v1842
      %1844 = vmatmul.bf16.gmra.mxu0 %v1763
      %v1845 = vpop.f32.mrf.mxu0
      %v1846 = vadd.f32 0.0, %v1845
      %v1847 = vpop.f32.mrf.mxu0
      %v1848 = vadd.f32 0.0, %v1847
      %1849 = vmatmul.bf16.gmra.mxu0 %v1766
      %v1850 = vpop.f32.mrf.mxu0
      %v1851 = vadd.f32 0.0, %v1850
      %v1852 = vpop.f32.mrf.mxu0
      %v1853 = vadd.f32 0.0, %v1852
      %1854 = vdwg.mxu0
      %v1855 = vadd.f32 %v1655, %v1781
      %v1856 = vadd.f32 %v1656, %v1783
      %v1857 = vadd.f32 %v1657, %v1786
      %v1858 = vadd.f32 %v1658, %v1788
      %v1859 = vadd.f32 %v1659, %v1791
      %v1860 = vadd.f32 %v1660, %v1793
      %v1861 = vadd.f32 %v1661, %v1796
      %v1862 = vadd.f32 %v1662, %v1798
      %v1863 = vadd.f32 %v1663, %v1801
      %v1864 = vadd.f32 %v1664, %v1803
      %v1865 = vadd.f32 %v1665, %v1806
      %v1866 = vadd.f32 %v1666, %v1808
      %v1867 = vadd.f32 %v1667, %v1811
      %v1868 = vadd.f32 %v1668, %v1813
      %v1869 = vadd.f32 %v1669, %v1816
      %v1870 = vadd.f32 %v1670, %v1818
      %v1871 = vadd.f32 %v1671, %v1821
      %v1872 = vadd.f32 %v1672, %v1823
      %v1873 = vadd.f32 %v1673, %v1826
      %v1874 = vadd.f32 %v1674, %v1828
      %v1875 = vadd.f32 %v1675, %v1831
      %v1876 = vadd.f32 %v1676, %v1833
      %v1877 = vadd.f32 %v1677, %v1836
      %v1878 = vadd.f32 %v1678, %v1838
      %v1879 = vadd.f32 %v1679, %v1841
      %v1880 = vadd.f32 %v1680, %v1843
      %v1881 = vadd.f32 %v1681, %v1846
      %v1882 = vadd.f32 %v1682, %v1848
      %v1883 = vadd.f32 %v1683, %v1851
      %v1884 = vadd.f32 %v1684, %v1853
      %v1885 = vld [vmem:[#allocation2 + $0x10] sm:$0xc]
      %v1886 = vld [vmem:[#allocation2 + $0x14] sm:$0xf]
      %v1887 = vld [vmem:[#allocation2 + $0x18] sm:$0xf]
      %v1888 = vld [vmem:[#allocation2 + $0x1c] sm:$0xf]
      %v1889 = vld [vmem:[#allocation2 + $0x20] sm:$0xf]
      %v1890 = vld [vmem:[#allocation2 + $0x24] sm:$0xf]
      %v1891 = vld [vmem:[#allocation2 + $0x28] sm:$0xf]
      %v1892 = vld [vmem:[#allocation2 + $0x2c] sm:$0xf]
      %v1893 = vld [vmem:[#allocation2 + $0x30] sm:$0xf]
      %v1894 = vld [vmem:[#allocation2 + $0x34] sm:$0xf]
      %v1895 = vld [vmem:[#allocation2 + $0x38] sm:$0xf]
      %v1896 = vld [vmem:[#allocation2 + $0x3c] sm:$0xf]
      %v1897 = vld [vmem:[#allocation2 + $0x40] sm:$0xf]
      %v1898 = vld [vmem:[#allocation2 + $0x44] sm:$0xf]
      %v1899 = vld [vmem:[#allocation2 + $0x48] sm:$0xf]
      %v1900 = vld [vmem:[#allocation2 + $0x4c] sm:$0xf]
      %v1901 = vld [vmem:[#allocation2 + $0x50] sm:$0xf]
      %v1902 = vld [vmem:[#allocation2 + $0x54] sm:$0xf]
      %v1903 = vld [vmem:[#allocation2 + $0x58] sm:$0xf]
      %v1904 = vld [vmem:[#allocation2 + $0x5c] sm:$0xf]
      %v1905 = vld [vmem:[#allocation2 + $0x60] sm:$0xf]
      %v1906 = vld [vmem:[#allocation2 + $0x64] sm:$0xf]
      %v1907 = vld [vmem:[#allocation2 + $0x68] sm:$0xf]
      %v1908 = vld [vmem:[#allocation2 + $0x6c] sm:$0xf]
      %v1909 = vld [vmem:[#allocation2 + $0x70] sm:$0xf]
      %v1910 = vld [vmem:[#allocation2 + $0x74] sm:$0xf]
      %v1911 = vld [vmem:[#allocation2 + $0x78] sm:$0xf]
      %v1912 = vld [vmem:[#allocation2 + $0x7c] sm:$0xf]
      %v1913 = vld [vmem:[#allocation2 + $0x80] sm:$0xf]
      %v1914 = vld [vmem:[#allocation2 + $0x84] sm:$0xf]
      %v1915 = vld [vmem:[#allocation2 + $0x88] sm:$0x3]
      %s1916 = scalar_lea.vmem %s2, 12
      %v1917 = vld [vmem:[%s1916] sm:$0x3]
      %v1949 = vunpack.c.l.b16 %v1885
      %v1950 = vunpack.c.l.b16 %v1886
      %v1951 = vunpack.c.l.b16 %v1887
      %v1952 = vunpack.c.l.b16 %v1888
      %v1953 = vunpack.c.l.b16 %v1889
      %v1954 = vunpack.c.l.b16 %v1890
      %v1955 = vunpack.c.l.b16 %v1891
      %v1956 = vunpack.c.l.b16 %v1892
      %v1957 = vunpack.c.l.b16 %v1893
      %v1958 = vunpack.c.l.b16 %v1894
      %v1959 = vunpack.c.l.b16 %v1895
      %v1960 = vunpack.c.l.b16 %v1896
      %v1961 = vunpack.c.l.b16 %v1897
      %v1962 = vunpack.c.l.b16 %v1898
      %v1963 = vunpack.c.l.b16 %v1899
      %v1964 = vunpack.c.l.b16 %v1900
      %v1965 = vunpack.c.l.b16 %v1901
      %v1966 = vunpack.c.l.b16 %v1902
      %v1967 = vunpack.c.l.b16 %v1903
      %v1968 = vunpack.c.l.b16 %v1904
      %v1969 = vunpack.c.l.b16 %v1905
      %v1970 = vunpack.c.l.b16 %v1906
      %v1971 = vunpack.c.l.b16 %v1907
      %v1972 = vunpack.c.l.b16 %v1908
      %v1973 = vunpack.c.l.b16 %v1909
      %v1974 = vunpack.c.l.b16 %v1910
      %v1975 = vunpack.c.l.b16 %v1911
      %v1976 = vunpack.c.l.b16 %v1912
      %v1977 = vunpack.c.l.b16 %v1913
      %v1978 = vunpack.c.l.b16 %v1914
      %v1979 = vunpack.c.l.b16 %v1915
      %v1980 = vpack.c.b16 %v1950, %v1949
      %v1981 = vpack.c.b16 %v1952, %v1951
      %v1982 = vpack.c.b16 %v1954, %v1953
      %v1983 = vpack.c.b16 %v1956, %v1955
      %v1984 = vpack.c.b16 %v1958, %v1957
      %v1985 = vpack.c.b16 %v1960, %v1959
      %v1986 = vpack.c.b16 %v1962, %v1961
      %v1987 = vpack.c.b16 %v1964, %v1963
      %v1988 = vpack.c.b16 %v1966, %v1965
      %v1989 = vpack.c.b16 %v1968, %v1967
      %v1990 = vpack.c.b16 %v1970, %v1969
      %v1991 = vpack.c.b16 %v1972, %v1971
      %v1992 = vpack.c.b16 %v1974, %v1973
      %v1993 = vpack.c.b16 %v1976, %v1975
      %v1994 = vpack.c.b16 %v1978, %v1977
      %v1995 = vpack.c.b16 %v1979, %v1979
      %v1996 = vrot.slane %v1980, 2
      %v1997 = vrot.slane %v1981, 2
      %v1998 = vsel %vm1691, %v1996, %v1997
      %v1999 = vrot.slane %v1982, 2
      %v2000 = vsel %vm1691, %v1997, %v1999
      %v2001 = vrot.slane %v1983, 2
      %v2002 = vsel %vm1691, %v1999, %v2001
      %v2003 = vrot.slane %v1984, 2
      %v2004 = vsel %vm1691, %v2001, %v2003
      %v2005 = vrot.slane %v1985, 2
      %v2006 = vsel %vm1691, %v2003, %v2005
      %v2007 = vrot.slane %v1986, 2
      %v2008 = vsel %vm1691, %v2005, %v2007
      %v2009 = vrot.slane %v1987, 2
      %v2010 = vsel %vm1691, %v2007, %v2009
      %v2011 = vrot.slane %v1988, 2
      %v2012 = vsel %vm1691, %v2009, %v2011
      %v2013 = vrot.slane %v1989, 2
      %v2014 = vsel %vm1691, %v2011, %v2013
      %v2015 = vrot.slane %v1990, 2
      %v2016 = vsel %vm1691, %v2013, %v2015
      %v2017 = vrot.slane %v1991, 2
      %v2018 = vsel %vm1691, %v2015, %v2017
      %v2019 = vrot.slane %v1992, 2
      %v2020 = vsel %vm1691, %v2017, %v2019
      %v2021 = vrot.slane %v1993, 2
      %v2022 = vsel %vm1691, %v2019, %v2021
      %v2023 = vrot.slane %v1994, 2
      %v2024 = vsel %vm1691, %v2021, %v2023
      %v2025 = vrot.slane %v1995, 2
      %v2026 = vsel %vm1691, %v2023, %v2025
      %v2028 = vsel %vm618, %v1998, 0
      %v2031 = vsel %vm618, %v2000, 0
      %v2034 = vsel %vm618, %v2002, 0
      %v2037 = vsel %vm618, %v2004, 0
      %v2040 = vsel %vm618, %v2006, 0
      %v2043 = vsel %vm618, %v2008, 0
      %v2046 = vsel %vm618, %v2010, 0
      %v2049 = vsel %vm618, %v2012, 0
      %v2052 = vsel %vm618, %v2014, 0
      %v2055 = vsel %vm618, %v2016, 0
      %v2058 = vsel %vm618, %v2018, 0
      %v2061 = vsel %vm618, %v2020, 0
      %v2064 = vsel %vm618, %v2022, 0
      %v2067 = vsel %vm618, %v2024, 0
      %v2070 = vsel %vm618, %v2026, 0
      %v2073 = vsel %vm664, %v1917, 0
      %2075 = vmatpush.bf16.msra.mxu0 0
      %2076 = vmatpush.bf16.msra.mxu0 0
      %2077 = vmatpush.bf16.msra.mxu0 0
      %2078 = vmatpush.bf16.msra.mxu0 0
      %2079 = vmatpush.bf16.msra.mxu0 0
      %2080 = vmatpush.bf16.msra.mxu0 0
      %2081 = vmatpush.bf16.msra.mxu0 0
      %2082 = vmatpush.bf16.msra.mxu0 %v2073
      %2083 = vmatmul.bf16.gmra.mxu0 %v2028
      %v2084 = vpop.f32.mrf.mxu0
      %v2085 = vadd.f32 0.0, %v2084
      %v2086 = vpop.f32.mrf.mxu0
      %v2087 = vadd.f32 0.0, %v2086
      %2088 = vmatmul.bf16.gmra.mxu0 %v2031
      %v2089 = vpop.f32.mrf.mxu0
      %v2090 = vadd.f32 0.0, %v2089
      %v2091 = vpop.f32.mrf.mxu0
      %v2092 = vadd.f32 0.0, %v2091
      %2093 = vmatmul.bf16.gmra.mxu0 %v2034
      %v2094 = vpop.f32.mrf.mxu0
      %v2095 = vadd.f32 0.0, %v2094
      %v2096 = vpop.f32.mrf.mxu0
      %v2097 = vadd.f32 0.0, %v2096
      %2098 = vmatmul.bf16.gmra.mxu0 %v2037
      %v2099 = vpop.f32.mrf.mxu0
      %v2100 = vadd.f32 0.0, %v2099
      %v2101 = vpop.f32.mrf.mxu0
      %v2102 = vadd.f32 0.0, %v2101
      %2103 = vmatmul.bf16.gmra.mxu0 %v2040
      %v2104 = vpop.f32.mrf.mxu0
      %v2105 = vadd.f32 0.0, %v2104
      %v2106 = vpop.f32.mrf.mxu0
      %v2107 = vadd.f32 0.0, %v2106
      %2108 = vmatmul.bf16.gmra.mxu0 %v2043
      %v2109 = vpop.f32.mrf.mxu0
      %v2110 = vadd.f32 0.0, %v2109
      %v2111 = vpop.f32.mrf.mxu0
      %v2112 = vadd.f32 0.0, %v2111
      %2113 = vmatmul.bf16.gmra.mxu0 %v2046
      %v2114 = vpop.f32.mrf.mxu0
      %v2115 = vadd.f32 0.0, %v2114
      %v2116 = vpop.f32.mrf.mxu0
      %v2117 = vadd.f32 0.0, %v2116
      %2118 = vmatmul.bf16.gmra.mxu0 %v2049
      %v2119 = vpop.f32.mrf.mxu0
      %v2120 = vadd.f32 0.0, %v2119
      %v2121 = vpop.f32.mrf.mxu0
      %v2122 = vadd.f32 0.0, %v2121
      %2123 = vmatmul.bf16.gmra.mxu0 %v2052
      %v2124 = vpop.f32.mrf.mxu0
      %v2125 = vadd.f32 0.0, %v2124
      %v2126 = vpop.f32.mrf.mxu0
      %v2127 = vadd.f32 0.0, %v2126
      %2128 = vmatmul.bf16.gmra.mxu0 %v2055
      %v2129 = vpop.f32.mrf.mxu0
      %v2130 = vadd.f32 0.0, %v2129
      %v2131 = vpop.f32.mrf.mxu0
      %v2132 = vadd.f32 0.0, %v2131
      %2133 = vmatmul.bf16.gmra.mxu0 %v2058
      %v2134 = vpop.f32.mrf.mxu0
      %v2135 = vadd.f32 0.0, %v2134
      %v2136 = vpop.f32.mrf.mxu0
      %v2137 = vadd.f32 0.0, %v2136
      %2138 = vmatmul.bf16.gmra.mxu0 %v2061
      %v2139 = vpop.f32.mrf.mxu0
      %v2140 = vadd.f32 0.0, %v2139
      %v2141 = vpop.f32.mrf.mxu0
      %v2142 = vadd.f32 0.0, %v2141
      %2143 = vmatmul.bf16.gmra.mxu0 %v2064
      %v2144 = vpop.f32.mrf.mxu0
      %v2145 = vadd.f32 0.0, %v2144
      %v2146 = vpop.f32.mrf.mxu0
      %v2147 = vadd.f32 0.0, %v2146
      %2148 = vmatmul.bf16.gmra.mxu0 %v2067
      %v2149 = vpop.f32.mrf.mxu0
      %v2150 = vadd.f32 0.0, %v2149
      %v2151 = vpop.f32.mrf.mxu0
      %v2152 = vadd.f32 0.0, %v2151
      %2153 = vmatmul.bf16.gmra.mxu0 %v2070
      %v2154 = vpop.f32.mrf.mxu0
      %v2155 = vadd.f32 0.0, %v2154
      %v2156 = vpop.f32.mrf.mxu0
      %v2157 = vadd.f32 0.0, %v2156
      %2158 = vdwg.mxu0
      %v2159 = vadd.f32 %v1855, %v2085
      %v2160 = vadd.f32 %v1856, %v2087
      %v2161 = vadd.f32 %v1857, %v2090
      %v2162 = vadd.f32 %v1858, %v2092
      %v2163 = vadd.f32 %v1859, %v2095
      %v2164 = vadd.f32 %v1860, %v2097
      %v2165 = vadd.f32 %v1861, %v2100
      %v2166 = vadd.f32 %v1862, %v2102
      %v2167 = vadd.f32 %v1863, %v2105
      %v2168 = vadd.f32 %v1864, %v2107
      %v2169 = vadd.f32 %v1865, %v2110
      %v2170 = vadd.f32 %v1866, %v2112
      %v2171 = vadd.f32 %v1867, %v2115
      %v2172 = vadd.f32 %v1868, %v2117
      %v2173 = vadd.f32 %v1869, %v2120
      %v2174 = vadd.f32 %v1870, %v2122
      %v2175 = vadd.f32 %v1871, %v2125
      %v2176 = vadd.f32 %v1872, %v2127
      %v2177 = vadd.f32 %v1873, %v2130
      %v2178 = vadd.f32 %v1874, %v2132
      %v2179 = vadd.f32 %v1875, %v2135
      %v2180 = vadd.f32 %v1876, %v2137
      %v2181 = vadd.f32 %v1877, %v2140
      %v2182 = vadd.f32 %v1878, %v2142
      %v2183 = vadd.f32 %v1879, %v2145
      %v2184 = vadd.f32 %v1880, %v2147
      %v2185 = vadd.f32 %v1881, %v2150
      %v2186 = vadd.f32 %v1882, %v2152
      %v2187 = vadd.f32 %v1883, %v2155
      %v2188 = vadd.f32 %v1884, %v2157
      %v2189 = vld [vmem:[#allocation2 + $0x88] sm:$0x7]
      %s2190 = scalar_lea.vmem %s2, 14
      %v2191 = vld [vmem:[%s2190] sm:$0x3]
      %v2193 = vunpack.c.l.b16 %v2189
      %v2194 = vpack.c.b16 %v2193, %v2193
      %vm2195 = vsmask.f32 5376
      %v2197 = vshrl.u32 %v1980, 16
      %v2199 = vrot.slane %v2197, 2
      %v2200 = vshll.u32 %v1980, 16
      %v2202 = vrot.slane %v2200, 3
      %v2203 = vor.u32 %v2199, %v2202
      %v2205 = vshrl.u32 %v1981, 16
      %v2207 = vrot.slane %v2205, 2
      %v2208 = vshll.u32 %v1981, 16
      %v2210 = vrot.slane %v2208, 3
      %v2211 = vor.u32 %v2207, %v2210
      %v2212 = vsel %vm2195, %v2203, %v2211
      %v2214 = vshrl.u32 %v1982, 16
      %v2216 = vrot.slane %v2214, 2
      %v2217 = vshll.u32 %v1982, 16
      %v2219 = vrot.slane %v2217, 3
      %v2220 = vor.u32 %v2216, %v2219
      %v2221 = vsel %vm2195, %v2211, %v2220
      %v2223 = vshrl.u32 %v1983, 16
      %v2225 = vrot.slane %v2223, 2
      %v2226 = vshll.u32 %v1983, 16
      %v2228 = vrot.slane %v2226, 3
      %v2229 = vor.u32 %v2225, %v2228
      %v2230 = vsel %vm2195, %v2220, %v2229
      %v2232 = vshrl.u32 %v1984, 16
      %v2234 = vrot.slane %v2232, 2
      %v2235 = vshll.u32 %v1984, 16
      %v2237 = vrot.slane %v2235, 3
      %v2238 = vor.u32 %v2234, %v2237
      %v2239 = vsel %vm2195, %v2229, %v2238
      %v2241 = vshrl.u32 %v1985, 16
      %v2243 = vrot.slane %v2241, 2
      %v2244 = vshll.u32 %v1985, 16
      %v2246 = vrot.slane %v2244, 3
      %v2247 = vor.u32 %v2243, %v2246
      %v2248 = vsel %vm2195, %v2238, %v2247
      %v2250 = vshrl.u32 %v1986, 16
      %v2252 = vrot.slane %v2250, 2
      %v2253 = vshll.u32 %v1986, 16
      %v2255 = vrot.slane %v2253, 3
      %v2256 = vor.u32 %v2252, %v2255
      %v2257 = vsel %vm2195, %v2247, %v2256
      %v2259 = vshrl.u32 %v1987, 16
      %v2261 = vrot.slane %v2259, 2
      %v2262 = vshll.u32 %v1987, 16
      %v2264 = vrot.slane %v2262, 3
      %v2265 = vor.u32 %v2261, %v2264
      %v2266 = vsel %vm2195, %v2256, %v2265
      %v2268 = vshrl.u32 %v1988, 16
      %v2270 = vrot.slane %v2268, 2
      %v2271 = vshll.u32 %v1988, 16
      %v2273 = vrot.slane %v2271, 3
      %v2274 = vor.u32 %v2270, %v2273
      %v2275 = vsel %vm2195, %v2265, %v2274
      %v2277 = vshrl.u32 %v1989, 16
      %v2279 = vrot.slane %v2277, 2
      %v2280 = vshll.u32 %v1989, 16
      %v2282 = vrot.slane %v2280, 3
      %v2283 = vor.u32 %v2279, %v2282
      %v2284 = vsel %vm2195, %v2274, %v2283
      %v2286 = vshrl.u32 %v1990, 16
      %v2288 = vrot.slane %v2286, 2
      %v2289 = vshll.u32 %v1990, 16
      %v2291 = vrot.slane %v2289, 3
      %v2292 = vor.u32 %v2288, %v2291
      %v2293 = vsel %vm2195, %v2283, %v2292
      %v2295 = vshrl.u32 %v1991, 16
      %v2297 = vrot.slane %v2295, 2
      %v2298 = vshll.u32 %v1991, 16
      %v2300 = vrot.slane %v2298, 3
      %v2301 = vor.u32 %v2297, %v2300
      %v2302 = vsel %vm2195, %v2292, %v2301
      %v2304 = vshrl.u32 %v1992, 16
      %v2306 = vrot.slane %v2304, 2
      %v2307 = vshll.u32 %v1992, 16
      %v2309 = vrot.slane %v2307, 3
      %v2310 = vor.u32 %v2306, %v2309
      %v2311 = vsel %vm2195, %v2301, %v2310
      %v2313 = vshrl.u32 %v1993, 16
      %v2315 = vrot.slane %v2313, 2
      %v2316 = vshll.u32 %v1993, 16
      %v2318 = vrot.slane %v2316, 3
      %v2319 = vor.u32 %v2315, %v2318
      %v2320 = vsel %vm2195, %v2310, %v2319
      %v2322 = vshrl.u32 %v1994, 16
      %v2324 = vrot.slane %v2322, 2
      %v2325 = vshll.u32 %v1994, 16
      %v2327 = vrot.slane %v2325, 3
      %v2328 = vor.u32 %v2324, %v2327
      %v2329 = vsel %vm2195, %v2319, %v2328
      %v2331 = vshrl.u32 %v2194, 16
      %v2333 = vrot.slane %v2331, 2
      %v2334 = vshll.u32 %v2194, 16
      %v2336 = vrot.slane %v2334, 3
      %v2337 = vor.u32 %v2333, %v2336
      %v2338 = vsel %vm2195, %v2328, %v2337
      %v2340 = vsel %vm618, %v2212, 0
      %v2343 = vsel %vm618, %v2221, 0
      %v2346 = vsel %vm618, %v2230, 0
      %v2349 = vsel %vm618, %v2239, 0
      %v2352 = vsel %vm618, %v2248, 0
      %v2355 = vsel %vm618, %v2257, 0
      %v2358 = vsel %vm618, %v2266, 0
      %v2361 = vsel %vm618, %v2275, 0
      %v2364 = vsel %vm618, %v2284, 0
      %v2367 = vsel %vm618, %v2293, 0
      %v2370 = vsel %vm618, %v2302, 0
      %v2373 = vsel %vm618, %v2311, 0
      %v2376 = vsel %vm618, %v2320, 0
      %v2379 = vsel %vm618, %v2329, 0
      %v2382 = vsel %vm618, %v2338, 0
      %v2385 = vsel %vm664, %v2191, 0
      %2387 = vmatpush.bf16.msra.mxu0 0
      %2388 = vmatpush.bf16.msra.mxu0 0
      %2389 = vmatpush.bf16.msra.mxu0 0
      %2390 = vmatpush.bf16.msra.mxu0 0
      %2391 = vmatpush.bf16.msra.mxu0 0
      %2392 = vmatpush.bf16.msra.mxu0 0
      %2393 = vmatpush.bf16.msra.mxu0 0
      %2394 = vmatpush.bf16.msra.mxu0 %v2385
      %2395 = vmatmul.bf16.gmra.mxu0 %v2340
      %v2396 = vpop.f32.mrf.mxu0
      %v2397 = vadd.f32 0.0, %v2396
      %v2398 = vpop.f32.mrf.mxu0
      %v2399 = vadd.f32 0.0, %v2398
      %2400 = vmatmul.bf16.gmra.mxu0 %v2343
      %v2401 = vpop.f32.mrf.mxu0
      %v2402 = vadd.f32 0.0, %v2401
      %v2403 = vpop.f32.mrf.mxu0
      %v2404 = vadd.f32 0.0, %v2403
      %2405 = vmatmul.bf16.gmra.mxu0 %v2346
      %v2406 = vpop.f32.mrf.mxu0
      %v2407 = vadd.f32 0.0, %v2406
      %v2408 = vpop.f32.mrf.mxu0
      %v2409 = vadd.f32 0.0, %v2408
      %2410 = vmatmul.bf16.gmra.mxu0 %v2349
      %v2411 = vpop.f32.mrf.mxu0
      %v2412 = vadd.f32 0.0, %v2411
      %v2413 = vpop.f32.mrf.mxu0
      %v2414 = vadd.f32 0.0, %v2413
      %2415 = vmatmul.bf16.gmra.mxu0 %v2352
      %v2416 = vpop.f32.mrf.mxu0
      %v2417 = vadd.f32 0.0, %v2416
      %v2418 = vpop.f32.mrf.mxu0
      %v2419 = vadd.f32 0.0, %v2418
      %2420 = vmatmul.bf16.gmra.mxu0 %v2355
      %v2421 = vpop.f32.mrf.mxu0
      %v2422 = vadd.f32 0.0, %v2421
      %v2423 = vpop.f32.mrf.mxu0
      %v2424 = vadd.f32 0.0, %v2423
      %2425 = vmatmul.bf16.gmra.mxu0 %v2358
      %v2426 = vpop.f32.mrf.mxu0
      %v2427 = vadd.f32 0.0, %v2426
      %v2428 = vpop.f32.mrf.mxu0
      %v2429 = vadd.f32 0.0, %v2428
      %2430 = vmatmul.bf16.gmra.mxu0 %v2361
      %v2431 = vpop.f32.mrf.mxu0
      %v2432 = vadd.f32 0.0, %v2431
      %v2433 = vpop.f32.mrf.mxu0
      %v2434 = vadd.f32 0.0, %v2433
      %2435 = vmatmul.bf16.gmra.mxu0 %v2364
      %v2436 = vpop.f32.mrf.mxu0
      %v2437 = vadd.f32 0.0, %v2436
      %v2438 = vpop.f32.mrf.mxu0
      %v2439 = vadd.f32 0.0, %v2438
      %2440 = vmatmul.bf16.gmra.mxu0 %v2367
      %v2441 = vpop.f32.mrf.mxu0
      %v2442 = vadd.f32 0.0, %v2441
      %v2443 = vpop.f32.mrf.mxu0
      %v2444 = vadd.f32 0.0, %v2443
      %2445 = vmatmul.bf16.gmra.mxu0 %v2370
      %v2446 = vpop.f32.mrf.mxu0
      %v2447 = vadd.f32 0.0, %v2446
      %v2448 = vpop.f32.mrf.mxu0
      %v2449 = vadd.f32 0.0, %v2448
      %2450 = vmatmul.bf16.gmra.mxu0 %v2373
      %v2451 = vpop.f32.mrf.mxu0
      %v2452 = vadd.f32 0.0, %v2451
      %v2453 = vpop.f32.mrf.mxu0
      %v2454 = vadd.f32 0.0, %v2453
      %2455 = vmatmul.bf16.gmra.mxu0 %v2376
      %v2456 = vpop.f32.mrf.mxu0
      %v2457 = vadd.f32 0.0, %v2456
      %v2458 = vpop.f32.mrf.mxu0
      %v2459 = vadd.f32 0.0, %v2458
      %2460 = vmatmul.bf16.gmra.mxu0 %v2379
      %v2461 = vpop.f32.mrf.mxu0
      %v2462 = vadd.f32 0.0, %v2461
      %v2463 = vpop.f32.mrf.mxu0
      %v2464 = vadd.f32 0.0, %v2463
      %2465 = vmatmul.bf16.gmra.mxu0 %v2382
      %v2466 = vpop.f32.mrf.mxu0
      %v2467 = vadd.f32 0.0, %v2466
      %v2468 = vpop.f32.mrf.mxu0
      %v2469 = vadd.f32 0.0, %v2468
      %2470 = vdwg.mxu0
      %v2471 = vadd.f32 %v2159, %v2397
      %v2472 = vadd.f32 %v2160, %v2399
      %v2473 = vadd.f32 %v2161, %v2402
      %v2474 = vadd.f32 %v2162, %v2404
      %v2475 = vadd.f32 %v2163, %v2407
      %v2476 = vadd.f32 %v2164, %v2409
      %v2477 = vadd.f32 %v2165, %v2412
      %v2478 = vadd.f32 %v2166, %v2414
      %v2479 = vadd.f32 %v2167, %v2417
      %v2480 = vadd.f32 %v2168, %v2419
      %v2481 = vadd.f32 %v2169, %v2422
      %v2482 = vadd.f32 %v2170, %v2424
      %v2483 = vadd.f32 %v2171, %v2427
      %v2484 = vadd.f32 %v2172, %v2429
      %v2485 = vadd.f32 %v2173, %v2432
      %v2486 = vadd.f32 %v2174, %v2434
      %v2487 = vadd.f32 %v2175, %v2437
      %v2488 = vadd.f32 %v2176, %v2439
      %v2489 = vadd.f32 %v2177, %v2442
      %v2490 = vadd.f32 %v2178, %v2444
      %v2491 = vadd.f32 %v2179, %v2447
      %v2492 = vadd.f32 %v2180, %v2449
      %v2493 = vadd.f32 %v2181, %v2452
      %v2494 = vadd.f32 %v2182, %v2454
      %v2495 = vadd.f32 %v2183, %v2457
      %v2496 = vadd.f32 %v2184, %v2459
      %v2497 = vadd.f32 %v2185, %v2462
      %v2498 = vadd.f32 %v2186, %v2464
      %v2499 = vadd.f32 %v2187, %v2467
      %v2500 = vadd.f32 %v2188, %v2469
      %v2501 = vld [vmem:[#allocation2 + $0x10] sm:$0x8]
      %s2502 = scalar_lea.vmem %s2, 16
      %v2503 = vld [vmem:[%s2502] sm:$0x3]
      %v2505 = vunpack.c.l.b16 %v2501
      %v2506 = vpack.c.b16 %v1950, %v2505
      %vm2507 = vcmask 1044480
      %v2508 = vrot.slane %v2506, 3
      %v2509 = vrot.slane %v1981, 3
      %v2510 = vsel %vm2507, %v2508, %v2509
      %v2511 = vrot.slane %v1982, 3
      %v2512 = vsel %vm2507, %v2509, %v2511
      %v2513 = vrot.slane %v1983, 3
      %v2514 = vsel %vm2507, %v2511, %v2513
      %v2515 = vrot.slane %v1984, 3
      %v2516 = vsel %vm2507, %v2513, %v2515
      %v2517 = vrot.slane %v1985, 3
      %v2518 = vsel %vm2507, %v2515, %v2517
      %v2519 = vrot.slane %v1986, 3
      %v2520 = vsel %vm2507, %v2517, %v2519
      %v2521 = vrot.slane %v1987, 3
      %v2522 = vsel %vm2507, %v2519, %v2521
      %v2523 = vrot.slane %v1988, 3
      %v2524 = vsel %vm2507, %v2521, %v2523
      %v2525 = vrot.slane %v1989, 3
      %v2526 = vsel %vm2507, %v2523, %v2525
      %v2527 = vrot.slane %v1990, 3
      %v2528 = vsel %vm2507, %v2525, %v2527
      %v2529 = vrot.slane %v1991, 3
      %v2530 = vsel %vm2507, %v2527, %v2529
      %v2531 = vrot.slane %v1992, 3
      %v2532 = vsel %vm2507, %v2529, %v2531
      %v2533 = vrot.slane %v1993, 3
      %v2534 = vsel %vm2507, %v2531, %v2533
      %v2535 = vrot.slane %v1994, 3
      %v2536 = vsel %vm2507, %v2533, %v2535
      %v2537 = vrot.slane %v2194, 3
      %v2538 = vsel %vm2507, %v2535, %v2537
      %v2540 = vsel %vm618, %v2510, 0
      %v2543 = vsel %vm618, %v2512, 0
      %v2546 = vsel %vm618, %v2514, 0
      %v2549 = vsel %vm618, %v2516, 0
      %v2552 = vsel %vm618, %v2518, 0
      %v2555 = vsel %vm618, %v2520, 0
      %v2558 = vsel %vm618, %v2522, 0
      %v2561 = vsel %vm618, %v2524, 0
      %v2564 = vsel %vm618, %v2526, 0
      %v2567 = vsel %vm618, %v2528, 0
      %v2570 = vsel %vm618, %v2530, 0
      %v2573 = vsel %vm618, %v2532, 0
      %v2576 = vsel %vm618, %v2534, 0
      %v2579 = vsel %vm618, %v2536, 0
      %v2582 = vsel %vm618, %v2538, 0
      %v2585 = vsel %vm664, %v2503, 0
      %2587 = vmatpush.bf16.msra.mxu0 0
      %2588 = vmatpush.bf16.msra.mxu0 0
      %2589 = vmatpush.bf16.msra.mxu0 0
      %2590 = vmatpush.bf16.msra.mxu0 0
      %2591 = vmatpush.bf16.msra.mxu0 0
      %2592 = vmatpush.bf16.msra.mxu0 0
      %2593 = vmatpush.bf16.msra.mxu0 0
      %2594 = vmatpush.bf16.msra.mxu0 %v2585
      %2595 = vmatmul.bf16.gmra.mxu0 %v2540
      %v2596 = vpop.f32.mrf.mxu0
      %v2597 = vadd.f32 0.0, %v2596
      %v2598 = vpop.f32.mrf.mxu0
      %v2599 = vadd.f32 0.0, %v2598
      %2600 = vmatmul.bf16.gmra.mxu0 %v2543
      %v2601 = vpop.f32.mrf.mxu0
      %v2602 = vadd.f32 0.0, %v2601
      %v2603 = vpop.f32.mrf.mxu0
      %v2604 = vadd.f32 0.0, %v2603
      %2605 = vmatmul.bf16.gmra.mxu0 %v2546
      %v2606 = vpop.f32.mrf.mxu0
      %v2607 = vadd.f32 0.0, %v2606
      %v2608 = vpop.f32.mrf.mxu0
      %v2609 = vadd.f32 0.0, %v2608
      %2610 = vmatmul.bf16.gmra.mxu0 %v2549
      %v2611 = vpop.f32.mrf.mxu0
      %v2612 = vadd.f32 0.0, %v2611
      %v2613 = vpop.f32.mrf.mxu0
      %v2614 = vadd.f32 0.0, %v2613
      %2615 = vmatmul.bf16.gmra.mxu0 %v2552
      %v2616 = vpop.f32.mrf.mxu0
      %v2617 = vadd.f32 0.0, %v2616
      %v2618 = vpop.f32.mrf.mxu0
      %v2619 = vadd.f32 0.0, %v2618
      %2620 = vmatmul.bf16.gmra.mxu0 %v2555
      %v2621 = vpop.f32.mrf.mxu0
      %v2622 = vadd.f32 0.0, %v2621
      %v2623 = vpop.f32.mrf.mxu0
      %v2624 = vadd.f32 0.0, %v2623
      %2625 = vmatmul.bf16.gmra.mxu0 %v2558
      %v2626 = vpop.f32.mrf.mxu0
      %v2627 = vadd.f32 0.0, %v2626
      %v2628 = vpop.f32.mrf.mxu0
      %v2629 = vadd.f32 0.0, %v2628
      %2630 = vmatmul.bf16.gmra.mxu0 %v2561
      %v2631 = vpop.f32.mrf.mxu0
      %v2632 = vadd.f32 0.0, %v2631
      %v2633 = vpop.f32.mrf.mxu0
      %v2634 = vadd.f32 0.0, %v2633
      %2635 = vmatmul.bf16.gmra.mxu0 %v2564
      %v2636 = vpop.f32.mrf.mxu0
      %v2637 = vadd.f32 0.0, %v2636
      %v2638 = vpop.f32.mrf.mxu0
      %v2639 = vadd.f32 0.0, %v2638
      %2640 = vmatmul.bf16.gmra.mxu0 %v2567
      %v2641 = vpop.f32.mrf.mxu0
      %v2642 = vadd.f32 0.0, %v2641
      %v2643 = vpop.f32.mrf.mxu0
      %v2644 = vadd.f32 0.0, %v2643
      %2645 = vmatmul.bf16.gmra.mxu0 %v2570
      %v2646 = vpop.f32.mrf.mxu0
      %v2647 = vadd.f32 0.0, %v2646
      %v2648 = vpop.f32.mrf.mxu0
      %v2649 = vadd.f32 0.0, %v2648
      %2650 = vmatmul.bf16.gmra.mxu0 %v2573
      %v2651 = vpop.f32.mrf.mxu0
      %v2652 = vadd.f32 0.0, %v2651
      %v2653 = vpop.f32.mrf.mxu0
      %v2654 = vadd.f32 0.0, %v2653
      %2655 = vmatmul.bf16.gmra.mxu0 %v2576
      %v2656 = vpop.f32.mrf.mxu0
      %v2657 = vadd.f32 0.0, %v2656
      %v2658 = vpop.f32.mrf.mxu0
      %v2659 = vadd.f32 0.0, %v2658
      %2660 = vmatmul.bf16.gmra.mxu0 %v2579
      %v2661 = vpop.f32.mrf.mxu0
      %v2662 = vadd.f32 0.0, %v2661
      %v2663 = vpop.f32.mrf.mxu0
      %v2664 = vadd.f32 0.0, %v2663
      %2665 = vmatmul.bf16.gmra.mxu0 %v2582
      %v2666 = vpop.f32.mrf.mxu0
      %v2667 = vadd.f32 0.0, %v2666
      %v2668 = vpop.f32.mrf.mxu0
      %v2669 = vadd.f32 0.0, %v2668
      %2670 = vdwg.mxu0
      %v2671 = vadd.f32 %v2471, %v2597
      %v2672 = vadd.f32 %v2472, %v2599
      %v2673 = vadd.f32 %v2473, %v2602
      %v2674 = vadd.f32 %v2474, %v2604
      %v2675 = vadd.f32 %v2475, %v2607
      %v2676 = vadd.f32 %v2476, %v2609
      %v2677 = vadd.f32 %v2477, %v2612
      %v2678 = vadd.f32 %v2478, %v2614
      %v2679 = vadd.f32 %v2479, %v2617
      %v2680 = vadd.f32 %v2480, %v2619
      %v2681 = vadd.f32 %v2481, %v2622
      %v2682 = vadd.f32 %v2482, %v2624
      %v2683 = vadd.f32 %v2483, %v2627
      %v2684 = vadd.f32 %v2484, %v2629
      %v2685 = vadd.f32 %v2485, %v2632
      %v2686 = vadd.f32 %v2486, %v2634
      %v2687 = vadd.f32 %v2487, %v2637
      %v2688 = vadd.f32 %v2488, %v2639
      %v2689 = vadd.f32 %v2489, %v2642
      %v2690 = vadd.f32 %v2490, %v2644
      %v2691 = vadd.f32 %v2491, %v2647
      %v2692 = vadd.f32 %v2492, %v2649
      %v2693 = vadd.f32 %v2493, %v2652
      %v2694 = vadd.f32 %v2494, %v2654
      %v2695 = vadd.f32 %v2495, %v2657
      %v2696 = vadd.f32 %v2496, %v2659
      %v2697 = vadd.f32 %v2497, %v2662
      %v2698 = vadd.f32 %v2498, %v2664
      %v2699 = vadd.f32 %v2499, %v2667
      %v2700 = vadd.f32 %v2500, %v2669
      %v2701 = vld [vmem:[%s3] sm:$0x1]
      %v2703 = vperm.slane %v2701, 0
      %v2705 = vadd.f32 %v2671, %v2703
      %v2706 = vadd.f32 %v2672, %v2703
      %v2707 = vadd.f32 %v2673, %v2703
      %v2708 = vadd.f32 %v2674, %v2703
      %v2709 = vadd.f32 %v2675, %v2703
      %v2710 = vadd.f32 %v2676, %v2703
      %v2711 = vadd.f32 %v2677, %v2703
      %v2712 = vadd.f32 %v2678, %v2703
      %v2713 = vadd.f32 %v2679, %v2703
      %v2714 = vadd.f32 %v2680, %v2703
      %v2715 = vadd.f32 %v2681, %v2703
      %v2716 = vadd.f32 %v2682, %v2703
      %v2717 = vadd.f32 %v2683, %v2703
      %v2718 = vadd.f32 %v2684, %v2703
      %v2719 = vadd.f32 %v2685, %v2703
      %v2720 = vadd.f32 %v2686, %v2703
      %v2721 = vadd.f32 %v2687, %v2703
      %v2722 = vadd.f32 %v2688, %v2703
      %v2723 = vadd.f32 %v2689, %v2703
      %v2724 = vadd.f32 %v2690, %v2703
      %v2725 = vadd.f32 %v2691, %v2703
      %v2726 = vadd.f32 %v2692, %v2703
      %v2727 = vadd.f32 %v2693, %v2703
      %v2728 = vadd.f32 %v2694, %v2703
      %v2729 = vadd.f32 %v2695, %v2703
      %v2730 = vadd.f32 %v2696, %v2703
      %v2731 = vadd.f32 %v2697, %v2703
      %v2732 = vadd.f32 %v2698, %v2703
      %v2733 = vadd.f32 %v2699, %v2703
      %v2734 = vadd.f32 %v2700, %v2703
      %v2735 = vmax.f32 %v2705, 0.0
      %v2736 = vmax.f32 %v2706, 0.0
      %v2737 = vmax.f32 %v2707, 0.0
      %v2738 = vmax.f32 %v2708, 0.0
      %v2739 = vmax.f32 %v2709, 0.0
      %v2740 = vmax.f32 %v2710, 0.0
      %v2741 = vmax.f32 %v2711, 0.0
      %v2742 = vmax.f32 %v2712, 0.0
      %v2743 = vmax.f32 %v2713, 0.0
      %v2744 = vmax.f32 %v2714, 0.0
      %v2745 = vmax.f32 %v2715, 0.0
      %v2746 = vmax.f32 %v2716, 0.0
      %v2747 = vmax.f32 %v2717, 0.0
      %v2748 = vmax.f32 %v2718, 0.0
      %v2749 = vmax.f32 %v2719, 0.0
      %v2750 = vmax.f32 %v2720, 0.0
      %v2751 = vmax.f32 %v2721, 0.0
      %v2752 = vmax.f32 %v2722, 0.0
      %v2753 = vmax.f32 %v2723, 0.0
      %v2754 = vmax.f32 %v2724, 0.0
      %v2755 = vmax.f32 %v2725, 0.0
      %v2756 = vmax.f32 %v2726, 0.0
      %v2757 = vmax.f32 %v2727, 0.0
      %v2758 = vmax.f32 %v2728, 0.0
      %v2759 = vmax.f32 %v2729, 0.0
      %v2760 = vmax.f32 %v2730, 0.0
      %v2761 = vmax.f32 %v2731, 0.0
      %v2762 = vmax.f32 %v2732, 0.0
      %v2763 = vmax.f32 %v2733, 0.0
      %v2764 = vmax.f32 %v2734, 0.0
      %v2765 = vpack.c.bf16 %v2735, %v2735
      %v2766 = vpack.c.bf16 %v2736, %v2736
      %v2767 = vpack.c.bf16 %v2737, %v2737
      %v2768 = vpack.c.bf16 %v2738, %v2738
      %v2769 = vpack.c.bf16 %v2739, %v2739
      %v2770 = vpack.c.bf16 %v2740, %v2740
      %v2771 = vpack.c.bf16 %v2741, %v2741
      %v2772 = vpack.c.bf16 %v2742, %v2742
      %v2773 = vpack.c.bf16 %v2743, %v2743
      %v2774 = vpack.c.bf16 %v2744, %v2744
      %v2775 = vpack.c.bf16 %v2745, %v2745
      %v2776 = vpack.c.bf16 %v2746, %v2746
      %v2777 = vpack.c.bf16 %v2747, %v2747
      %v2778 = vpack.c.bf16 %v2748, %v2748
      %v2779 = vpack.c.bf16 %v2749, %v2749
      %v2780 = vpack.c.bf16 %v2750, %v2750
      %v2781 = vpack.c.bf16 %v2751, %v2751
      %v2782 = vpack.c.bf16 %v2752, %v2752
      %v2783 = vpack.c.bf16 %v2753, %v2753
      %v2784 = vpack.c.bf16 %v2754, %v2754
      %v2785 = vpack.c.bf16 %v2755, %v2755
      %v2786 = vpack.c.bf16 %v2756, %v2756
      %v2787 = vpack.c.bf16 %v2757, %v2757
      %v2788 = vpack.c.bf16 %v2758, %v2758
      %v2789 = vpack.c.bf16 %v2759, %v2759
      %v2790 = vpack.c.bf16 %v2760, %v2760
      %v2791 = vpack.c.bf16 %v2761, %v2761
      %v2792 = vpack.c.bf16 %v2762, %v2762
      %v2793 = vpack.c.bf16 %v2763, %v2763
      %v2794 = vpack.c.bf16 %v2764, %v2764
      %2795 = vst [vmem:[%s305] sm:$0xf] %v2765
      %2796 = vst [vmem:[%s305 + $0x4] sm:$0xf] %v2766
      %2797 = vst [vmem:[%s305 + $0x8] sm:$0xf] %v2767
      %2798 = vst [vmem:[%s305 + $0xc] sm:$0xf] %v2768
      %2799 = vst [vmem:[%s305 + $0x10] sm:$0xf] %v2769
      %2800 = vst [vmem:[%s305 + $0x14] sm:$0xf] %v2770
      %2801 = vst [vmem:[%s305 + $0x18] sm:$0xf] %v2771
      %2802 = vst [vmem:[%s305 + $0x1c] sm:$0xf] %v2772
      %2803 = vst [vmem:[%s305 + $0x20] sm:$0xf] %v2773
      %2804 = vst [vmem:[%s305 + $0x24] sm:$0xf] %v2774
      %2805 = vst [vmem:[%s305 + $0x28] sm:$0xf] %v2775
      %2806 = vst [vmem:[%s305 + $0x2c] sm:$0xf] %v2776
      %2807 = vst [vmem:[%s305 + $0x30] sm:$0xf] %v2777
      %2808 = vst [vmem:[%s305 + $0x34] sm:$0xf] %v2778
      %2809 = vst [vmem:[%s305 + $0x38] sm:$0xf] %v2779
      %2810 = vst [vmem:[%s305 + $0x3c] sm:$0xf] %v2780
      %2811 = vst [vmem:[%s305 + $0x40] sm:$0xf] %v2781
      %2812 = vst [vmem:[%s305 + $0x44] sm:$0xf] %v2782
      %2813 = vst [vmem:[%s305 + $0x48] sm:$0xf] %v2783
      %2814 = vst [vmem:[%s305 + $0x4c] sm:$0xf] %v2784
      %2815 = vst [vmem:[%s305 + $0x50] sm:$0xf] %v2785
      %2816 = vst [vmem:[%s305 + $0x54] sm:$0xf] %v2786
      %2817 = vst [vmem:[%s305 + $0x58] sm:$0xf] %v2787
      %2818 = vst [vmem:[%s305 + $0x5c] sm:$0xf] %v2788
      %2819 = vst [vmem:[%s305 + $0x60] sm:$0xf] %v2789
      %2820 = vst [vmem:[%s305 + $0x64] sm:$0xf] %v2790
      %2821 = vst [vmem:[%s305 + $0x68] sm:$0xf] %v2791
      %2822 = vst [vmem:[%s305 + $0x6c] sm:$0xf] %v2792
      %2823 = vst [vmem:[%s305 + $0x70] sm:$0xf] %v2793
      %2824 = vst [vmem:[%s305 + $0x74] sm:$0xf] %v2794
      %s2825 = smul.u32 30, %s20
      %p2826 = scmp.lt.s32.totalorder %s19, 1
      %s2827 = scalar_select %p2826, %s19, 1
      %p2828 = scmp.lt.s32.totalorder %s2825, 59
      %s2829 = scalar_select %p2828, %s2825, 59
      %s2830 = smul.addr %s2827, 60
      %s2831 = sadd.s32 %s2829, %s2830
      %s2832 = smul.addr %s2831, 4
      %s2833 = scalar_lea.vmem %s4, %s2832
      // Predicated region
      $region37: #{residual_block_forward.2} parent=35 // pred_check
        %p2834 = pneg %p149
      $region38: #{residual_block_forward.2} parent=35 // pred_check_branch
        %2836 = sbr.rel (%p2834) target = $region40
      $region39: #{residual_block_forward.2} parent=35 // pred_region
        %s2837 = smul.u32 30, %s20
      $region40: #{residual_block_forward.2} parent=35 // pred_fallthru
        _
    $region36: #{residual_block_forward.2} parent=5 // pred_fallthru
      _
    %p2838 = scmp.le.s32.totalorder 2, %s10
    // Predicated region
    $region41: #{residual_block_forward.2} parent=5 // pred_check
      %p2839 = pneg %p2838
    $region42: #{residual_block_forward.2} parent=5 // pred_check_branch
      %2841 = sbr.rel (%p2839) target = $region44
    $region43: #{residual_block_forward.2} parent=5 // pred_region
      %s2842 = ssub.s32 %s10, 2
      // Predicated region
      $region45: #{residual_block_forward.2} parent=43 // pred_check
        %p2843 = pneg %p155
      $region46: #{residual_block_forward.2} parent=43 // pred_check_branch
        %2845 = sbr.rel (%p2843) target = $region48
      $region47: #{residual_block_forward.2} parent=43 // pred_region
        %s2846 = smul.u32 30, %s22
        %p2847 = scmp.lt.s32.totalorder %s21, 1
        %s2848 = scalar_select %p2847, %s21, 1
        %p2849 = scmp.lt.s32.totalorder %s2846, 59
        %s2850 = scalar_select %p2849, %s2846, 59
        %s2851 = smul.addr %s2848, 60
        %s2852 = sadd.s32 %s2850, %s2851
        %s2853 = smul.addr %s2852, 4
        %s2854 = scalar_lea.vmem %s4, %s2853
      $region48: #{residual_block_forward.2} parent=43 // pred_fallthru
        _
    $region44: #{residual_block_forward.2} parent=5 // pred_fallthru
      _
  $region6: #{residual_block_forward.2} parent=0 // loop_footer
    %s14 = sadd.s32 1, %s10
  $region7: #{residual_block_forward.2} parent=0 // loop_footer_branch
    %9 = sbr.rel target = $region3
  $region8: #{residual_block_forward.2} parent=0 // loop_exit
    _

// kernel: residual_block_forward.3
$region0: #{residual_block_forward.3}
  #allocation0 [shape = 'u32[]', space=smem, size = 0x4, offset = 0x4, fixed_abs, tag = 'smem constant byte address 0x4 - core index']
  #allocation1 [shape = 'u32[72,128]{1,0:T(1,128)}', space=vmem, size = 0x9000, scoped, tag = 'internal scratch']
  #allocation2 [shape = 'bf16[288,8]{1,0:T(8,128)(2,1)}', space=vmem, size = 0x12000, scoped, tag = 'scratch operand']
  %s0 = inlined_call_operand.vmem [shape: bf16[2,528,8], index: 0, kind: input, shape index: {}, may-alias: {0,1}]
  %s1 = inlined_call_operand.vmem [shape: bf16[2,528,8], index: 1, kind: input, shape index: {}, may-alias: {0,1}]
  %s2 = inlined_call_operand.vmem [shape: bf16[9,8,128], index: 2, kind: input, shape index: {}]
  %s3 = inlined_call_operand.vmem [shape: f32[1,128], index: 3, kind: input, shape index: {}]
  %s4 = inlined_call_operand.vmem [shape: bf16[2,480,4], index: 4, kind: input, shape index: {}]
  %s5 = inlined_call_operand.vmem [shape: bf16[4,128], index: 5, kind: input, shape index: {}]
  %s6 = inlined_call_operand.vmem [shape: bf16[2,480,128], index: 6, kind: output, shape index: {}]
  %s7 = sld [smem:[#allocation0]]
  $region57: #{residual_block_forward.3} parent=0
    _
  %s9 = ssub.s32 1, %s7
  %s10 = scalar_select 0, %s9, %s7
  loop: start=0, step=1, limit=6
  $region2: #{residual_block_forward.3} parent=0 // loop_pre_header
    _
  $region3: #{residual_block_forward.3} parent=0 // loop_header
    %s12 = sphi 0, %s16
    %p13 = scmp.ge.s32.totalorder %s12, 6
    %s19 = sphi 0, %s31
    %s20 = sphi 0, %s27
    %s21 = sphi 0, %s19
    %s22 = sphi 0, %s20
    %s23 = sphi 0, %s21
    %s24 = sphi 0, %s22
    %s36 = sphi 0, %s38
    %s39 = sphi 0, %s36
    %s40 = sphi 0, %s39
    %s56 = sphi 0, %s40
    %s68 = sphi 0, %s70
    %s71 = sphi 0, %s68
    %s72 = sphi 0, %s71
    %s88 = sphi 0, %s72
    %s92 = sphi 0, %s92
    %s94 = sphi 0, %s92
    %s95 = sphi 0, %s94
    %s109 = sphi 0, %s95
    %s113 = sphi 0, %s113
    %s115 = sphi 0, %s113
    %s116 = sphi 0, %s115
    %s130 = sphi 0, %s116
    %s138 = sphi 0, %s140
    %s141 = sphi 0, %s138
    %s142 = sphi 0, %s141
    %s158 = sphi 0, %s142
    %s162 = sphi 0, %s162
    %s164 = sphi 0, %s162
    %s165 = sphi 0, %s164
    %s179 = sphi 0, %s165
    %s187 = sphi 0, %s189
    %s190 = sphi 0, %s187
    %s191 = sphi 0, %s190
    %s207 = sphi 0, %s191
  $region4: #{residual_block_forward.3} parent=0 // loop_header_branch
    %15 = sbr.rel (%p13) target = $region8
  $region5: #{residual_block_forward.3} parent=0 // loop_body
    %s17 = ssub.s32 %s12, 1
    %s18 = ssub.s32 %s12, 2
    %s25 = sadd.s32 1, %s20
    %p26 = scmp.ge.s32.totalorder %s25, 2
    %s27 = scalar_select %p26, 0, %s25
    %s28 = sadd.s32 1, %s19
    %s29 = scalar_select %p26, %s28, %s19
    %p30 = scmp.ge.s32.totalorder %s29, 2
    %s31 = scalar_select %p30, 0, %s29
    %s32 = ssub.s32 %s19, %s31
    %s33 = ssub.s32 %s20, %s27
    %s34 = sor.u32 %s32, %s33
    %p35 = scmp.eq.s32.totalorder %s34, 0
    %s37 = sadd.s32 %s36, 1
    %s38 = scalar_select %p35, %s36, %s37
    %p41 = pneg %p35
    %p42 = scmp.eq.s32.totalorder %s12, 3
    %p43 = por %p41, %p42
    %p44 = scmp.ne.s32.totalorder %s36, %s39
    %p45 = scmp.eq.s32.totalorder %s12, 0
    %p46 = por %p44, %p45
    %p47 = scmp.ne.s32.totalorder %s36, %s39
    %p48 = scmp.eq.s32.totalorder %s17, 3
    %p49 = por %p47, %p48
    %p50 = scmp.ne.s32.totalorder %s39, %s40
    %p51 = scmp.eq.s32.totalorder %s17, 0
    %p52 = por %p50, %p51
    %p53 = scmp.ne.s32.totalorder %s39, %s40
    %p54 = scmp.eq.s32.totalorder %s18, 3
    %p55 = por %p53, %p54
    %p57 = scmp.ne.s32.totalorder %s40, %s56
    %p58 = scmp.eq.s32.totalorder %s18, 0
    %p59 = por %p57, %p58
    %s60 = sadd.s32 %s20, 1
    %s61 = smul.u32 %s60, 5
    %s62 = sadd.s32 %s27, 1
    %s63 = smul.u32 %s62, 5
    %s64 = ssub.s32 %s19, %s31
    %s65 = ssub.s32 %s61, %s63
    %s66 = sor.u32 %s64, %s65
    %p67 = scmp.eq.s32.totalorder %s66, 0
    %s69 = sadd.s32 %s68, 1
    %s70 = scalar_select %p67, %s68, %s69
    %p73 = pneg %p67
    %p74 = scmp.eq.s32.totalorder %s12, 3
    %p75 = por %p73, %p74
    %p76 = scmp.ne.s32.totalorder %s68, %s71
    %p77 = scmp.eq.s32.totalorder %s12, 0
    %p78 = por %p76, %p77
    %p79 = scmp.ne.s32.totalorder %s68, %s71
    %p80 = scmp.eq.s32.totalorder %s17, 3
    %p81 = por %p79, %p80
    %p82 = scmp.ne.s32.totalorder %s71, %s72
    %p83 = scmp.eq.s32.totalorder %s17, 0
    %p84 = por %p82, %p83
    %p85 = scmp.ne.s32.totalorder %s71, %s72
    %p86 = scmp.eq.s32.totalorder %s18, 3
    %p87 = por %p85, %p86
    %p89 = scmp.ne.s32.totalorder %s72, %s88
    %p90 = scmp.eq.s32.totalorder %s18, 0
    %p91 = por %p89, %p90
    %s93 = sadd.s32 %s92, 1
    %p96 = scmp.eq.s32.totalorder %s12, 3
    %p97 = scmp.ne.s32.totalorder %s92, %s94
    %p98 = scmp.eq.s32.totalorder %s12, 0
    %p99 = por %p97, %p98
    %p100 = scmp.ne.s32.totalorder %s92, %s94
    %p101 = scmp.eq.s32.totalorder %s17, 3
    %p102 = por %p100, %p101
    %p103 = scmp.ne.s32.totalorder %s94, %s95
    %p104 = scmp.eq.s32.totalorder %s17, 0
    %p105 = por %p103, %p104
    %p106 = scmp.ne.s32.totalorder %s94, %s95
    %p107 = scmp.eq.s32.totalorder %s18, 3
    %p108 = por %p106, %p107
    %p110 = scmp.ne.s32.totalorder %s95, %s109
    %p111 = scmp.eq.s32.totalorder %s18, 0
    %p112 = por %p110, %p111
    %s114 = sadd.s32 %s113, 1
    %p117 = scmp.eq.s32.totalorder %s12, 3
    %p118 = scmp.ne.s32.totalorder %s113, %s115
    %p119 = scmp.eq.s32.totalorder %s12, 0
    %p120 = por %p118, %p119
    %p121 = scmp.ne.s32.totalorder %s113, %s115
    %p122 = scmp.eq.s32.totalorder %s17, 3
    %p123 = por %p121, %p122
    %p124 = scmp.ne.s32.totalorder %s115, %s116
    %p125 = scmp.eq.s32.totalorder %s17, 0
    %p126 = por %p124, %p125
    %p127 = scmp.ne.s32.totalorder %s115, %s116
    %p128 = scmp.eq.s32.totalorder %s18, 3
    %p129 = por %p127, %p128
    %p131 = scmp.ne.s32.totalorder %s116, %s130
    %p132 = scmp.eq.s32.totalorder %s18, 0
    %p133 = por %p131, %p132
    %s134 = ssub.s32 %s19, %s31
    %s135 = ssub.s32 %s20, %s27
    %s136 = sor.u32 %s134, %s135
    %p137 = scmp.eq.s32.totalorder %s136, 0
    %s139 = sadd.s32 %s138, 1
    %s140 = scalar_select %p137, %s138, %s139
    %p143 = pneg %p137
    %p144 = scmp.eq.s32.totalorder %s12, 3
    %p145 = por %p143, %p144
    %p146 = scmp.ne.s32.totalorder %s138, %s141
    %p147 = scmp.eq.s32.totalorder %s12, 0
    %p148 = por %p146, %p147
    %p149 = scmp.ne.s32.totalorder %s138, %s141
    %p150 = scmp.eq.s32.totalorder %s17, 3
    %p151 = por %p149, %p150
    %p152 = scmp.ne.s32.totalorder %s141, %s142
    %p153 = scmp.eq.s32.totalorder %s17, 0
    %p154 = por %p152, %p153
    %p155 = scmp.ne.s32.totalorder %s141, %s142
    %p156 = scmp.eq.s32.totalorder %s18, 3
    %p157 = por %p155, %p156
    %p159 = scmp.ne.s32.totalorder %s142, %s158
    %p160 = scmp.eq.s32.totalorder %s18, 0
    %p161 = por %p159, %p160
    %s163 = sadd.s32 %s162, 1
    %p166 = scmp.eq.s32.totalorder %s12, 3
    %p167 = scmp.ne.s32.totalorder %s162, %s164
    %p168 = scmp.eq.s32.totalorder %s12, 0
    %p169 = por %p167, %p168
    %p170 = scmp.ne.s32.totalorder %s162, %s164
    %p171 = scmp.eq.s32.totalorder %s17, 3
    %p172 = por %p170, %p171
    %p173 = scmp.ne.s32.totalorder %s164, %s165
    %p174 = scmp.eq.s32.totalorder %s17, 0
    %p175 = por %p173, %p174
    %p176 = scmp.ne.s32.totalorder %s164, %s165
    %p177 = scmp.eq.s32.totalorder %s18, 3
    %p178 = por %p176, %p177
    %p180 = scmp.ne.s32.totalorder %s165, %s179
    %p181 = scmp.eq.s32.totalorder %s18, 0
    %p182 = por %p180, %p181
    %s183 = ssub.s32 %s19, %s31
    %s184 = ssub.s32 %s20, %s27
    %s185 = sor.u32 %s183, %s184
    %p186 = scmp.eq.s32.totalorder %s185, 0
    %s188 = sadd.s32 %s187, 1
    %s189 = scalar_select %p186, %s187, %s188
    %p192 = pneg %p186
    %p193 = scmp.eq.s32.totalorder %s12, 3
    %p194 = por %p192, %p193
    %p195 = scmp.ne.s32.totalorder %s187, %s190
    %p196 = scmp.eq.s32.totalorder %s12, 0
    %p197 = por %p195, %p196
    %p198 = scmp.ne.s32.totalorder %s187, %s190
    %p199 = scmp.eq.s32.totalorder %s17, 3
    %p200 = por %p198, %p199
    %p201 = scmp.ne.s32.totalorder %s190, %s191
    %p202 = scmp.eq.s32.totalorder %s17, 0
    %p203 = por %p201, %p202
    %p204 = scmp.ne.s32.totalorder %s190, %s191
    %p205 = scmp.eq.s32.totalorder %s18, 3
    %p206 = por %p204, %p205
    %p208 = scmp.ne.s32.totalorder %s191, %s207
    %p209 = scmp.eq.s32.totalorder %s18, 0
    %p210 = por %p208, %p209
    %p211 = scmp.le.s32.totalorder 1, %s12
    %p212 = scmp.lt.s32.totalorder %s12, 5
    %p213 = pnand %p211, %p212
    %p214 = pneg %p213
    // Predicated region
    $region9: #{residual_block_forward.3} parent=5 // pred_check
      _
    $region10: #{residual_block_forward.3} parent=5 // pred_check_branch
      %216 = sbr.rel (%p213) target = $region12
    $region11: #{residual_block_forward.3} parent=5 // pred_region
      %s217 = ssub.s32 %s12, 1
      // Predicated region
      $region13: #{residual_block_forward.3} parent=11 // pred_check
        %p218 = pneg %p105
      $region14: #{residual_block_forward.3} parent=11 // pred_check_branch
        %220 = sbr.rel (%p218) target = $region16
      $region15: #{residual_block_forward.3} parent=11 // pred_region
        _
      $region16: #{residual_block_forward.3} parent=11 // pred_fallthru
        _
      // Predicated region
      $region17: #{residual_block_forward.3} parent=11 // pred_check
        %p221 = pneg %p126
      $region18: #{residual_block_forward.3} parent=11 // pred_check_branch
        %223 = sbr.rel (%p221) target = $region20
      $region19: #{residual_block_forward.3} parent=11 // pred_region
        _
      $region20: #{residual_block_forward.3} parent=11 // pred_fallthru
        _
      // Predicated region
      $region21: #{residual_block_forward.3} parent=11 // pred_check
        %p224 = pneg %p175
      $region22: #{residual_block_forward.3} parent=11 // pred_check_branch
        %226 = sbr.rel (%p224) target = $region24
      $region23: #{residual_block_forward.3} parent=11 // pred_region
        _
      $region24: #{residual_block_forward.3} parent=11 // pred_fallthru
        _
    $region12: #{residual_block_forward.3} parent=5 // pred_fallthru
      _
    %p227 = scmp.lt.s32.totalorder %s12, 4
    // Predicated region
    $region25: #{residual_block_forward.3} parent=5 // pred_check
      %p228 = pneg %p227
    $region26: #{residual_block_forward.3} parent=5 // pred_check_branch
      %230 = sbr.rel (%p228) target = $region28
    $region27: #{residual_block_forward.3} parent=5 // pred_region
      // Predicated region
      $region29: #{residual_block_forward.3} parent=27 // pred_check
        %p231 = pneg %p46
      $region30: #{residual_block_forward.3} parent=27 // pred_check_branch
        %233 = sbr.rel (%p231) target = $region32
      $region31: #{residual_block_forward.3} parent=27 // pred_region
        %s234 = smul.u32 30, %s20
        %s235 = ssub.s32 66, %s234
        %p236 = scmp.lt.s32.totalorder %s235, 30
        %s237 = scalar_select %p236, %s235, 30
        %s238 = smul.u32 4, %s237
        %p239 = scmp.lt.s32.totalorder %s19, 1
        %s240 = scalar_select %p239, %s19, 1
        %p241 = scmp.lt.s32.totalorder %s234, 65
        %s242 = scalar_select %p241, %s234, 65
        %s243 = smul.addr %s240, 66
        %s244 = sadd.s32 %s242, %s243
        %s245 = smul.addr %s244, 4
        %s246 = scalar_lea.vmem %s0, %s245
        %s247 = smul.u32 30, %s20
        %s248 = ssub.s32 66, %s247
        %p249 = scmp.lt.s32.totalorder %s248, 30
        %s250 = scalar_select %p249, %s248, 30
        %s251 = smul.u32 4, %s250
      $region32: #{residual_block_forward.3} parent=27 // pred_fallthru
        _
      // Predicated region
      $region33: #{residual_block_forward.3} parent=27 // pred_check
        %p252 = pneg %p78
      $region34: #{residual_block_forward.3} parent=27 // pred_check_branch
        %254 = sbr.rel (%p252) target = $region36
      $region35: #{residual_block_forward.3} parent=27 // pred_region
        %s255 = sadd.s32 %s20, 1
        %s256 = smul.u32 %s255, 5
        %s257 = smul.u32 6, %s256
        %p258 = scmp.lt.s32.totalorder %s19, 1
        %s259 = scalar_select %p258, %s19, 1
        %p260 = scmp.lt.s32.totalorder %s257, 65
        %s261 = scalar_select %p260, %s257, 65
        %s262 = smul.addr %s259, 66
        %s263 = sadd.s32 %s261, %s262
        %s264 = smul.addr %s263, 4
        %s265 = scalar_lea.vmem %s1, %s264
        %s266 = sadd.s32 %s20, 1
        %s267 = smul.u32 %s266, 5
        %s268 = smul.u32 6, %s267
      $region36: #{residual_block_forward.3} parent=27 // pred_fallthru
        _
      // Predicated region
      $region37: #{residual_block_forward.3} parent=27 // pred_check
        %p269 = pneg %p148
      $region38: #{residual_block_forward.3} parent=27 // pred_check_branch
        %271 = sbr.rel (%p269) target = $region40
      $region39: #{residual_block_forward.3} parent=27 // pred_region
        %s272 = smul.u32 30, %s20
        %p273 = scmp.lt.s32.totalorder %s19, 1
        %s274 = scalar_select %p273, %s19, 1
        %p275 = scmp.lt.s32.totalorder %s272, 59
        %s276 = scalar_select %p275, %s272, 59
        %s277 = smul.addr %s274, 60
        %s278 = sadd.s32 %s276, %s277
        %s279 = smul.addr %s278, 4
        %s280 = scalar_lea.vmem %s4, %s279
        %s281 = smul.u32 30, %s20
      $region40: #{residual_block_forward.3} parent=27 // pred_fallthru
        _
    $region28: #{residual_block_forward.3} parent=5 // pred_fallthru
      _
    %p282 = scmp.le.s32.totalorder 1, %s12
    %p283 = scmp.lt.s32.totalorder %s12, 5
    %p284 = pnand %p282, %p283
    %p285 = pneg %p284
    // Predicated region
    $region41: #{residual_block_forward.3} parent=5 // pred_check
      _
    $region42: #{residual_block_forward.3} parent=5 // pred_check_branch
      %287 = sbr.rel (%p284) target = $region44
    $region43: #{residual_block_forward.3} parent=5 // pred_region
      %s288 = ssub.s32 %s12, 1
      %s289 = smul.u32 30, %s22
      %s290 = ssub.s32 66, %s289
      %p291 = scmp.lt.s32.totalorder %s290, 30
      %s292 = scalar_select %p291, %s290, 30
      %s293 = smul.u32 4, %s292
      %p294 = scmp.lt.s32.totalorder %s21, 1
      %s295 = scalar_select %p294, %s21, 1
      %p296 = scmp.lt.s32.totalorder %s289, 65
      %s297 = scalar_select %p296, %s289, 65
      %s298 = smul.addr %s295, 66
      %s299 = sadd.s32 %s297, %s298
      %s300 = smul.addr %s299, 4
      %s301 = scalar_lea.vmem %s0, %s300
      %p302 = pneg %p52
      %p303 = pneg %p49
      %s304 = sadd.s32 %s22, 1
      %s305 = smul.u32 %s304, 5
      %s306 = smul.u32 6, %s305
      %p307 = scmp.lt.s32.totalorder %s21, 1
      %s308 = scalar_select %p307, %s21, 1
      %p309 = scmp.lt.s32.totalorder %s306, 65
      %s310 = scalar_select %p309, %s306, 65
      %s311 = smul.addr %s308, 66
      %s312 = sadd.s32 %s310, %s311
      %s313 = smul.addr %s312, 4
      %s314 = scalar_lea.vmem %s1, %s313
      %p315 = pneg %p84
      %p316 = pneg %p81
      %p317 = pneg %p105
      %p318 = pneg %p102
      %p319 = pneg %p126
      %p320 = pneg %p123
      %s321 = smul.u32 30, %s22
      %p322 = scmp.lt.s32.totalorder %s21, 1
      %s323 = scalar_select %p322, %s21, 1
      %p324 = scmp.lt.s32.totalorder %s321, 59
      %s325 = scalar_select %p324, %s321, 59
      %s326 = smul.addr %s323, 60
      %s327 = sadd.s32 %s325, %s326
      %s328 = smul.addr %s327, 4
      %s329 = scalar_lea.vmem %s4, %s328
      %p330 = pneg %p154
      %p331 = pneg %p151
      %p332 = pneg %p175
      %p333 = pneg %p172
      %p334 = pneg %p203
      %p335 = pneg %p200
      %s336 = smul.u32 30, %s22
      %p337 = scmp.lt.s32.totalorder %s21, 1
      %s338 = scalar_select %p337, %s21, 1
      %p339 = scmp.lt.s32.totalorder %s336, 59
      %s340 = scalar_select %p339, %s336, 59
      %s341 = smul.addr %s338, 60
      %s342 = sadd.s32 %s340, %s341
      %s343 = smul.addr %s342, 4
      %s344 = scalar_lea.vmem %s6, %s343
      %s345 = smul.u32 30, %s22
      %s346 = ssub.s32 66, %s345
      %p347 = scmp.lt.s32.totalorder %s346, 30
      %s348 = scalar_select %p347, %s346, 30
      %s349 = smul.u32 4, %s348
      %p350 = scmp.lt.s32.totalorder %s21, 1
      %s351 = scalar_select %p350, %s21, 1
      %p352 = scmp.lt.s32.totalorder %s345, 65
      %s353 = scalar_select %p352, %s345, 65
      %s354 = smul.addr %s351, 66
      %s355 = sadd.s32 %s353, %s354
      %s356 = smul.addr %s355, 4
      %s357 = scalar_lea.vmem %s0, %s356
      %s358 = smul.u32 30, %s22
      %s359 = ssub.s32 66, %s358
      %p360 = scmp.lt.s32.totalorder %s359, 30
      %s361 = scalar_select %p360, %s359, 30
      %s362 = smul.u32 4, %s361
      %s363 = sadd.s32 %s22, 1
      %s364 = smul.u32 %s363, 5
      %s365 = smul.u32 6, %s364
      %p366 = scmp.lt.s32.totalorder %s21, 1
      %s367 = scalar_select %p366, %s21, 1
      %p368 = scmp.lt.s32.totalorder %s365, 65
      %s369 = scalar_select %p368, %s365, 65
      %s370 = smul.addr %s367, 66
      %s371 = sadd.s32 %s369, %s370
      %s372 = smul.addr %s371, 4
      %s373 = scalar_lea.vmem %s1, %s372
      %s374 = sadd.s32 %s22, 1
      %s375 = smul.u32 %s374, 5
      %s376 = smul.u32 6, %s375
      %s377 = smul.u32 30, %s22
      %p378 = scmp.lt.s32.totalorder %s21, 1
      %s379 = scalar_select %p378, %s21, 1
      %p380 = scmp.lt.s32.totalorder %s377, 59
      %s381 = scalar_select %p380, %s377, 59
      %s382 = smul.addr %s379, 60
      %s383 = sadd.s32 %s381, %s382
      %s384 = smul.addr %s383, 4
      %s385 = scalar_lea.vmem %s4, %s384
      %s386 = smul.u32 30, %s22
      %s387 = smul.u32 30, %s22
      %p388 = scmp.lt.s32.totalorder %s21, 1
      %s389 = scalar_select %p388, %s21, 1
      %p390 = scmp.lt.s32.totalorder %s387, 59
      %s391 = scalar_select %p390, %s387, 59
      %s392 = smul.addr %s389, 60
      %s393 = sadd.s32 %s391, %s392
      %s394 = smul.addr %s393, 4
      %s395 = scalar_lea.vmem %s6, %s394
      %s396 = smul.u32 30, %s22
      %v398 = vld [vmem:[%s357] sm:$0xf]
      %v399 = vld [vmem:[%s357 + $0x4] sm:$0xf]
      %v400 = vld [vmem:[%s357 + $0x8] sm:$0xf]
      %v401 = vld [vmem:[%s357 + $0xc] sm:$0xf]
      %v402 = vld [vmem:[%s357 + $0x10] sm:$0xf]
      %v403 = vld [vmem:[%s357 + $0x14] sm:$0xf]
      %v404 = vld [vmem:[%s357 + $0x18] sm:$0xf]
      %v405 = vld [vmem:[%s357 + $0x1c] sm:$0xf]
      %v406 = vld [vmem:[%s357 + $0x20] sm:$0xf]
      %v407 = vld [vmem:[%s357 + $0x24] sm:$0xf]
      %v408 = vld [vmem:[%s357 + $0x28] sm:$0xf]
      %v409 = vld [vmem:[%s357 + $0x2c] sm:$0xf]
      %v410 = vld [vmem:[%s357 + $0x30] sm:$0xf]
      %v411 = vld [vmem:[%s357 + $0x34] sm:$0xf]
      %v412 = vld [vmem:[%s357 + $0x38] sm:$0xf]
      %v413 = vld [vmem:[%s357 + $0x3c] sm:$0xf]
      %v414 = vld [vmem:[%s357 + $0x40] sm:$0xf]
      %v415 = vld [vmem:[%s357 + $0x44] sm:$0xf]
      %v416 = vld [vmem:[%s357 + $0x48] sm:$0xf]
      %v417 = vld [vmem:[%s357 + $0x4c] sm:$0xf]
      %v418 = vld [vmem:[%s357 + $0x50] sm:$0xf]
      %v419 = vld [vmem:[%s357 + $0x54] sm:$0xf]
      %v420 = vld [vmem:[%s357 + $0x58] sm:$0xf]
      %v421 = vld [vmem:[%s357 + $0x5c] sm:$0xf]
      %v422 = vld [vmem:[%s357 + $0x60] sm:$0xf]
      %v423 = vld [vmem:[%s357 + $0x64] sm:$0xf]
      %v424 = vld [vmem:[%s357 + $0x68] sm:$0xf]
      %v425 = vld [vmem:[%s357 + $0x6c] sm:$0xf]
      %v426 = vld [vmem:[%s357 + $0x70] sm:$0xf]
      %v427 = vld [vmem:[%s357 + $0x74] sm:$0xf]
      %vm428 = vcmask 60416
      %429 = vst.msk [vmem:[#allocation2] sm:$0xf] %vm428, %v398
      %430 = vst.msk [vmem:[#allocation2 + $0x4] sm:$0xf] %vm428, %v399
      %431 = vst.msk [vmem:[#allocation2 + $0x8] sm:$0xf] %vm428, %v400
      %432 = vst.msk [vmem:[#allocation2 + $0xc] sm:$0xf] %vm428, %v401
      %433 = vst.msk [vmem:[#allocation2 + $0x10] sm:$0xf] %vm428, %v402
      %434 = vst.msk [vmem:[#allocation2 + $0x14] sm:$0xf] %vm428, %v403
      %435 = vst.msk [vmem:[#allocation2 + $0x18] sm:$0xf] %vm428, %v404
      %436 = vst.msk [vmem:[#allocation2 + $0x1c] sm:$0xf] %vm428, %v405
      %437 = vst.msk [vmem:[#allocation2 + $0x20] sm:$0xf] %vm428, %v406
      %438 = vst.msk [vmem:[#allocation2 + $0x24] sm:$0xf] %vm428, %v407
      %439 = vst.msk [vmem:[#allocation2 + $0x28] sm:$0xf] %vm428, %v408
      %440 = vst.msk [vmem:[#allocation2 + $0x2c] sm:$0xf] %vm428, %v409
      %441 = vst.msk [vmem:[#allocation2 + $0x30] sm:$0xf] %vm428, %v410
      %442 = vst.msk [vmem:[#allocation2 + $0x34] sm:$0xf] %vm428, %v411
      %443 = vst.msk [vmem:[#allocation2 + $0x38] sm:$0xf] %vm428, %v412
      %444 = vst.msk [vmem:[#allocation2 + $0x3c] sm:$0xf] %vm428, %v413
      %445 = vst.msk [vmem:[#allocation2 + $0x40] sm:$0xf] %vm428, %v414
      %446 = vst.msk [vmem:[#allocation2 + $0x44] sm:$0xf] %vm428, %v415
      %447 = vst.msk [vmem:[#allocation2 + $0x48] sm:$0xf] %vm428, %v416
      %448 = vst.msk [vmem:[#allocation2 + $0x4c] sm:$0xf] %vm428, %v417
      %449 = vst.msk [vmem:[#allocation2 + $0x50] sm:$0xf] %vm428, %v418
      %450 = vst.msk [vmem:[#allocation2 + $0x54] sm:$0xf] %vm428, %v419
      %451 = vst.msk [vmem:[#allocation2 + $0x58] sm:$0xf] %vm428, %v420
      %452 = vst.msk [vmem:[#allocation2 + $0x5c] sm:$0xf] %vm428, %v421
      %453 = vst.msk [vmem:[#allocation2 + $0x60] sm:$0xf] %vm428, %v422
      %454 = vst.msk [vmem:[#allocation2 + $0x64] sm:$0xf] %vm428, %v423
      %455 = vst.msk [vmem:[#allocation2 + $0x68] sm:$0xf] %vm428, %v424
      %456 = vst.msk [vmem:[#allocation2 + $0x6c] sm:$0xf] %vm428, %v425
      %457 = vst.msk [vmem:[#allocation2 + $0x70] sm:$0xf] %vm428, %v426
      %458 = vst.msk [vmem:[#allocation2 + $0x74] sm:$0xf] %vm428, %v427
      %v459 = vld [vmem:[%s373] sm:$0xf]
      %v460 = vld [vmem:[%s373 + $0x4] sm:$0xf]
      %v461 = vld [vmem:[%s373 + $0x8] sm:$0xf]
      %v462 = vld [vmem:[%s373 + $0xc] sm:$0xf]
      %v463 = vld [vmem:[%s373 + $0x10] sm:$0xf]
      %v464 = vld [vmem:[%s373 + $0x14] sm:$0xf]
      %465 = vst.msk [vmem:[#allocation2 + $0x78] sm:$0xf] %vm428, %v459
      %466 = vst.msk [vmem:[#allocation2 + $0x7c] sm:$0xf] %vm428, %v460
      %467 = vst.msk [vmem:[#allocation2 + $0x80] sm:$0xf] %vm428, %v461
      %468 = vst.msk [vmem:[#allocation2 + $0x84] sm:$0xf] %vm428, %v462
      %469 = vst.msk [vmem:[#allocation2 + $0x88] sm:$0xf] %vm428, %v463
      %470 = vst.msk [vmem:[#allocation2 + $0x8c] sm:$0xf] %vm428, %v464
      %v471 = vld [vmem:[#allocation2] sm:$0xf]
      %v472 = vld [vmem:[#allocation2 + $0x4] sm:$0xf]
      %v473 = vld [vmem:[#allocation2 + $0x8] sm:$0xf]
      %v474 = vld [vmem:[#allocation2 + $0xc] sm:$0xf]
      %v475 = vld [vmem:[#allocation2 + $0x10] sm:$0xf]
      %v476 = vld [vmem:[#allocation2 + $0x14] sm:$0xf]
      %v477 = vld [vmem:[#allocation2 + $0x18] sm:$0xf]
      %v478 = vld [vmem:[#allocation2 + $0x1c] sm:$0xf]
      %v479 = vld [vmem:[#allocation2 + $0x20] sm:$0xf]
      %v480 = vld [vmem:[#allocation2 + $0x24] sm:$0xf]
      %v481 = vld [vmem:[#allocation2 + $0x28] sm:$0xf]
      %v482 = vld [vmem:[#allocation2 + $0x2c] sm:$0xf]
      %v483 = vld [vmem:[#allocation2 + $0x30] sm:$0xf]
      %v484 = vld [vmem:[#allocation2 + $0x34] sm:$0xf]
      %v485 = vld [vmem:[#allocation2 + $0x38] sm:$0xf]
      %v486 = vld [vmem:[#allocation2 + $0x3c] sm:$0xf]
      %v487 = vld [vmem:[#allocation2 + $0x40] sm:$0xf]
      %v488 = vld [vmem:[#allocation2 + $0x44] sm:$0xf]
      %v489 = vld [vmem:[#allocation2 + $0x48] sm:$0xf]
      %v490 = vld [vmem:[#allocation2 + $0x4c] sm:$0xf]
      %v491 = vld [vmem:[#allocation2 + $0x50] sm:$0xf]
      %v492 = vld [vmem:[#allocation2 + $0x54] sm:$0xf]
      %v493 = vld [vmem:[#allocation2 + $0x58] sm:$0xf]
      %v494 = vld [vmem:[#allocation2 + $0x5c] sm:$0xf]
      %v495 = vld [vmem:[#allocation2 + $0x60] sm:$0xf]
      %v496 = vld [vmem:[#allocation2 + $0x64] sm:$0xf]
      %v497 = vld [vmem:[#allocation2 + $0x68] sm:$0xf]
      %v498 = vld [vmem:[#allocation2 + $0x6c] sm:$0xf]
      %v499 = vld [vmem:[#allocation2 + $0x70] sm:$0xf]
      %v500 = vld [vmem:[#allocation2 + $0x74] sm:$0xf]
      %v501 = vld [vmem:[%s2] sm:$0xf]
      %v502 = vld [vmem:[#allocation2 + $0x78] sm:$0x1]
      %s503 = scalar_lea.vmem %s2, 4
      %v504 = vld [vmem:[%s503] sm:$0xf]
      %v536 = vunpack.c.l.b16 %v471
      %v537 = vunpack.c.l.b16 %v472
      %v538 = vunpack.c.l.b16 %v473
      %v539 = vunpack.c.l.b16 %v474
      %v540 = vunpack.c.l.b16 %v475
      %v541 = vunpack.c.l.b16 %v476
      %v542 = vunpack.c.l.b16 %v477
      %v543 = vunpack.c.l.b16 %v478
      %v544 = vunpack.c.l.b16 %v479
      %v545 = vunpack.c.l.b16 %v480
      %v546 = vunpack.c.l.b16 %v481
      %v547 = vunpack.c.l.b16 %v482
      %v548 = vunpack.c.l.b16 %v483
      %v549 = vunpack.c.l.b16 %v484
      %v550 = vunpack.c.l.b16 %v485
      %v551 = vunpack.c.l.b16 %v486
      %v552 = vunpack.c.l.b16 %v487
      %v553 = vunpack.c.l.b16 %v488
      %v554 = vunpack.c.l.b16 %v489
      %v555 = vunpack.c.l.b16 %v490
      %v556 = vunpack.c.l.b16 %v491
      %v557 = vunpack.c.l.b16 %v492
      %v558 = vunpack.c.l.b16 %v493
      %v559 = vunpack.c.l.b16 %v494
      %v560 = vunpack.c.l.b16 %v495
      %v561 = vunpack.c.l.b16 %v496
      %v562 = vunpack.c.l.b16 %v497
      %v563 = vunpack.c.l.b16 %v498
      %v564 = vunpack.c.l.b16 %v499
      %v565 = vunpack.c.l.b16 %v500
      %v566 = vunpack.c.l.b16 %v502
      %v567 = vpack.c.b16 %v537, %v536
      %v568 = vpack.c.b16 %v539, %v538
      %v569 = vpack.c.b16 %v541, %v540
      %v570 = vpack.c.b16 %v543, %v542
      %v571 = vpack.c.b16 %v545, %v544
      %v572 = vpack.c.b16 %v547, %v546
      %v573 = vpack.c.b16 %v549, %v548
      %v574 = vpack.c.b16 %v551, %v550
      %v575 = vpack.c.b16 %v553, %v552
      %v576 = vpack.c.b16 %v555, %v554
      %v577 = vpack.c.b16 %v557, %v556
      %v578 = vpack.c.b16 %v559, %v558
      %v579 = vpack.c.b16 %v561, %v560
      %v580 = vpack.c.b16 %v563, %v562
      %v581 = vpack.c.b16 %v565, %v564
      %v582 = vpack.c.b16 %v566, %v566
      %vm583 = vsmask.f32 7424
      %v585 = vshrl.u32 %v567, 16
      %v587 = vshll.u32 %v567, 16
      %v589 = vrot.slane %v587, 1
      %v590 = vor.u32 %v585, %v589
      %v592 = vshll.u32 %v568, 16
      %v594 = vrot.slane %v592, 1
      %v595 = vsel %vm583, %v590, %v594
      %v596 = vshrl.u32 %v568, 16
      %v598 = vor.u32 %v596, %v594
      %v600 = vshll.u32 %v569, 16
      %v602 = vrot.slane %v600, 1
      %v603 = vsel %vm583, %v598, %v602
      %v604 = vshrl.u32 %v569, 16
      %v606 = vor.u32 %v604, %v602
      %v608 = vshll.u32 %v570, 16
      %v610 = vrot.slane %v608, 1
      %v611 = vsel %vm583, %v606, %v610
      %v612 = vshrl.u32 %v570, 16
      %v614 = vor.u32 %v612, %v610
      %v616 = vshll.u32 %v571, 16
      %v618 = vrot.slane %v616, 1
      %v619 = vsel %vm583, %v614, %v618
      %v620 = vshrl.u32 %v571, 16
      %v622 = vor.u32 %v620, %v618
      %v624 = vshll.u32 %v572, 16
      %v626 = vrot.slane %v624, 1
      %v627 = vsel %vm583, %v622, %v626
      %v628 = vshrl.u32 %v572, 16
      %v630 = vor.u32 %v628, %v626
      %v632 = vshll.u32 %v573, 16
      %v634 = vrot.slane %v632, 1
      %v635 = vsel %vm583, %v630, %v634
      %v636 = vshrl.u32 %v573, 16
      %v638 = vor.u32 %v636, %v634
      %v640 = vshll.u32 %v574, 16
      %v642 = vrot.slane %v640, 1
      %v643 = vsel %vm583, %v638, %v642
      %v644 = vshrl.u32 %v574, 16
      %v646 = vor.u32 %v644, %v642
      %v648 = vshll.u32 %v575, 16
      %v650 = vrot.slane %v648, 1
      %v651 = vsel %vm583, %v646, %v650
      %v652 = vshrl.u32 %v575, 16
      %v654 = vor.u32 %v652, %v650
      %v656 = vshll.u32 %v576, 16
      %v658 = vrot.slane %v656, 1
      %v659 = vsel %vm583, %v654, %v658
      %v660 = vshrl.u32 %v576, 16
      %v662 = vor.u32 %v660, %v658
      %v664 = vshll.u32 %v577, 16
      %v666 = vrot.slane %v664, 1
      %v667 = vsel %vm583, %v662, %v666
      %v668 = vshrl.u32 %v577, 16
      %v670 = vor.u32 %v668, %v666
      %v672 = vshll.u32 %v578, 16
      %v674 = vrot.slane %v672, 1
      %v675 = vsel %vm583, %v670, %v674
      %v676 = vshrl.u32 %v578, 16
      %v678 = vor.u32 %v676, %v674
      %v680 = vshll.u32 %v579, 16
      %v682 = vrot.slane %v680, 1
      %v683 = vsel %vm583, %v678, %v682
      %v684 = vshrl.u32 %v579, 16
      %v686 = vor.u32 %v684, %v682
      %v688 = vshll.u32 %v580, 16
      %v690 = vrot.slane %v688, 1
      %v691 = vsel %vm583, %v686, %v690
      %v692 = vshrl.u32 %v580, 16
      %v694 = vor.u32 %v692, %v690
      %v696 = vshll.u32 %v581, 16
      %v698 = vrot.slane %v696, 1
      %v699 = vsel %vm583, %v694, %v698
      %v700 = vshrl.u32 %v581, 16
      %v702 = vor.u32 %v700, %v698
      %v704 = vshll.u32 %v582, 16
      %v706 = vrot.slane %v704, 1
      %v707 = vsel %vm583, %v702, %v706
      %vm708 = vcmask 64512
      %v710 = vsel %vm708, %v595, 0
      %v713 = vsel %vm708, %v603, 0
      %v716 = vsel %vm708, %v611, 0
      %v719 = vsel %vm708, %v619, 0
      %v722 = vsel %vm708, %v627, 0
      %v725 = vsel %vm708, %v635, 0
      %v728 = vsel %vm708, %v643, 0
      %v731 = vsel %vm708, %v651, 0
      %v734 = vsel %vm708, %v659, 0
      %v737 = vsel %vm708, %v667, 0
      %v740 = vsel %vm708, %v675, 0
      %v743 = vsel %vm708, %v683, 0
      %v746 = vsel %vm708, %v691, 0
      %v749 = vsel %vm708, %v699, 0
      %v752 = vsel %vm708, %v707, 0
      %vm754 = vcmask 1043456
      %v756 = vsel %vm754, %v504, 0
      %758 = vmatpush.bf16.msra.mxu0 0
      %759 = vmatpush.bf16.msra.mxu0 0
      %760 = vmatpush.bf16.msra.mxu0 0
      %761 = vmatpush.bf16.msra.mxu0 0
      %762 = vmatpush.bf16.msra.mxu0 0
      %763 = vmatpush.bf16.msra.mxu0 0
      %764 = vmatpush.bf16.msra.mxu0 0
      %765 = vmatpush.bf16.msra.mxu0 %v756
      %766 = vmatmul.bf16.gmra.mxu0 %v710
      %v767 = vpop.f32.mrf.mxu0
      %v768 = vadd.f32 0.0, %v767
      %v769 = vpop.f32.mrf.mxu0
      %v770 = vadd.f32 0.0, %v769
      %771 = vmatmul.bf16.gmra.mxu0 %v713
      %v772 = vpop.f32.mrf.mxu0
      %v773 = vadd.f32 0.0, %v772
      %v774 = vpop.f32.mrf.mxu0
      %v775 = vadd.f32 0.0, %v774
      %776 = vmatmul.bf16.gmra.mxu0 %v716
      %v777 = vpop.f32.mrf.mxu0
      %v778 = vadd.f32 0.0, %v777
      %v779 = vpop.f32.mrf.mxu0
      %v780 = vadd.f32 0.0, %v779
      %781 = vmatmul.bf16.gmra.mxu0 %v719
      %v782 = vpop.f32.mrf.mxu0
      %v783 = vadd.f32 0.0, %v782
      %v784 = vpop.f32.mrf.mxu0
      %v785 = vadd.f32 0.0, %v784
      %786 = vmatmul.bf16.gmra.mxu0 %v722
      %v787 = vpop.f32.mrf.mxu0
      %v788 = vadd.f32 0.0, %v787
      %v789 = vpop.f32.mrf.mxu0
      %v790 = vadd.f32 0.0, %v789
      %791 = vmatmul.bf16.gmra.mxu0 %v725
      %v792 = vpop.f32.mrf.mxu0
      %v793 = vadd.f32 0.0, %v792
      %v794 = vpop.f32.mrf.mxu0
      %v795 = vadd.f32 0.0, %v794
      %796 = vmatmul.bf16.gmra.mxu0 %v728
      %v797 = vpop.f32.mrf.mxu0
      %v798 = vadd.f32 0.0, %v797
      %v799 = vpop.f32.mrf.mxu0
      %v800 = vadd.f32 0.0, %v799
      %801 = vmatmul.bf16.gmra.mxu0 %v731
      %v802 = vpop.f32.mrf.mxu0
      %v803 = vadd.f32 0.0, %v802
      %v804 = vpop.f32.mrf.mxu0
      %v805 = vadd.f32 0.0, %v804
      %806 = vmatmul.bf16.gmra.mxu0 %v734
      %v807 = vpop.f32.mrf.mxu0
      %v808 = vadd.f32 0.0, %v807
      %v809 = vpop.f32.mrf.mxu0
      %v810 = vadd.f32 0.0, %v809
      %811 = vmatmul.bf16.gmra.mxu0 %v737
      %v812 = vpop.f32.mrf.mxu0
      %v813 = vadd.f32 0.0, %v812
      %v814 = vpop.f32.mrf.mxu0
      %v815 = vadd.f32 0.0, %v814
      %816 = vmatmul.bf16.gmra.mxu0 %v740
      %v817 = vpop.f32.mrf.mxu0
      %v818 = vadd.f32 0.0, %v817
      %v819 = vpop.f32.mrf.mxu0
      %v820 = vadd.f32 0.0, %v819
      %821 = vmatmul.bf16.gmra.mxu0 %v743
      %v822 = vpop.f32.mrf.mxu0
      %v823 = vadd.f32 0.0, %v822
      %v824 = vpop.f32.mrf.mxu0
      %v825 = vadd.f32 0.0, %v824
      %826 = vmatmul.bf16.gmra.mxu0 %v746
      %v827 = vpop.f32.mrf.mxu0
      %v828 = vadd.f32 0.0, %v827
      %v829 = vpop.f32.mrf.mxu0
      %v830 = vadd.f32 0.0, %v829
      %831 = vmatmul.bf16.gmra.mxu0 %v749
      %v832 = vpop.f32.mrf.mxu0
      %v833 = vadd.f32 0.0, %v832
      %v834 = vpop.f32.mrf.mxu0
      %v835 = vadd.f32 0.0, %v834
      %836 = vmatmul.bf16.gmra.mxu0 %v752
      %v837 = vpop.f32.mrf.mxu0
      %v838 = vadd.f32 0.0, %v837
      %v839 = vpop.f32.mrf.mxu0
      %v840 = vadd.f32 0.0, %v839
      %841 = vdwg.mxu0
      %v842 = vsel %vm708, %v567, 0
      %v844 = vsel %vm708, %v568, 0
      %v846 = vsel %vm708, %v569, 0
      %v848 = vsel %vm708, %v570, 0
      %v850 = vsel %vm708, %v571, 0
      %v852 = vsel %vm708, %v572, 0
      %v854 = vsel %vm708, %v573, 0
      %v856 = vsel %vm708, %v574, 0
      %v858 = vsel %vm708, %v575, 0
      %v860 = vsel %vm708, %v576, 0
      %v862 = vsel %vm708, %v577, 0
      %v864 = vsel %vm708, %v578, 0
      %v866 = vsel %vm708, %v579, 0
      %v868 = vsel %vm708, %v580, 0
      %v870 = vsel %vm708, %v581, 0
      %v873 = vsel %vm754, %v501, 0
      %875 = vmatpush.bf16.msra.mxu0 0
      %876 = vmatpush.bf16.msra.mxu0 0
      %877 = vmatpush.bf16.msra.mxu0 0
      %878 = vmatpush.bf16.msra.mxu0 0
      %879 = vmatpush.bf16.msra.mxu0 0
      %880 = vmatpush.bf16.msra.mxu0 0
      %881 = vmatpush.bf16.msra.mxu0 0
      %882 = vmatpush.bf16.msra.mxu0 %v873
      %883 = vmatmul.bf16.gmra.mxu0 %v842
      %v884 = vpop.f32.mrf.mxu0
      %v885 = vadd.f32 %v768, %v884
      %v886 = vpop.f32.mrf.mxu0
      %v887 = vadd.f32 %v770, %v886
      %888 = vmatmul.bf16.gmra.mxu0 %v844
      %v889 = vpop.f32.mrf.mxu0
      %v890 = vadd.f32 %v773, %v889
      %v891 = vpop.f32.mrf.mxu0
      %v892 = vadd.f32 %v775, %v891
      %893 = vmatmul.bf16.gmra.mxu0 %v846
      %v894 = vpop.f32.mrf.mxu0
      %v895 = vadd.f32 %v778, %v894
      %v896 = vpop.f32.mrf.mxu0
      %v897 = vadd.f32 %v780, %v896
      %898 = vmatmul.bf16.gmra.mxu0 %v848
      %v899 = vpop.f32.mrf.mxu0
      %v900 = vadd.f32 %v783, %v899
      %v901 = vpop.f32.mrf.mxu0
      %v902 = vadd.f32 %v785, %v901
      %903 = vmatmul.bf16.gmra.mxu0 %v850
      %v904 = vpop.f32.mrf.mxu0
      %v905 = vadd.f32 %v788, %v904
      %v906 = vpop.f32.mrf.mxu0
      %v907 = vadd.f32 %v790, %v906
      %908 = vmatmul.bf16.gmra.mxu0 %v852
      %v909 = vpop.f32.mrf.mxu0
      %v910 = vadd.f32 %v793, %v909
      %v911 = vpop.f32.mrf.mxu0
      %v912 = vadd.f32 %v795, %v911
      %913 = vmatmul.bf16.gmra.mxu0 %v854
      %v914 = vpop.f32.mrf.mxu0
      %v915 = vadd.f32 %v798, %v914
      %v916 = vpop.f32.mrf.mxu0
      %v917 = vadd.f32 %v800, %v916
      %918 = vmatmul.bf16.gmra.mxu0 %v856
      %v919 = vpop.f32.mrf.mxu0
      %v920 = vadd.f32 %v803, %v919
      %v921 = vpop.f32.mrf.mxu0
      %v922 = vadd.f32 %v805, %v921
      %923 = vmatmul.bf16.gmra.mxu0 %v858
      %v924 = vpop.f32.mrf.mxu0
      %v925 = vadd.f32 %v808, %v924
      %v926 = vpop.f32.mrf.mxu0
      %v927 = vadd.f32 %v810, %v926
      %928 = vmatmul.bf16.gmra.mxu0 %v860
      %v929 = vpop.f32.mrf.mxu0
      %v930 = vadd.f32 %v813, %v929
      %v931 = vpop.f32.mrf.mxu0
      %v932 = vadd.f32 %v815, %v931
      %933 = vmatmul.bf16.gmra.mxu0 %v862
      %v934 = vpop.f32.mrf.mxu0
      %v935 = vadd.f32 %v818, %v934
      %v936 = vpop.f32.mrf.mxu0
      %v937 = vadd.f32 %v820, %v936
      %938 = vmatmul.bf16.gmra.mxu0 %v864
      %v939 = vpop.f32.mrf.mxu0
      %v940 = vadd.f32 %v823, %v939
      %v941 = vpop.f32.mrf.mxu0
      %v942 = vadd.f32 %v825, %v941
      %943 = vmatmul.bf16.gmra.mxu0 %v866
      %v944 = vpop.f32.mrf.mxu0
      %v945 = vadd.f32 %v828, %v944
      %v946 = vpop.f32.mrf.mxu0
      %v947 = vadd.f32 %v830, %v946
      %948 = vmatmul.bf16.gmra.mxu0 %v868
      %v949 = vpop.f32.mrf.mxu0
      %v950 = vadd.f32 %v833, %v949
      %v951 = vpop.f32.mrf.mxu0
      %v952 = vadd.f32 %v835, %v951
      %953 = vmatmul.bf16.gmra.mxu0 %v870
      %v954 = vpop.f32.mrf.mxu0
      %v955 = vadd.f32 %v838, %v954
      %v956 = vpop.f32.mrf.mxu0
      %v957 = vadd.f32 %v840, %v956
      %958 = vdwg.mxu0
      %v959 = vld [vmem:[#allocation2] sm:$0xe]
      %s960 = scalar_lea.vmem %s2, 8
      %v961 = vld [vmem:[%s960] sm:$0xf]
      %v963 = vunpack.c.l.b16 %v959
      %v964 = vpack.c.b16 %v537, %v963
      %vm965 = vcmask 1046528
      %v966 = vrot.slane %v964, 1
      %v967 = vrot.slane %v568, 1
      %v968 = vsel %vm965, %v966, %v967
      %v969 = vrot.slane %v569, 1
      %v970 = vsel %vm965, %v967, %v969
      %v971 = vrot.slane %v570, 1
      %v972 = vsel %vm965, %v969, %v971
      %v973 = vrot.slane %v571, 1
      %v974 = vsel %vm965, %v971, %v973
      %v975 = vrot.slane %v572, 1
      %v976 = vsel %vm965, %v973, %v975
      %v977 = vrot.slane %v573, 1
      %v978 = vsel %vm965, %v975, %v977
      %v979 = vrot.slane %v574, 1
      %v980 = vsel %vm965, %v977, %v979
      %v981 = vrot.slane %v575, 1
      %v982 = vsel %vm965, %v979, %v981
      %v983 = vrot.slane %v576, 1
      %v984 = vsel %vm965, %v981, %v983
      %v985 = vrot.slane %v577, 1
      %v986 = vsel %vm965, %v983, %v985
      %v987 = vrot.slane %v578, 1
      %v988 = vsel %vm965, %v985, %v987
      %v989 = vrot.slane %v579, 1
      %v990 = vsel %vm965, %v987, %v989
      %v991 = vrot.slane %v580, 1
      %v992 = vsel %vm965, %v989, %v991
      %v993 = vrot.slane %v581, 1
      %v994 = vsel %vm965, %v991, %v993
      %v995 = vrot.slane %v582, 1
      %v996 = vsel %vm965, %v993, %v995
      %v998 = vsel %vm708, %v968, 0
      %v1001 = vsel %vm708, %v970, 0
      %v1004 = vsel %vm708, %v972, 0
      %v1007 = vsel %vm708, %v974, 0
      %v1010 = vsel %vm708, %v976, 0
      %v1013 = vsel %vm708, %v978, 0
      %v1016 = vsel %vm708, %v980, 0
      %v1019 = vsel %vm708, %v982, 0
      %v1022 = vsel %vm708, %v984, 0
      %v1025 = vsel %vm708, %v986, 0
      %v1028 = vsel %vm708, %v988, 0
      %v1031 = vsel %vm708, %v990, 0
      %v1034 = vsel %vm708, %v992, 0
      %v1037 = vsel %vm708, %v994, 0
      %v1040 = vsel %vm708, %v996, 0
      %v1043 = vsel %vm754, %v961, 0
      %1045 = vmatpush.bf16.msra.mxu0 0
      %1046 = vmatpush.bf16.msra.mxu0 0
      %1047 = vmatpush.bf16.msra.mxu0 0
      %1048 = vmatpush.bf16.msra.mxu0 0
      %1049 = vmatpush.bf16.msra.mxu0 0
      %1050 = vmatpush.bf16.msra.mxu0 0
      %1051 = vmatpush.bf16.msra.mxu0 0
      %1052 = vmatpush.bf16.msra.mxu0 %v1043
      %1053 = vmatmul.bf16.gmra.mxu0 %v998
      %v1054 = vpop.f32.mrf.mxu0
      %v1055 = vadd.f32 0.0, %v1054
      %v1056 = vpop.f32.mrf.mxu0
      %v1057 = vadd.f32 0.0, %v1056
      %1058 = vmatmul.bf16.gmra.mxu0 %v1001
      %v1059 = vpop.f32.mrf.mxu0
      %v1060 = vadd.f32 0.0, %v1059
      %v1061 = vpop.f32.mrf.mxu0
      %v1062 = vadd.f32 0.0, %v1061
      %1063 = vmatmul.bf16.gmra.mxu0 %v1004
      %v1064 = vpop.f32.mrf.mxu0
      %v1065 = vadd.f32 0.0, %v1064
      %v1066 = vpop.f32.mrf.mxu0
      %v1067 = vadd.f32 0.0, %v1066
      %1068 = vmatmul.bf16.gmra.mxu0 %v1007
      %v1069 = vpop.f32.mrf.mxu0
      %v1070 = vadd.f32 0.0, %v1069
      %v1071 = vpop.f32.mrf.mxu0
      %v1072 = vadd.f32 0.0, %v1071
      %1073 = vmatmul.bf16.gmra.mxu0 %v1010
      %v1074 = vpop.f32.mrf.mxu0
      %v1075 = vadd.f32 0.0, %v1074
      %v1076 = vpop.f32.mrf.mxu0
      %v1077 = vadd.f32 0.0, %v1076
      %1078 = vmatmul.bf16.gmra.mxu0 %v1013
      %v1079 = vpop.f32.mrf.mxu0
      %v1080 = vadd.f32 0.0, %v1079
      %v1081 = vpop.f32.mrf.mxu0
      %v1082 = vadd.f32 0.0, %v1081
      %1083 = vmatmul.bf16.gmra.mxu0 %v1016
      %v1084 = vpop.f32.mrf.mxu0
      %v1085 = vadd.f32 0.0, %v1084
      %v1086 = vpop.f32.mrf.mxu0
      %v1087 = vadd.f32 0.0, %v1086
      %1088 = vmatmul.bf16.gmra.mxu0 %v1019
      %v1089 = vpop.f32.mrf.mxu0
      %v1090 = vadd.f32 0.0, %v1089
      %v1091 = vpop.f32.mrf.mxu0
      %v1092 = vadd.f32 0.0, %v1091
      %1093 = vmatmul.bf16.gmra.mxu0 %v1022
      %v1094 = vpop.f32.mrf.mxu0
      %v1095 = vadd.f32 0.0, %v1094
      %v1096 = vpop.f32.mrf.mxu0
      %v1097 = vadd.f32 0.0, %v1096
      %1098 = vmatmul.bf16.gmra.mxu0 %v1025
      %v1099 = vpop.f32.mrf.mxu0
      %v1100 = vadd.f32 0.0, %v1099
      %v1101 = vpop.f32.mrf.mxu0
      %v1102 = vadd.f32 0.0, %v1101
      %1103 = vmatmul.bf16.gmra.mxu0 %v1028
      %v1104 = vpop.f32.mrf.mxu0
      %v1105 = vadd.f32 0.0, %v1104
      %v1106 = vpop.f32.mrf.mxu0
      %v1107 = vadd.f32 0.0, %v1106
      %1108 = vmatmul.bf16.gmra.mxu0 %v1031
      %v1109 = vpop.f32.mrf.mxu0
      %v1110 = vadd.f32 0.0, %v1109
      %v1111 = vpop.f32.mrf.mxu0
      %v1112 = vadd.f32 0.0, %v1111
      %1113 = vmatmul.bf16.gmra.mxu0 %v1034
      %v1114 = vpop.f32.mrf.mxu0
      %v1115 = vadd.f32 0.0, %v1114
      %v1116 = vpop.f32.mrf.mxu0
      %v1117 = vadd.f32 0.0, %v1116
      %1118 = vmatmul.bf16.gmra.mxu0 %v1037
      %v1119 = vpop.f32.mrf.mxu0
      %v1120 = vadd.f32 0.0, %v1119
      %v1121 = vpop.f32.mrf.mxu0
      %v1122 = vadd.f32 0.0, %v1121
      %1123 = vmatmul.bf16.gmra.mxu0 %v1040
      %v1124 = vpop.f32.mrf.mxu0
      %v1125 = vadd.f32 0.0, %v1124
      %v1126 = vpop.f32.mrf.mxu0
      %v1127 = vadd.f32 0.0, %v1126
      %1128 = vdwg.mxu0
      %v1129 = vadd.f32 %v885, %v1055
      %v1130 = vadd.f32 %v887, %v1057
      %v1131 = vadd.f32 %v890, %v1060
      %v1132 = vadd.f32 %v892, %v1062
      %v1133 = vadd.f32 %v895, %v1065
      %v1134 = vadd.f32 %v897, %v1067
      %v1135 = vadd.f32 %v900, %v1070
      %v1136 = vadd.f32 %v902, %v1072
      %v1137 = vadd.f32 %v905, %v1075
      %v1138 = vadd.f32 %v907, %v1077
      %v1139 = vadd.f32 %v910, %v1080
      %v1140 = vadd.f32 %v912, %v1082
      %v1141 = vadd.f32 %v915, %v1085
      %v1142 = vadd.f32 %v917, %v1087
      %v1143 = vadd.f32 %v920, %v1090
      %v1144 = vadd.f32 %v922, %v1092
      %v1145 = vadd.f32 %v925, %v1095
      %v1146 = vadd.f32 %v927, %v1097
      %v1147 = vadd.f32 %v930, %v1100
      %v1148 = vadd.f32 %v932, %v1102
      %v1149 = vadd.f32 %v935, %v1105
      %v1150 = vadd.f32 %v937, %v1107
      %v1151 = vadd.f32 %v940, %v1110
      %v1152 = vadd.f32 %v942, %v1112
      %v1153 = vadd.f32 %v945, %v1115
      %v1154 = vadd.f32 %v947, %v1117
      %v1155 = vadd.f32 %v950, %v1120
      %v1156 = vadd.f32 %v952, %v1122
      %v1157 = vadd.f32 %v955, %v1125
      %v1158 = vadd.f32 %v957, %v1127
      %v1159 = vld [vmem:[#allocation2 + $0x8] sm:$0xe]
      %v1160 = vld [vmem:[#allocation2 + $0xc] sm:$0xf]
      %v1161 = vld [vmem:[#allocation2 + $0x10] sm:$0xf]
      %v1162 = vld [vmem:[#allocation2 + $0x14] sm:$0xf]
      %v1163 = vld [vmem:[#allocation2 + $0x18] sm:$0xf]
      %v1164 = vld [vmem:[#allocation2 + $0x1c] sm:$0xf]
      %v1165 = vld [vmem:[#allocation2 + $0x20] sm:$0xf]
      %v1166 = vld [vmem:[#allocation2 + $0x24] sm:$0xf]
      %v1167 = vld [vmem:[#allocation2 + $0x28] sm:$0xf]
      %v1168 = vld [vmem:[#allocation2 + $0x2c] sm:$0xf]
      %v1169 = vld [vmem:[#allocation2 + $0x30] sm:$0xf]
      %v1170 = vld [vmem:[#allocation2 + $0x34] sm:$0xf]
      %v1171 = vld [vmem:[#allocation2 + $0x38] sm:$0xf]
      %v1172 = vld [vmem:[#allocation2 + $0x3c] sm:$0xf]
      %v1173 = vld [vmem:[#allocation2 + $0x40] sm:$0xf]
      %v1174 = vld [vmem:[#allocation2 + $0x44] sm:$0xf]
      %v1175 = vld [vmem:[#allocation2 + $0x48] sm:$0xf]
      %v1176 = vld [vmem:[#allocation2 + $0x4c] sm:$0xf]
      %v1177 = vld [vmem:[#allocation2 + $0x50] sm:$0xf]
      %v1178 = vld [vmem:[#allocation2 + $0x54] sm:$0xf]
      %v1179 = vld [vmem:[#allocation2 + $0x58] sm:$0xf]
      %v1180 = vld [vmem:[#allocation2 + $0x5c] sm:$0xf]
      %v1181 = vld [vmem:[#allocation2 + $0x60] sm:$0xf]
      %v1182 = vld [vmem:[#allocation2 + $0x64] sm:$0xf]
      %v1183 = vld [vmem:[#allocation2 + $0x68] sm:$0xf]
      %v1184 = vld [vmem:[#allocation2 + $0x6c] sm:$0xf]
      %v1185 = vld [vmem:[#allocation2 + $0x70] sm:$0xf]
      %v1186 = vld [vmem:[#allocation2 + $0x74] sm:$0xf]
      %v1187 = vld [vmem:[#allocation2 + $0x78] sm:$0xf]
      %v1188 = vld [vmem:[#allocation2 + $0x7c] sm:$0xf]
      %v1189 = vld [vmem:[#allocation2 + $0x80] sm:$0x1]
      %s1190 = scalar_lea.vmem %s2, 12
      %v1191 = vld [vmem:[%s1190] sm:$0xf]
      %v1223 = vunpack.c.l.b16 %v1159
      %v1224 = vunpack.c.l.b16 %v1160
      %v1225 = vunpack.c.l.b16 %v1161
      %v1226 = vunpack.c.l.b16 %v1162
      %v1227 = vunpack.c.l.b16 %v1163
      %v1228 = vunpack.c.l.b16 %v1164
      %v1229 = vunpack.c.l.b16 %v1165
      %v1230 = vunpack.c.l.b16 %v1166
      %v1231 = vunpack.c.l.b16 %v1167
      %v1232 = vunpack.c.l.b16 %v1168
      %v1233 = vunpack.c.l.b16 %v1169
      %v1234 = vunpack.c.l.b16 %v1170
      %v1235 = vunpack.c.l.b16 %v1171
      %v1236 = vunpack.c.l.b16 %v1172
      %v1237 = vunpack.c.l.b16 %v1173
      %v1238 = vunpack.c.l.b16 %v1174
      %v1239 = vunpack.c.l.b16 %v1175
      %v1240 = vunpack.c.l.b16 %v1176
      %v1241 = vunpack.c.l.b16 %v1177
      %v1242 = vunpack.c.l.b16 %v1178
      %v1243 = vunpack.c.l.b16 %v1179
      %v1244 = vunpack.c.l.b16 %v1180
      %v1245 = vunpack.c.l.b16 %v1181
      %v1246 = vunpack.c.l.b16 %v1182
      %v1247 = vunpack.c.l.b16 %v1183
      %v1248 = vunpack.c.l.b16 %v1184
      %v1249 = vunpack.c.l.b16 %v1185
      %v1250 = vunpack.c.l.b16 %v1186
      %v1251 = vunpack.c.l.b16 %v1187
      %v1252 = vunpack.c.l.b16 %v1188
      %v1253 = vunpack.c.l.b16 %v1189
      %v1254 = vpack.c.b16 %v1224, %v1223
      %v1255 = vpack.c.b16 %v1226, %v1225
      %v1256 = vpack.c.b16 %v1228, %v1227
      %v1257 = vpack.c.b16 %v1230, %v1229
      %v1258 = vpack.c.b16 %v1232, %v1231
      %v1259 = vpack.c.b16 %v1234, %v1233
      %v1260 = vpack.c.b16 %v1236, %v1235
      %v1261 = vpack.c.b16 %v1238, %v1237
      %v1262 = vpack.c.b16 %v1240, %v1239
      %v1263 = vpack.c.b16 %v1242, %v1241
      %v1264 = vpack.c.b16 %v1244, %v1243
      %v1265 = vpack.c.b16 %v1246, %v1245
      %v1266 = vpack.c.b16 %v1248, %v1247
      %v1267 = vpack.c.b16 %v1250, %v1249
      %v1268 = vpack.c.b16 %v1252, %v1251
      %v1269 = vpack.c.b16 %v1253, %v1253
      %v1270 = vrot.slane %v1254, 1
      %v1271 = vrot.slane %v1255, 1
      %v1272 = vsel %vm965, %v1270, %v1271
      %v1273 = vrot.slane %v1256, 1
      %v1274 = vsel %vm965, %v1271, %v1273
      %v1275 = vrot.slane %v1257, 1
      %v1276 = vsel %vm965, %v1273, %v1275
      %v1277 = vrot.slane %v1258, 1
      %v1278 = vsel %vm965, %v1275, %v1277
      %v1279 = vrot.slane %v1259, 1
      %v1280 = vsel %vm965, %v1277, %v1279
      %v1281 = vrot.slane %v1260, 1
      %v1282 = vsel %vm965, %v1279, %v1281
      %v1283 = vrot.slane %v1261, 1
      %v1284 = vsel %vm965, %v1281, %v1283
      %v1285 = vrot.slane %v1262, 1
      %v1286 = vsel %vm965, %v1283, %v1285
      %v1287 = vrot.slane %v1263, 1
      %v1288 = vsel %vm965, %v1285, %v1287
      %v1289 = vrot.slane %v1264, 1
      %v1290 = vsel %vm965, %v1287, %v1289
      %v1291 = vrot.slane %v1265, 1
      %v1292 = vsel %vm965, %v1289, %v1291
      %v1293 = vrot.slane %v1266, 1
      %v1294 = vsel %vm965, %v1291, %v1293
      %v1295 = vrot.slane %v1267, 1
      %v1296 = vsel %vm965, %v1293, %v1295
      %v1297 = vrot.slane %v1268, 1
      %v1298 = vsel %vm965, %v1295, %v1297
      %v1299 = vrot.slane %v1269, 1
      %v1300 = vsel %vm965, %v1297, %v1299
      %v1302 = vsel %vm708, %v1272, 0
      %v1305 = vsel %vm708, %v1274, 0
      %v1308 = vsel %vm708, %v1276, 0
      %v1311 = vsel %vm708, %v1278, 0
      %v1314 = vsel %vm708, %v1280, 0
      %v1317 = vsel %vm708, %v1282, 0
      %v1320 = vsel %vm708, %v1284, 0
      %v1323 = vsel %vm708, %v1286, 0
      %v1326 = vsel %vm708, %v1288, 0
      %v1329 = vsel %vm708, %v1290, 0
      %v1332 = vsel %vm708, %v1292, 0
      %v1335 = vsel %vm708, %v1294, 0
      %v1338 = vsel %vm708, %v1296, 0
      %v1341 = vsel %vm708, %v1298, 0
      %v1344 = vsel %vm708, %v1300, 0
      %v1347 = vsel %vm754, %v1191, 0
      %1349 = vmatpush.bf16.msra.mxu0 0
      %1350 = vmatpush.bf16.msra.mxu0 0
      %1351 = vmatpush.bf16.msra.mxu0 0
      %1352 = vmatpush.bf16.msra.mxu0 0
      %1353 = vmatpush.bf16.msra.mxu0 0
      %1354 = vmatpush.bf16.msra.mxu0 0
      %1355 = vmatpush.bf16.msra.mxu0 0
      %1356 = vmatpush.bf16.msra.mxu0 %v1347
      %1357 = vmatmul.bf16.gmra.mxu0 %v1302
      %v1358 = vpop.f32.mrf.mxu0
      %v1359 = vadd.f32 0.0, %v1358
      %v1360 = vpop.f32.mrf.mxu0
      %v1361 = vadd.f32 0.0, %v1360
      %1362 = vmatmul.bf16.gmra.mxu0 %v1305
      %v1363 = vpop.f32.mrf.mxu0
      %v1364 = vadd.f32 0.0, %v1363
      %v1365 = vpop.f32.mrf.mxu0
      %v1366 = vadd.f32 0.0, %v1365
      %1367 = vmatmul.bf16.gmra.mxu0 %v1308
      %v1368 = vpop.f32.mrf.mxu0
      %v1369 = vadd.f32 0.0, %v1368
      %v1370 = vpop.f32.mrf.mxu0
      %v1371 = vadd.f32 0.0, %v1370
      %1372 = vmatmul.bf16.gmra.mxu0 %v1311
      %v1373 = vpop.f32.mrf.mxu0
      %v1374 = vadd.f32 0.0, %v1373
      %v1375 = vpop.f32.mrf.mxu0
      %v1376 = vadd.f32 0.0, %v1375
      %1377 = vmatmul.bf16.gmra.mxu0 %v1314
      %v1378 = vpop.f32.mrf.mxu0
      %v1379 = vadd.f32 0.0, %v1378
      %v1380 = vpop.f32.mrf.mxu0
      %v1381 = vadd.f32 0.0, %v1380
      %1382 = vmatmul.bf16.gmra.mxu0 %v1317
      %v1383 = vpop.f32.mrf.mxu0
      %v1384 = vadd.f32 0.0, %v1383
      %v1385 = vpop.f32.mrf.mxu0
      %v1386 = vadd.f32 0.0, %v1385
      %1387 = vmatmul.bf16.gmra.mxu0 %v1320
      %v1388 = vpop.f32.mrf.mxu0
      %v1389 = vadd.f32 0.0, %v1388
      %v1390 = vpop.f32.mrf.mxu0
      %v1391 = vadd.f32 0.0, %v1390
      %1392 = vmatmul.bf16.gmra.mxu0 %v1323
      %v1393 = vpop.f32.mrf.mxu0
      %v1394 = vadd.f32 0.0, %v1393
      %v1395 = vpop.f32.mrf.mxu0
      %v1396 = vadd.f32 0.0, %v1395
      %1397 = vmatmul.bf16.gmra.mxu0 %v1326
      %v1398 = vpop.f32.mrf.mxu0
      %v1399 = vadd.f32 0.0, %v1398
      %v1400 = vpop.f32.mrf.mxu0
      %v1401 = vadd.f32 0.0, %v1400
      %1402 = vmatmul.bf16.gmra.mxu0 %v1329
      %v1403 = vpop.f32.mrf.mxu0
      %v1404 = vadd.f32 0.0, %v1403
      %v1405 = vpop.f32.mrf.mxu0
      %v1406 = vadd.f32 0.0, %v1405
      %1407 = vmatmul.bf16.gmra.mxu0 %v1332
      %v1408 = vpop.f32.mrf.mxu0
      %v1409 = vadd.f32 0.0, %v1408
      %v1410 = vpop.f32.mrf.mxu0
      %v1411 = vadd.f32 0.0, %v1410
      %1412 = vmatmul.bf16.gmra.mxu0 %v1335
      %v1413 = vpop.f32.mrf.mxu0
      %v1414 = vadd.f32 0.0, %v1413
      %v1415 = vpop.f32.mrf.mxu0
      %v1416 = vadd.f32 0.0, %v1415
      %1417 = vmatmul.bf16.gmra.mxu0 %v1338
      %v1418 = vpop.f32.mrf.mxu0
      %v1419 = vadd.f32 0.0, %v1418
      %v1420 = vpop.f32.mrf.mxu0
      %v1421 = vadd.f32 0.0, %v1420
      %1422 = vmatmul.bf16.gmra.mxu0 %v1341
      %v1423 = vpop.f32.mrf.mxu0
      %v1424 = vadd.f32 0.0, %v1423
      %v1425 = vpop.f32.mrf.mxu0
      %v1426 = vadd.f32 0.0, %v1425
      %1427 = vmatmul.bf16.gmra.mxu0 %v1344
      %v1428 = vpop.f32.mrf.mxu0
      %v1429 = vadd.f32 0.0, %v1428
      %v1430 = vpop.f32.mrf.mxu0
      %v1431 = vadd.f32 0.0, %v1430
      %1432 = vdwg.mxu0
      %v1433 = vadd.f32 %v1129, %v1359
      %v1434 = vadd.f32 %v1130, %v1361
      %v1435 = vadd.f32 %v1131, %v1364
      %v1436 = vadd.f32 %v1132, %v1366
      %v1437 = vadd.f32 %v1133, %v1369
      %v1438 = vadd.f32 %v1134, %v1371
      %v1439 = vadd.f32 %v1135, %v1374
      %v1440 = vadd.f32 %v1136, %v1376
      %v1441 = vadd.f32 %v1137, %v1379
      %v1442 = vadd.f32 %v1138, %v1381
      %v1443 = vadd.f32 %v1139, %v1384
      %v1444 = vadd.f32 %v1140, %v1386
      %v1445 = vadd.f32 %v1141, %v1389
      %v1446 = vadd.f32 %v1142, %v1391
      %v1447 = vadd.f32 %v1143, %v1394
      %v1448 = vadd.f32 %v1144, %v1396
      %v1449 = vadd.f32 %v1145, %v1399
      %v1450 = vadd.f32 %v1146, %v1401
      %v1451 = vadd.f32 %v1147, %v1404
      %v1452 = vadd.f32 %v1148, %v1406
      %v1453 = vadd.f32 %v1149, %v1409
      %v1454 = vadd.f32 %v1150, %v1411
      %v1455 = vadd.f32 %v1151, %v1414
      %v1456 = vadd.f32 %v1152, %v1416
      %v1457 = vadd.f32 %v1153, %v1419
      %v1458 = vadd.f32 %v1154, %v1421
      %v1459 = vadd.f32 %v1155, %v1424
      %v1460 = vadd.f32 %v1156, %v1426
      %v1461 = vadd.f32 %v1157, %v1429
      %v1462 = vadd.f32 %v1158, %v1431
      %v1463 = vld [vmem:[#allocation2 + $0x80] sm:$0x3]
      %s1464 = scalar_lea.vmem %s2, 16
      %v1465 = vld [vmem:[%s1464] sm:$0xf]
      %v1467 = vunpack.c.l.b16 %v1463
      %v1468 = vpack.c.b16 %v1467, %v1467
      %vm1469 = vsmask.f32 6400
      %v1471 = vshrl.u32 %v1254, 16
      %v1473 = vrot.slane %v1471, 1
      %v1474 = vshll.u32 %v1254, 16
      %v1476 = vrot.slane %v1474, 2
      %v1477 = vor.u32 %v1473, %v1476
      %v1479 = vshrl.u32 %v1255, 16
      %v1481 = vrot.slane %v1479, 1
      %v1482 = vshll.u32 %v1255, 16
      %v1484 = vrot.slane %v1482, 2
      %v1485 = vor.u32 %v1481, %v1484
      %v1486 = vsel %vm1469, %v1477, %v1485
      %v1488 = vshrl.u32 %v1256, 16
      %v1490 = vrot.slane %v1488, 1
      %v1491 = vshll.u32 %v1256, 16
      %v1493 = vrot.slane %v1491, 2
      %v1494 = vor.u32 %v1490, %v1493
      %v1495 = vsel %vm1469, %v1485, %v1494
      %v1497 = vshrl.u32 %v1257, 16
      %v1499 = vrot.slane %v1497, 1
      %v1500 = vshll.u32 %v1257, 16
      %v1502 = vrot.slane %v1500, 2
      %v1503 = vor.u32 %v1499, %v1502
      %v1504 = vsel %vm1469, %v1494, %v1503
      %v1506 = vshrl.u32 %v1258, 16
      %v1508 = vrot.slane %v1506, 1
      %v1509 = vshll.u32 %v1258, 16
      %v1511 = vrot.slane %v1509, 2
      %v1512 = vor.u32 %v1508, %v1511
      %v1513 = vsel %vm1469, %v1503, %v1512
      %v1515 = vshrl.u32 %v1259, 16
      %v1517 = vrot.slane %v1515, 1
      %v1518 = vshll.u32 %v1259, 16
      %v1520 = vrot.slane %v1518, 2
      %v1521 = vor.u32 %v1517, %v1520
      %v1522 = vsel %vm1469, %v1512, %v1521
      %v1524 = vshrl.u32 %v1260, 16
      %v1526 = vrot.slane %v1524, 1
      %v1527 = vshll.u32 %v1260, 16
      %v1529 = vrot.slane %v1527, 2
      %v1530 = vor.u32 %v1526, %v1529
      %v1531 = vsel %vm1469, %v1521, %v1530
      %v1533 = vshrl.u32 %v1261, 16
      %v1535 = vrot.slane %v1533, 1
      %v1536 = vshll.u32 %v1261, 16
      %v1538 = vrot.slane %v1536, 2
      %v1539 = vor.u32 %v1535, %v1538
      %v1540 = vsel %vm1469, %v1530, %v1539
      %v1542 = vshrl.u32 %v1262, 16
      %v1544 = vrot.slane %v1542, 1
      %v1545 = vshll.u32 %v1262, 16
      %v1547 = vrot.slane %v1545, 2
      %v1548 = vor.u32 %v1544, %v1547
      %v1549 = vsel %vm1469, %v1539, %v1548
      %v1551 = vshrl.u32 %v1263, 16
      %v1553 = vrot.slane %v1551, 1
      %v1554 = vshll.u32 %v1263, 16
      %v1556 = vrot.slane %v1554, 2
      %v1557 = vor.u32 %v1553, %v1556
      %v1558 = vsel %vm1469, %v1548, %v1557
      %v1560 = vshrl.u32 %v1264, 16
      %v1562 = vrot.slane %v1560, 1
      %v1563 = vshll.u32 %v1264, 16
      %v1565 = vrot.slane %v1563, 2
      %v1566 = vor.u32 %v1562, %v1565
      %v1567 = vsel %vm1469, %v1557, %v1566
      %v1569 = vshrl.u32 %v1265, 16
      %v1571 = vrot.slane %v1569, 1
      %v1572 = vshll.u32 %v1265, 16
      %v1574 = vrot.slane %v1572, 2
      %v1575 = vor.u32 %v1571, %v1574
      %v1576 = vsel %vm1469, %v1566, %v1575
      %v1578 = vshrl.u32 %v1266, 16
      %v1580 = vrot.slane %v1578, 1
      %v1581 = vshll.u32 %v1266, 16
      %v1583 = vrot.slane %v1581, 2
      %v1584 = vor.u32 %v1580, %v1583
      %v1585 = vsel %vm1469, %v1575, %v1584
      %v1587 = vshrl.u32 %v1267, 16
      %v1589 = vrot.slane %v1587, 1
      %v1590 = vshll.u32 %v1267, 16
      %v1592 = vrot.slane %v1590, 2
      %v1593 = vor.u32 %v1589, %v1592
      %v1594 = vsel %vm1469, %v1584, %v1593
      %v1596 = vshrl.u32 %v1268, 16
      %v1598 = vrot.slane %v1596, 1
      %v1599 = vshll.u32 %v1268, 16
      %v1601 = vrot.slane %v1599, 2
      %v1602 = vor.u32 %v1598, %v1601
      %v1603 = vsel %vm1469, %v1593, %v1602
      %v1605 = vshrl.u32 %v1468, 16
      %v1607 = vrot.slane %v1605, 1
      %v1608 = vshll.u32 %v1468, 16
      %v1610 = vrot.slane %v1608, 2
      %v1611 = vor.u32 %v1607, %v1610
      %v1612 = vsel %vm1469, %v1602, %v1611
      %v1614 = vsel %vm708, %v1486, 0
      %v1617 = vsel %vm708, %v1495, 0
      %v1620 = vsel %vm708, %v1504, 0
      %v1623 = vsel %vm708, %v1513, 0
      %v1626 = vsel %vm708, %v1522, 0
      %v1629 = vsel %vm708, %v1531, 0
      %v1632 = vsel %vm708, %v1540, 0
      %v1635 = vsel %vm708, %v1549, 0
      %v1638 = vsel %vm708, %v1558, 0
      %v1641 = vsel %vm708, %v1567, 0
      %v1644 = vsel %vm708, %v1576, 0
      %v1647 = vsel %vm708, %v1585, 0
      %v1650 = vsel %vm708, %v1594, 0
      %v1653 = vsel %vm708, %v1603, 0
      %v1656 = vsel %vm708, %v1612, 0
      %v1659 = vsel %vm754, %v1465, 0
      %1661 = vmatpush.bf16.msra.mxu0 0
      %1662 = vmatpush.bf16.msra.mxu0 0
      %1663 = vmatpush.bf16.msra.mxu0 0
      %1664 = vmatpush.bf16.msra.mxu0 0
      %1665 = vmatpush.bf16.msra.mxu0 0
      %1666 = vmatpush.bf16.msra.mxu0 0
      %1667 = vmatpush.bf16.msra.mxu0 0
      %1668 = vmatpush.bf16.msra.mxu0 %v1659
      %1669 = vmatmul.bf16.gmra.mxu0 %v1614
      %v1670 = vpop.f32.mrf.mxu0
      %v1671 = vadd.f32 0.0, %v1670
      %v1672 = vpop.f32.mrf.mxu0
      %v1673 = vadd.f32 0.0, %v1672
      %1674 = vmatmul.bf16.gmra.mxu0 %v1617
      %v1675 = vpop.f32.mrf.mxu0
      %v1676 = vadd.f32 0.0, %v1675
      %v1677 = vpop.f32.mrf.mxu0
      %v1678 = vadd.f32 0.0, %v1677
      %1679 = vmatmul.bf16.gmra.mxu0 %v1620
      %v1680 = vpop.f32.mrf.mxu0
      %v1681 = vadd.f32 0.0, %v1680
      %v1682 = vpop.f32.mrf.mxu0
      %v1683 = vadd.f32 0.0, %v1682
      %1684 = vmatmul.bf16.gmra.mxu0 %v1623
      %v1685 = vpop.f32.mrf.mxu0
      %v1686 = vadd.f32 0.0, %v1685
      %v1687 = vpop.f32.mrf.mxu0
      %v1688 = vadd.f32 0.0, %v1687
      %1689 = vmatmul.bf16.gmra.mxu0 %v1626
      %v1690 = vpop.f32.mrf.mxu0
      %v1691 = vadd.f32 0.0, %v1690
      %v1692 = vpop.f32.mrf.mxu0
      %v1693 = vadd.f32 0.0, %v1692
      %1694 = vmatmul.bf16.gmra.mxu0 %v1629
      %v1695 = vpop.f32.mrf.mxu0
      %v1696 = vadd.f32 0.0, %v1695
      %v1697 = vpop.f32.mrf.mxu0
      %v1698 = vadd.f32 0.0, %v1697
      %1699 = vmatmul.bf16.gmra.mxu0 %v1632
      %v1700 = vpop.f32.mrf.mxu0
      %v1701 = vadd.f32 0.0, %v1700
      %v1702 = vpop.f32.mrf.mxu0
      %v1703 = vadd.f32 0.0, %v1702
      %1704 = vmatmul.bf16.gmra.mxu0 %v1635
      %v1705 = vpop.f32.mrf.mxu0
      %v1706 = vadd.f32 0.0, %v1705
      %v1707 = vpop.f32.mrf.mxu0
      %v1708 = vadd.f32 0.0, %v1707
      %1709 = vmatmul.bf16.gmra.mxu0 %v1638
      %v1710 = vpop.f32.mrf.mxu0
      %v1711 = vadd.f32 0.0, %v1710
      %v1712 = vpop.f32.mrf.mxu0
      %v1713 = vadd.f32 0.0, %v1712
      %1714 = vmatmul.bf16.gmra.mxu0 %v1641
      %v1715 = vpop.f32.mrf.mxu0
      %v1716 = vadd.f32 0.0, %v1715
      %v1717 = vpop.f32.mrf.mxu0
      %v1718 = vadd.f32 0.0, %v1717
      %1719 = vmatmul.bf16.gmra.mxu0 %v1644
      %v1720 = vpop.f32.mrf.mxu0
      %v1721 = vadd.f32 0.0, %v1720
      %v1722 = vpop.f32.mrf.mxu0
      %v1723 = vadd.f32 0.0, %v1722
      %1724 = vmatmul.bf16.gmra.mxu0 %v1647
      %v1725 = vpop.f32.mrf.mxu0
      %v1726 = vadd.f32 0.0, %v1725
      %v1727 = vpop.f32.mrf.mxu0
      %v1728 = vadd.f32 0.0, %v1727
      %1729 = vmatmul.bf16.gmra.mxu0 %v1650
      %v1730 = vpop.f32.mrf.mxu0
      %v1731 = vadd.f32 0.0, %v1730
      %v1732 = vpop.f32.mrf.mxu0
      %v1733 = vadd.f32 0.0, %v1732
      %1734 = vmatmul.bf16.gmra.mxu0 %v1653
      %v1735 = vpop.f32.mrf.mxu0
      %v1736 = vadd.f32 0.0, %v1735
      %v1737 = vpop.f32.mrf.mxu0
      %v1738 = vadd.f32 0.0, %v1737
      %1739 = vmatmul.bf16.gmra.mxu0 %v1656
      %v1740 = vpop.f32.mrf.mxu0
      %v1741 = vadd.f32 0.0, %v1740
      %v1742 = vpop.f32.mrf.mxu0
      %v1743 = vadd.f32 0.0, %v1742
      %1744 = vdwg.mxu0
      %v1745 = vadd.f32 %v1433, %v1671
      %v1746 = vadd.f32 %v1434, %v1673
      %v1747 = vadd.f32 %v1435, %v1676
      %v1748 = vadd.f32 %v1436, %v1678
      %v1749 = vadd.f32 %v1437, %v1681
      %v1750 = vadd.f32 %v1438, %v1683
      %v1751 = vadd.f32 %v1439, %v1686
      %v1752 = vadd.f32 %v1440, %v1688
      %v1753 = vadd.f32 %v1441, %v1691
      %v1754 = vadd.f32 %v1442, %v1693
      %v1755 = vadd.f32 %v1443, %v1696
      %v1756 = vadd.f32 %v1444, %v1698
      %v1757 = vadd.f32 %v1445, %v1701
      %v1758 = vadd.f32 %v1446, %v1703
      %v1759 = vadd.f32 %v1447, %v1706
      %v1760 = vadd.f32 %v1448, %v1708
      %v1761 = vadd.f32 %v1449, %v1711
      %v1762 = vadd.f32 %v1450, %v1713
      %v1763 = vadd.f32 %v1451, %v1716
      %v1764 = vadd.f32 %v1452, %v1718
      %v1765 = vadd.f32 %v1453, %v1721
      %v1766 = vadd.f32 %v1454, %v1723
      %v1767 = vadd.f32 %v1455, %v1726
      %v1768 = vadd.f32 %v1456, %v1728
      %v1769 = vadd.f32 %v1457, %v1731
      %v1770 = vadd.f32 %v1458, %v1733
      %v1771 = vadd.f32 %v1459, %v1736
      %v1772 = vadd.f32 %v1460, %v1738
      %v1773 = vadd.f32 %v1461, %v1741
      %v1774 = vadd.f32 %v1462, %v1743
      %v1775 = vld [vmem:[#allocation2 + $0x8] sm:$0xc]
      %s1776 = scalar_lea.vmem %s2, 20
      %v1777 = vld [vmem:[%s1776] sm:$0xf]
      %v1779 = vunpack.c.l.b16 %v1775
      %v1780 = vpack.c.b16 %v1224, %v1779
      %vm1781 = vcmask 1045504
      %v1782 = vrot.slane %v1780, 2
      %v1783 = vrot.slane %v1255, 2
      %v1784 = vsel %vm1781, %v1782, %v1783
      %v1785 = vrot.slane %v1256, 2
      %v1786 = vsel %vm1781, %v1783, %v1785
      %v1787 = vrot.slane %v1257, 2
      %v1788 = vsel %vm1781, %v1785, %v1787
      %v1789 = vrot.slane %v1258, 2
      %v1790 = vsel %vm1781, %v1787, %v1789
      %v1791 = vrot.slane %v1259, 2
      %v1792 = vsel %vm1781, %v1789, %v1791
      %v1793 = vrot.slane %v1260, 2
      %v1794 = vsel %vm1781, %v1791, %v1793
      %v1795 = vrot.slane %v1261, 2
      %v1796 = vsel %vm1781, %v1793, %v1795
      %v1797 = vrot.slane %v1262, 2
      %v1798 = vsel %vm1781, %v1795, %v1797
      %v1799 = vrot.slane %v1263, 2
      %v1800 = vsel %vm1781, %v1797, %v1799
      %v1801 = vrot.slane %v1264, 2
      %v1802 = vsel %vm1781, %v1799, %v1801
      %v1803 = vrot.slane %v1265, 2
      %v1804 = vsel %vm1781, %v1801, %v1803
      %v1805 = vrot.slane %v1266, 2
      %v1806 = vsel %vm1781, %v1803, %v1805
      %v1807 = vrot.slane %v1267, 2
      %v1808 = vsel %vm1781, %v1805, %v1807
      %v1809 = vrot.slane %v1268, 2
      %v1810 = vsel %vm1781, %v1807, %v1809
      %v1811 = vrot.slane %v1468, 2
      %v1812 = vsel %vm1781, %v1809, %v1811
      %v1814 = vsel %vm708, %v1784, 0
      %v1817 = vsel %vm708, %v1786, 0
      %v1820 = vsel %vm708, %v1788, 0
      %v1823 = vsel %vm708, %v1790, 0
      %v1826 = vsel %vm708, %v1792, 0
      %v1829 = vsel %vm708, %v1794, 0
      %v1832 = vsel %vm708, %v1796, 0
      %v1835 = vsel %vm708, %v1798, 0
      %v1838 = vsel %vm708, %v1800, 0
      %v1841 = vsel %vm708, %v1802, 0
      %v1844 = vsel %vm708, %v1804, 0
      %v1847 = vsel %vm708, %v1806, 0
      %v1850 = vsel %vm708, %v1808, 0
      %v1853 = vsel %vm708, %v1810, 0
      %v1856 = vsel %vm708, %v1812, 0
      %v1859 = vsel %vm754, %v1777, 0
      %1861 = vmatpush.bf16.msra.mxu0 0
      %1862 = vmatpush.bf16.msra.mxu0 0
      %1863 = vmatpush.bf16.msra.mxu0 0
      %1864 = vmatpush.bf16.msra.mxu0 0
      %1865 = vmatpush.bf16.msra.mxu0 0
      %1866 = vmatpush.bf16.msra.mxu0 0
      %1867 = vmatpush.bf16.msra.mxu0 0
      %1868 = vmatpush.bf16.msra.mxu0 %v1859
      %1869 = vmatmul.bf16.gmra.mxu0 %v1814
      %v1870 = vpop.f32.mrf.mxu0
      %v1871 = vadd.f32 0.0, %v1870
      %v1872 = vpop.f32.mrf.mxu0
      %v1873 = vadd.f32 0.0, %v1872
      %1874 = vmatmul.bf16.gmra.mxu0 %v1817
      %v1875 = vpop.f32.mrf.mxu0
      %v1876 = vadd.f32 0.0, %v1875
      %v1877 = vpop.f32.mrf.mxu0
      %v1878 = vadd.f32 0.0, %v1877
      %1879 = vmatmul.bf16.gmra.mxu0 %v1820
      %v1880 = vpop.f32.mrf.mxu0
      %v1881 = vadd.f32 0.0, %v1880
      %v1882 = vpop.f32.mrf.mxu0
      %v1883 = vadd.f32 0.0, %v1882
      %1884 = vmatmul.bf16.gmra.mxu0 %v1823
      %v1885 = vpop.f32.mrf.mxu0
      %v1886 = vadd.f32 0.0, %v1885
      %v1887 = vpop.f32.mrf.mxu0
      %v1888 = vadd.f32 0.0, %v1887
      %1889 = vmatmul.bf16.gmra.mxu0 %v1826
      %v1890 = vpop.f32.mrf.mxu0
      %v1891 = vadd.f32 0.0, %v1890
      %v1892 = vpop.f32.mrf.mxu0
      %v1893 = vadd.f32 0.0, %v1892
      %1894 = vmatmul.bf16.gmra.mxu0 %v1829
      %v1895 = vpop.f32.mrf.mxu0
      %v1896 = vadd.f32 0.0, %v1895
      %v1897 = vpop.f32.mrf.mxu0
      %v1898 = vadd.f32 0.0, %v1897
      %1899 = vmatmul.bf16.gmra.mxu0 %v1832
      %v1900 = vpop.f32.mrf.mxu0
      %v1901 = vadd.f32 0.0, %v1900
      %v1902 = vpop.f32.mrf.mxu0
      %v1903 = vadd.f32 0.0, %v1902
      %1904 = vmatmul.bf16.gmra.mxu0 %v1835
      %v1905 = vpop.f32.mrf.mxu0
      %v1906 = vadd.f32 0.0, %v1905
      %v1907 = vpop.f32.mrf.mxu0
      %v1908 = vadd.f32 0.0, %v1907
      %1909 = vmatmul.bf16.gmra.mxu0 %v1838
      %v1910 = vpop.f32.mrf.mxu0
      %v1911 = vadd.f32 0.0, %v1910
      %v1912 = vpop.f32.mrf.mxu0
      %v1913 = vadd.f32 0.0, %v1912
      %1914 = vmatmul.bf16.gmra.mxu0 %v1841
      %v1915 = vpop.f32.mrf.mxu0
      %v1916 = vadd.f32 0.0, %v1915
      %v1917 = vpop.f32.mrf.mxu0
      %v1918 = vadd.f32 0.0, %v1917
      %1919 = vmatmul.bf16.gmra.mxu0 %v1844
      %v1920 = vpop.f32.mrf.mxu0
      %v1921 = vadd.f32 0.0, %v1920
      %v1922 = vpop.f32.mrf.mxu0
      %v1923 = vadd.f32 0.0, %v1922
      %1924 = vmatmul.bf16.gmra.mxu0 %v1847
      %v1925 = vpop.f32.mrf.mxu0
      %v1926 = vadd.f32 0.0, %v1925
      %v1927 = vpop.f32.mrf.mxu0
      %v1928 = vadd.f32 0.0, %v1927
      %1929 = vmatmul.bf16.gmra.mxu0 %v1850
      %v1930 = vpop.f32.mrf.mxu0
      %v1931 = vadd.f32 0.0, %v1930
      %v1932 = vpop.f32.mrf.mxu0
      %v1933 = vadd.f32 0.0, %v1932
      %1934 = vmatmul.bf16.gmra.mxu0 %v1853
      %v1935 = vpop.f32.mrf.mxu0
      %v1936 = vadd.f32 0.0, %v1935
      %v1937 = vpop.f32.mrf.mxu0
      %v1938 = vadd.f32 0.0, %v1937
      %1939 = vmatmul.bf16.gmra.mxu0 %v1856
      %v1940 = vpop.f32.mrf.mxu0
      %v1941 = vadd.f32 0.0, %v1940
      %v1942 = vpop.f32.mrf.mxu0
      %v1943 = vadd.f32 0.0, %v1942
      %1944 = vdwg.mxu0
      %v1945 = vadd.f32 %v1745, %v1871
      %v1946 = vadd.f32 %v1746, %v1873
      %v1947 = vadd.f32 %v1747, %v1876
      %v1948 = vadd.f32 %v1748, %v1878
      %v1949 = vadd.f32 %v1749, %v1881
      %v1950 = vadd.f32 %v1750, %v1883
      %v1951 = vadd.f32 %v1751, %v1886
      %v1952 = vadd.f32 %v1752, %v1888
      %v1953 = vadd.f32 %v1753, %v1891
      %v1954 = vadd.f32 %v1754, %v1893
      %v1955 = vadd.f32 %v1755, %v1896
      %v1956 = vadd.f32 %v1756, %v1898
      %v1957 = vadd.f32 %v1757, %v1901
      %v1958 = vadd.f32 %v1758, %v1903
      %v1959 = vadd.f32 %v1759, %v1906
      %v1960 = vadd.f32 %v1760, %v1908
      %v1961 = vadd.f32 %v1761, %v1911
      %v1962 = vadd.f32 %v1762, %v1913
      %v1963 = vadd.f32 %v1763, %v1916
      %v1964 = vadd.f32 %v1764, %v1918
      %v1965 = vadd.f32 %v1765, %v1921
      %v1966 = vadd.f32 %v1766, %v1923
      %v1967 = vadd.f32 %v1767, %v1926
      %v1968 = vadd.f32 %v1768, %v1928
      %v1969 = vadd.f32 %v1769, %v1931
      %v1970 = vadd.f32 %v1770, %v1933
      %v1971 = vadd.f32 %v1771, %v1936
      %v1972 = vadd.f32 %v1772, %v1938
      %v1973 = vadd.f32 %v1773, %v1941
      %v1974 = vadd.f32 %v1774, %v1943
      %v1975 = vld [vmem:[#allocation2 + $0x10] sm:$0xc]
      %v1976 = vld [vmem:[#allocation2 + $0x14] sm:$0xf]
      %v1977 = vld [vmem:[#allocation2 + $0x18] sm:$0xf]
      %v1978 = vld [vmem:[#allocation2 + $0x1c] sm:$0xf]
      %v1979 = vld [vmem:[#allocation2 + $0x20] sm:$0xf]
      %v1980 = vld [vmem:[#allocation2 + $0x24] sm:$0xf]
      %v1981 = vld [vmem:[#allocation2 + $0x28] sm:$0xf]
      %v1982 = vld [vmem:[#allocation2 + $0x2c] sm:$0xf]
      %v1983 = vld [vmem:[#allocation2 + $0x30] sm:$0xf]
      %v1984 = vld [vmem:[#allocation2 + $0x34] sm:$0xf]
      %v1985 = vld [vmem:[#allocation2 + $0x38] sm:$0xf]
      %v1986 = vld [vmem:[#allocation2 + $0x3c] sm:$0xf]
      %v1987 = vld [vmem:[#allocation2 + $0x40] sm:$0xf]
      %v1988 = vld [vmem:[#allocation2 + $0x44] sm:$0xf]
      %v1989 = vld [vmem:[#allocation2 + $0x48] sm:$0xf]
      %v1990 = vld [vmem:[#allocation2 + $0x4c] sm:$0xf]
      %v1991 = vld [vmem:[#allocation2 + $0x50] sm:$0xf]
      %v1992 = vld [vmem:[#allocation2 + $0x54] sm:$0xf]
      %v1993 = vld [vmem:[#allocation2 + $0x58] sm:$0xf]
      %v1994 = vld [vmem:[#allocation2 + $0x5c] sm:$0xf]
      %v1995 = vld [vmem:[#allocation2 + $0x60] sm:$0xf]
      %v1996 = vld [vmem:[#allocation2 + $0x64] sm:$0xf]
      %v1997 = vld [vmem:[#allocation2 + $0x68] sm:$0xf]
      %v1998 = vld [vmem:[#allocation2 + $0x6c] sm:$0xf]
      %v1999 = vld [vmem:[#allocation2 + $0x70] sm:$0xf]
      %v2000 = vld [vmem:[#allocation2 + $0x74] sm:$0xf]
      %v2001 = vld [vmem:[#allocation2 + $0x78] sm:$0xf]
      %v2002 = vld [vmem:[#allocation2 + $0x7c] sm:$0xf]
      %v2003 = vld [vmem:[#allocation2 + $0x80] sm:$0xf]
      %v2004 = vld [vmem:[#allocation2 + $0x84] sm:$0xf]
      %v2005 = vld [vmem:[#allocation2 + $0x88] sm:$0x3]
      %s2006 = scalar_lea.vmem %s2, 24
      %v2007 = vld [vmem:[%s2006] sm:$0xf]
      %v2039 = vunpack.c.l.b16 %v1975
      %v2040 = vunpack.c.l.b16 %v1976
      %v2041 = vunpack.c.l.b16 %v1977
      %v2042 = vunpack.c.l.b16 %v1978
      %v2043 = vunpack.c.l.b16 %v1979
      %v2044 = vunpack.c.l.b16 %v1980
      %v2045 = vunpack.c.l.b16 %v1981
      %v2046 = vunpack.c.l.b16 %v1982
      %v2047 = vunpack.c.l.b16 %v1983
      %v2048 = vunpack.c.l.b16 %v1984
      %v2049 = vunpack.c.l.b16 %v1985
      %v2050 = vunpack.c.l.b16 %v1986
      %v2051 = vunpack.c.l.b16 %v1987
      %v2052 = vunpack.c.l.b16 %v1988
      %v2053 = vunpack.c.l.b16 %v1989
      %v2054 = vunpack.c.l.b16 %v1990
      %v2055 = vunpack.c.l.b16 %v1991
      %v2056 = vunpack.c.l.b16 %v1992
      %v2057 = vunpack.c.l.b16 %v1993
      %v2058 = vunpack.c.l.b16 %v1994
      %v2059 = vunpack.c.l.b16 %v1995
      %v2060 = vunpack.c.l.b16 %v1996
      %v2061 = vunpack.c.l.b16 %v1997
      %v2062 = vunpack.c.l.b16 %v1998
      %v2063 = vunpack.c.l.b16 %v1999
      %v2064 = vunpack.c.l.b16 %v2000
      %v2065 = vunpack.c.l.b16 %v2001
      %v2066 = vunpack.c.l.b16 %v2002
      %v2067 = vunpack.c.l.b16 %v2003
      %v2068 = vunpack.c.l.b16 %v2004
      %v2069 = vunpack.c.l.b16 %v2005
      %v2070 = vpack.c.b16 %v2040, %v2039
      %v2071 = vpack.c.b16 %v2042, %v2041
      %v2072 = vpack.c.b16 %v2044, %v2043
      %v2073 = vpack.c.b16 %v2046, %v2045
      %v2074 = vpack.c.b16 %v2048, %v2047
      %v2075 = vpack.c.b16 %v2050, %v2049
      %v2076 = vpack.c.b16 %v2052, %v2051
      %v2077 = vpack.c.b16 %v2054, %v2053
      %v2078 = vpack.c.b16 %v2056, %v2055
      %v2079 = vpack.c.b16 %v2058, %v2057
      %v2080 = vpack.c.b16 %v2060, %v2059
      %v2081 = vpack.c.b16 %v2062, %v2061
      %v2082 = vpack.c.b16 %v2064, %v2063
      %v2083 = vpack.c.b16 %v2066, %v2065
      %v2084 = vpack.c.b16 %v2068, %v2067
      %v2085 = vpack.c.b16 %v2069, %v2069
      %v2086 = vrot.slane %v2070, 2
      %v2087 = vrot.slane %v2071, 2
      %v2088 = vsel %vm1781, %v2086, %v2087
      %v2089 = vrot.slane %v2072, 2
      %v2090 = vsel %vm1781, %v2087, %v2089
      %v2091 = vrot.slane %v2073, 2
      %v2092 = vsel %vm1781, %v2089, %v2091
      %v2093 = vrot.slane %v2074, 2
      %v2094 = vsel %vm1781, %v2091, %v2093
      %v2095 = vrot.slane %v2075, 2
      %v2096 = vsel %vm1781, %v2093, %v2095
      %v2097 = vrot.slane %v2076, 2
      %v2098 = vsel %vm1781, %v2095, %v2097
      %v2099 = vrot.slane %v2077, 2
      %v2100 = vsel %vm1781, %v2097, %v2099
      %v2101 = vrot.slane %v2078, 2
      %v2102 = vsel %vm1781, %v2099, %v2101
      %v2103 = vrot.slane %v2079, 2
      %v2104 = vsel %vm1781, %v2101, %v2103
      %v2105 = vrot.slane %v2080, 2
      %v2106 = vsel %vm1781, %v2103, %v2105
      %v2107 = vrot.slane %v2081, 2
      %v2108 = vsel %vm1781, %v2105, %v2107
      %v2109 = vrot.slane %v2082, 2
      %v2110 = vsel %vm1781, %v2107, %v2109
      %v2111 = vrot.slane %v2083, 2
      %v2112 = vsel %vm1781, %v2109, %v2111
      %v2113 = vrot.slane %v2084, 2
      %v2114 = vsel %vm1781, %v2111, %v2113
      %v2115 = vrot.slane %v2085, 2
      %v2116 = vsel %vm1781, %v2113, %v2115
      %v2118 = vsel %vm708, %v2088, 0
      %v2121 = vsel %vm708, %v2090, 0
      %v2124 = vsel %vm708, %v2092, 0
      %v2127 = vsel %vm708, %v2094, 0
      %v2130 = vsel %vm708, %v2096, 0
      %v2133 = vsel %vm708, %v2098, 0
      %v2136 = vsel %vm708, %v2100, 0
      %v2139 = vsel %vm708, %v2102, 0
      %v2142 = vsel %vm708, %v2104, 0
      %v2145 = vsel %vm708, %v2106, 0
      %v2148 = vsel %vm708, %v2108, 0
      %v2151 = vsel %vm708, %v2110, 0
      %v2154 = vsel %vm708, %v2112, 0
      %v2157 = vsel %vm708, %v2114, 0
      %v2160 = vsel %vm708, %v2116, 0
      %v2163 = vsel %vm754, %v2007, 0
      %2165 = vmatpush.bf16.msra.mxu0 0
      %2166 = vmatpush.bf16.msra.mxu0 0
      %2167 = vmatpush.bf16.msra.mxu0 0
      %2168 = vmatpush.bf16.msra.mxu0 0
      %2169 = vmatpush.bf16.msra.mxu0 0
      %2170 = vmatpush.bf16.msra.mxu0 0
      %2171 = vmatpush.bf16.msra.mxu0 0
      %2172 = vmatpush.bf16.msra.mxu0 %v2163
      %2173 = vmatmul.bf16.gmra.mxu0 %v2118
      %v2174 = vpop.f32.mrf.mxu0
      %v2175 = vadd.f32 0.0, %v2174
      %v2176 = vpop.f32.mrf.mxu0
      %v2177 = vadd.f32 0.0, %v2176
      %2178 = vmatmul.bf16.gmra.mxu0 %v2121
      %v2179 = vpop.f32.mrf.mxu0
      %v2180 = vadd.f32 0.0, %v2179
      %v2181 = vpop.f32.mrf.mxu0
      %v2182 = vadd.f32 0.0, %v2181
      %2183 = vmatmul.bf16.gmra.mxu0 %v2124
      %v2184 = vpop.f32.mrf.mxu0
      %v2185 = vadd.f32 0.0, %v2184
      %v2186 = vpop.f32.mrf.mxu0
      %v2187 = vadd.f32 0.0, %v2186
      %2188 = vmatmul.bf16.gmra.mxu0 %v2127
      %v2189 = vpop.f32.mrf.mxu0
      %v2190 = vadd.f32 0.0, %v2189
      %v2191 = vpop.f32.mrf.mxu0
      %v2192 = vadd.f32 0.0, %v2191
      %2193 = vmatmul.bf16.gmra.mxu0 %v2130
      %v2194 = vpop.f32.mrf.mxu0
      %v2195 = vadd.f32 0.0, %v2194
      %v2196 = vpop.f32.mrf.mxu0
      %v2197 = vadd.f32 0.0, %v2196
      %2198 = vmatmul.bf16.gmra.mxu0 %v2133
      %v2199 = vpop.f32.mrf.mxu0
      %v2200 = vadd.f32 0.0, %v2199
      %v2201 = vpop.f32.mrf.mxu0
      %v2202 = vadd.f32 0.0, %v2201
      %2203 = vmatmul.bf16.gmra.mxu0 %v2136
      %v2204 = vpop.f32.mrf.mxu0
      %v2205 = vadd.f32 0.0, %v2204
      %v2206 = vpop.f32.mrf.mxu0
      %v2207 = vadd.f32 0.0, %v2206
      %2208 = vmatmul.bf16.gmra.mxu0 %v2139
      %v2209 = vpop.f32.mrf.mxu0
      %v2210 = vadd.f32 0.0, %v2209
      %v2211 = vpop.f32.mrf.mxu0
      %v2212 = vadd.f32 0.0, %v2211
      %2213 = vmatmul.bf16.gmra.mxu0 %v2142
      %v2214 = vpop.f32.mrf.mxu0
      %v2215 = vadd.f32 0.0, %v2214
      %v2216 = vpop.f32.mrf.mxu0
      %v2217 = vadd.f32 0.0, %v2216
      %2218 = vmatmul.bf16.gmra.mxu0 %v2145
      %v2219 = vpop.f32.mrf.mxu0
      %v2220 = vadd.f32 0.0, %v2219
      %v2221 = vpop.f32.mrf.mxu0
      %v2222 = vadd.f32 0.0, %v2221
      %2223 = vmatmul.bf16.gmra.mxu0 %v2148
      %v2224 = vpop.f32.mrf.mxu0
      %v2225 = vadd.f32 0.0, %v2224
      %v2226 = vpop.f32.mrf.mxu0
      %v2227 = vadd.f32 0.0, %v2226
      %2228 = vmatmul.bf16.gmra.mxu0 %v2151
      %v2229 = vpop.f32.mrf.mxu0
      %v2230 = vadd.f32 0.0, %v2229
      %v2231 = vpop.f32.mrf.mxu0
      %v2232 = vadd.f32 0.0, %v2231
      %2233 = vmatmul.bf16.gmra.mxu0 %v2154
      %v2234 = vpop.f32.mrf.mxu0
      %v2235 = vadd.f32 0.0, %v2234
      %v2236 = vpop.f32.mrf.mxu0
      %v2237 = vadd.f32 0.0, %v2236
      %2238 = vmatmul.bf16.gmra.mxu0 %v2157
      %v2239 = vpop.f32.mrf.mxu0
      %v2240 = vadd.f32 0.0, %v2239
      %v2241 = vpop.f32.mrf.mxu0
      %v2242 = vadd.f32 0.0, %v2241
      %2243 = vmatmul.bf16.gmra.mxu0 %v2160
      %v2244 = vpop.f32.mrf.mxu0
      %v2245 = vadd.f32 0.0, %v2244
      %v2246 = vpop.f32.mrf.mxu0
      %v2247 = vadd.f32 0.0, %v2246
      %2248 = vdwg.mxu0
      %v2249 = vadd.f32 %v1945, %v2175
      %v2250 = vadd.f32 %v1946, %v2177
      %v2251 = vadd.f32 %v1947, %v2180
      %v2252 = vadd.f32 %v1948, %v2182
      %v2253 = vadd.f32 %v1949, %v2185
      %v2254 = vadd.f32 %v1950, %v2187
      %v2255 = vadd.f32 %v1951, %v2190
      %v2256 = vadd.f32 %v1952, %v2192
      %v2257 = vadd.f32 %v1953, %v2195
      %v2258 = vadd.f32 %v1954, %v2197
      %v2259 = vadd.f32 %v1955, %v2200
      %v2260 = vadd.f32 %v1956, %v2202
      %v2261 = vadd.f32 %v1957, %v2205
      %v2262 = vadd.f32 %v1958, %v2207
      %v2263 = vadd.f32 %v1959, %v2210
      %v2264 = vadd.f32 %v1960, %v2212
      %v2265 = vadd.f32 %v1961, %v2215
      %v2266 = vadd.f32 %v1962, %v2217
      %v2267 = vadd.f32 %v1963, %v2220
      %v2268 = vadd.f32 %v1964, %v2222
      %v2269 = vadd.f32 %v1965, %v2225
      %v2270 = vadd.f32 %v1966, %v2227
      %v2271 = vadd.f32 %v1967, %v2230
      %v2272 = vadd.f32 %v1968, %v2232
      %v2273 = vadd.f32 %v1969, %v2235
      %v2274 = vadd.f32 %v1970, %v2237
      %v2275 = vadd.f32 %v1971, %v2240
      %v2276 = vadd.f32 %v1972, %v2242
      %v2277 = vadd.f32 %v1973, %v2245
      %v2278 = vadd.f32 %v1974, %v2247
      %v2279 = vld [vmem:[#allocation2 + $0x88] sm:$0x7]
      %s2280 = scalar_lea.vmem %s2, 28
      %v2281 = vld [vmem:[%s2280] sm:$0xf]
      %v2283 = vunpack.c.l.b16 %v2279
      %v2284 = vpack.c.b16 %v2283, %v2283
      %vm2285 = vsmask.f32 5376
      %v2287 = vshrl.u32 %v2070, 16
      %v2289 = vrot.slane %v2287, 2
      %v2290 = vshll.u32 %v2070, 16
      %v2292 = vrot.slane %v2290, 3
      %v2293 = vor.u32 %v2289, %v2292
      %v2295 = vshrl.u32 %v2071, 16
      %v2297 = vrot.slane %v2295, 2
      %v2298 = vshll.u32 %v2071, 16
      %v2300 = vrot.slane %v2298, 3
      %v2301 = vor.u32 %v2297, %v2300
      %v2302 = vsel %vm2285, %v2293, %v2301
      %v2304 = vshrl.u32 %v2072, 16
      %v2306 = vrot.slane %v2304, 2
      %v2307 = vshll.u32 %v2072, 16
      %v2309 = vrot.slane %v2307, 3
      %v2310 = vor.u32 %v2306, %v2309
      %v2311 = vsel %vm2285, %v2301, %v2310
      %v2313 = vshrl.u32 %v2073, 16
      %v2315 = vrot.slane %v2313, 2
      %v2316 = vshll.u32 %v2073, 16
      %v2318 = vrot.slane %v2316, 3
      %v2319 = vor.u32 %v2315, %v2318
      %v2320 = vsel %vm2285, %v2310, %v2319
      %v2322 = vshrl.u32 %v2074, 16
      %v2324 = vrot.slane %v2322, 2
      %v2325 = vshll.u32 %v2074, 16
      %v2327 = vrot.slane %v2325, 3
      %v2328 = vor.u32 %v2324, %v2327
      %v2329 = vsel %vm2285, %v2319, %v2328
      %v2331 = vshrl.u32 %v2075, 16
      %v2333 = vrot.slane %v2331, 2
      %v2334 = vshll.u32 %v2075, 16
      %v2336 = vrot.slane %v2334, 3
      %v2337 = vor.u32 %v2333, %v2336
      %v2338 = vsel %vm2285, %v2328, %v2337
      %v2340 = vshrl.u32 %v2076, 16
      %v2342 = vrot.slane %v2340, 2
      %v2343 = vshll.u32 %v2076, 16
      %v2345 = vrot.slane %v2343, 3
      %v2346 = vor.u32 %v2342, %v2345
      %v2347 = vsel %vm2285, %v2337, %v2346
      %v2349 = vshrl.u32 %v2077, 16
      %v2351 = vrot.slane %v2349, 2
      %v2352 = vshll.u32 %v2077, 16
      %v2354 = vrot.slane %v2352, 3
      %v2355 = vor.u32 %v2351, %v2354
      %v2356 = vsel %vm2285, %v2346, %v2355
      %v2358 = vshrl.u32 %v2078, 16
      %v2360 = vrot.slane %v2358, 2
      %v2361 = vshll.u32 %v2078, 16
      %v2363 = vrot.slane %v2361, 3
      %v2364 = vor.u32 %v2360, %v2363
      %v2365 = vsel %vm2285, %v2355, %v2364
      %v2367 = vshrl.u32 %v2079, 16
      %v2369 = vrot.slane %v2367, 2
      %v2370 = vshll.u32 %v2079, 16
      %v2372 = vrot.slane %v2370, 3
      %v2373 = vor.u32 %v2369, %v2372
      %v2374 = vsel %vm2285, %v2364, %v2373
      %v2376 = vshrl.u32 %v2080, 16
      %v2378 = vrot.slane %v2376, 2
      %v2379 = vshll.u32 %v2080, 16
      %v2381 = vrot.slane %v2379, 3
      %v2382 = vor.u32 %v2378, %v2381
      %v2383 = vsel %vm2285, %v2373, %v2382
      %v2385 = vshrl.u32 %v2081, 16
      %v2387 = vrot.slane %v2385, 2
      %v2388 = vshll.u32 %v2081, 16
      %v2390 = vrot.slane %v2388, 3
      %v2391 = vor.u32 %v2387, %v2390
      %v2392 = vsel %vm2285, %v2382, %v2391
      %v2394 = vshrl.u32 %v2082, 16
      %v2396 = vrot.slane %v2394, 2
      %v2397 = vshll.u32 %v2082, 16
      %v2399 = vrot.slane %v2397, 3
      %v2400 = vor.u32 %v2396, %v2399
      %v2401 = vsel %vm2285, %v2391, %v2400
      %v2403 = vshrl.u32 %v2083, 16
      %v2405 = vrot.slane %v2403, 2
      %v2406 = vshll.u32 %v2083, 16
      %v2408 = vrot.slane %v2406, 3
      %v2409 = vor.u32 %v2405, %v2408
      %v2410 = vsel %vm2285, %v2400, %v2409
      %v2412 = vshrl.u32 %v2084, 16
      %v2414 = vrot.slane %v2412, 2
      %v2415 = vshll.u32 %v2084, 16
      %v2417 = vrot.slane %v2415, 3
      %v2418 = vor.u32 %v2414, %v2417
      %v2419 = vsel %vm2285, %v2409, %v2418
      %v2421 = vshrl.u32 %v2284, 16
      %v2423 = vrot.slane %v2421, 2
      %v2424 = vshll.u32 %v2284, 16
      %v2426 = vrot.slane %v2424, 3
      %v2427 = vor.u32 %v2423, %v2426
      %v2428 = vsel %vm2285, %v2418, %v2427
      %v2430 = vsel %vm708, %v2302, 0
      %v2433 = vsel %vm708, %v2311, 0
      %v2436 = vsel %vm708, %v2320, 0
      %v2439 = vsel %vm708, %v2329, 0
      %v2442 = vsel %vm708, %v2338, 0
      %v2445 = vsel %vm708, %v2347, 0
      %v2448 = vsel %vm708, %v2356, 0
      %v2451 = vsel %vm708, %v2365, 0
      %v2454 = vsel %vm708, %v2374, 0
      %v2457 = vsel %vm708, %v2383, 0
      %v2460 = vsel %vm708, %v2392, 0
      %v2463 = vsel %vm708, %v2401, 0
      %v2466 = vsel %vm708, %v2410, 0
      %v2469 = vsel %vm708, %v2419, 0
      %v2472 = vsel %vm708, %v2428, 0
      %v2475 = vsel %vm754, %v2281, 0
      %2477 = vmatpush.bf16.msra.mxu0 0
      %2478 = vmatpush.bf16.msra.mxu0 0
      %2479 = vmatpush.bf16.msra.mxu0 0
      %2480 = vmatpush.bf16.msra.mxu0 0
      %2481 = vmatpush.bf16.msra.mxu0 0
      %2482 = vmatpush.bf16.msra.mxu0 0
      %2483 = vmatpush.bf16.msra.mxu0 0
      %2484 = vmatpush.bf16.msra.mxu0 %v2475
      %2485 = vmatmul.bf16.gmra.mxu0 %v2430
      %v2486 = vpop.f32.mrf.mxu0
      %v2487 = vadd.f32 0.0, %v2486
      %v2488 = vpop.f32.mrf.mxu0
      %v2489 = vadd.f32 0.0, %v2488
      %2490 = vmatmul.bf16.gmra.mxu0 %v2433
      %v2491 = vpop.f32.mrf.mxu0
      %v2492 = vadd.f32 0.0, %v2491
      %v2493 = vpop.f32.mrf.mxu0
      %v2494 = vadd.f32 0.0, %v2493
      %2495 = vmatmul.bf16.gmra.mxu0 %v2436
      %v2496 = vpop.f32.mrf.mxu0
      %v2497 = vadd.f32 0.0, %v2496
      %v2498 = vpop.f32.mrf.mxu0
      %v2499 = vadd.f32 0.0, %v2498
      %2500 = vmatmul.bf16.gmra.mxu0 %v2439
      %v2501 = vpop.f32.mrf.mxu0
      %v2502 = vadd.f32 0.0, %v2501
      %v2503 = vpop.f32.mrf.mxu0
      %v2504 = vadd.f32 0.0, %v2503
      %2505 = vmatmul.bf16.gmra.mxu0 %v2442
      %v2506 = vpop.f32.mrf.mxu0
      %v2507 = vadd.f32 0.0, %v2506
      %v2508 = vpop.f32.mrf.mxu0
      %v2509 = vadd.f32 0.0, %v2508
      %2510 = vmatmul.bf16.gmra.mxu0 %v2445
      %v2511 = vpop.f32.mrf.mxu0
      %v2512 = vadd.f32 0.0, %v2511
      %v2513 = vpop.f32.mrf.mxu0
      %v2514 = vadd.f32 0.0, %v2513
      %2515 = vmatmul.bf16.gmra.mxu0 %v2448
      %v2516 = vpop.f32.mrf.mxu0
      %v2517 = vadd.f32 0.0, %v2516
      %v2518 = vpop.f32.mrf.mxu0
      %v2519 = vadd.f32 0.0, %v2518
      %2520 = vmatmul.bf16.gmra.mxu0 %v2451
      %v2521 = vpop.f32.mrf.mxu0
      %v2522 = vadd.f32 0.0, %v2521
      %v2523 = vpop.f32.mrf.mxu0
      %v2524 = vadd.f32 0.0, %v2523
      %2525 = vmatmul.bf16.gmra.mxu0 %v2454
      %v2526 = vpop.f32.mrf.mxu0
      %v2527 = vadd.f32 0.0, %v2526
      %v2528 = vpop.f32.mrf.mxu0
      %v2529 = vadd.f32 0.0, %v2528
      %2530 = vmatmul.bf16.gmra.mxu0 %v2457
      %v2531 = vpop.f32.mrf.mxu0
      %v2532 = vadd.f32 0.0, %v2531
      %v2533 = vpop.f32.mrf.mxu0
      %v2534 = vadd.f32 0.0, %v2533
      %2535 = vmatmul.bf16.gmra.mxu0 %v2460
      %v2536 = vpop.f32.mrf.mxu0
      %v2537 = vadd.f32 0.0, %v2536
      %v2538 = vpop.f32.mrf.mxu0
      %v2539 = vadd.f32 0.0, %v2538
      %2540 = vmatmul.bf16.gmra.mxu0 %v2463
      %v2541 = vpop.f32.mrf.mxu0
      %v2542 = vadd.f32 0.0, %v2541
      %v2543 = vpop.f32.mrf.mxu0
      %v2544 = vadd.f32 0.0, %v2543
      %2545 = vmatmul.bf16.gmra.mxu0 %v2466
      %v2546 = vpop.f32.mrf.mxu0
      %v2547 = vadd.f32 0.0, %v2546
      %v2548 = vpop.f32.mrf.mxu0
      %v2549 = vadd.f32 0.0, %v2548
      %2550 = vmatmul.bf16.gmra.mxu0 %v2469
      %v2551 = vpop.f32.mrf.mxu0
      %v2552 = vadd.f32 0.0, %v2551
      %v2553 = vpop.f32.mrf.mxu0
      %v2554 = vadd.f32 0.0, %v2553
      %2555 = vmatmul.bf16.gmra.mxu0 %v2472
      %v2556 = vpop.f32.mrf.mxu0
      %v2557 = vadd.f32 0.0, %v2556
      %v2558 = vpop.f32.mrf.mxu0
      %v2559 = vadd.f32 0.0, %v2558
      %2560 = vdwg.mxu0
      %v2561 = vadd.f32 %v2249, %v2487
      %v2562 = vadd.f32 %v2250, %v2489
      %v2563 = vadd.f32 %v2251, %v2492
      %v2564 = vadd.f32 %v2252, %v2494
      %v2565 = vadd.f32 %v2253, %v2497
      %v2566 = vadd.f32 %v2254, %v2499
      %v2567 = vadd.f32 %v2255, %v2502
      %v2568 = vadd.f32 %v2256, %v2504
      %v2569 = vadd.f32 %v2257, %v2507
      %v2570 = vadd.f32 %v2258, %v2509
      %v2571 = vadd.f32 %v2259, %v2512
      %v2572 = vadd.f32 %v2260, %v2514
      %v2573 = vadd.f32 %v2261, %v2517
      %v2574 = vadd.f32 %v2262, %v2519
      %v2575 = vadd.f32 %v2263, %v2522
      %v2576 = vadd.f32 %v2264, %v2524
      %v2577 = vadd.f32 %v2265, %v2527
      %v2578 = vadd.f32 %v2266, %v2529
      %v2579 = vadd.f32 %v2267, %v2532
      %v2580 = vadd.f32 %v2268, %v2534
      %v2581 = vadd.f32 %v2269, %v2537
      %v2582 = vadd.f32 %v2270, %v2539
      %v2583 = vadd.f32 %v2271, %v2542
      %v2584 = vadd.f32 %v2272, %v2544
      %v2585 = vadd.f32 %v2273, %v2547
      %v2586 = vadd.f32 %v2274, %v2549
      %v2587 = vadd.f32 %v2275, %v2552
      %v2588 = vadd.f32 %v2276, %v2554
      %v2589 = vadd.f32 %v2277, %v2557
      %v2590 = vadd.f32 %v2278, %v2559
      %v2591 = vld [vmem:[#allocation2 + $0x10] sm:$0x8]
      %s2592 = scalar_lea.vmem %s2, 32
      %v2593 = vld [vmem:[%s2592] sm:$0xf]
      %v2595 = vunpack.c.l.b16 %v2591
      %v2596 = vpack.c.b16 %v2040, %v2595
      %vm2597 = vcmask 1044480
      %v2598 = vrot.slane %v2596, 3
      %v2599 = vrot.slane %v2071, 3
      %v2600 = vsel %vm2597, %v2598, %v2599
      %v2601 = vrot.slane %v2072, 3
      %v2602 = vsel %vm2597, %v2599, %v2601
      %v2603 = vrot.slane %v2073, 3
      %v2604 = vsel %vm2597, %v2601, %v2603
      %v2605 = vrot.slane %v2074, 3
      %v2606 = vsel %vm2597, %v2603, %v2605
      %v2607 = vrot.slane %v2075, 3
      %v2608 = vsel %vm2597, %v2605, %v2607
      %v2609 = vrot.slane %v2076, 3
      %v2610 = vsel %vm2597, %v2607, %v2609
      %v2611 = vrot.slane %v2077, 3
      %v2612 = vsel %vm2597, %v2609, %v2611
      %v2613 = vrot.slane %v2078, 3
      %v2614 = vsel %vm2597, %v2611, %v2613
      %v2615 = vrot.slane %v2079, 3
      %v2616 = vsel %vm2597, %v2613, %v2615
      %v2617 = vrot.slane %v2080, 3
      %v2618 = vsel %vm2597, %v2615, %v2617
      %v2619 = vrot.slane %v2081, 3
      %v2620 = vsel %vm2597, %v2617, %v2619
      %v2621 = vrot.slane %v2082, 3
      %v2622 = vsel %vm2597, %v2619, %v2621
      %v2623 = vrot.slane %v2083, 3
      %v2624 = vsel %vm2597, %v2621, %v2623
      %v2625 = vrot.slane %v2084, 3
      %v2626 = vsel %vm2597, %v2623, %v2625
      %v2627 = vrot.slane %v2284, 3
      %v2628 = vsel %vm2597, %v2625, %v2627
      %v2630 = vsel %vm708, %v2600, 0
      %v2633 = vsel %vm708, %v2602, 0
      %v2636 = vsel %vm708, %v2604, 0
      %v2639 = vsel %vm708, %v2606, 0
      %v2642 = vsel %vm708, %v2608, 0
      %v2645 = vsel %vm708, %v2610, 0
      %v2648 = vsel %vm708, %v2612, 0
      %v2651 = vsel %vm708, %v2614, 0
      %v2654 = vsel %vm708, %v2616, 0
      %v2657 = vsel %vm708, %v2618, 0
      %v2660 = vsel %vm708, %v2620, 0
      %v2663 = vsel %vm708, %v2622, 0
      %v2666 = vsel %vm708, %v2624, 0
      %v2669 = vsel %vm708, %v2626, 0
      %v2672 = vsel %vm708, %v2628, 0
      %v2675 = vsel %vm754, %v2593, 0
      %2677 = vmatpush.bf16.msra.mxu0 0
      %2678 = vmatpush.bf16.msra.mxu0 0
      %2679 = vmatpush.bf16.msra.mxu0 0
      %2680 = vmatpush.bf16.msra.mxu0 0
      %2681 = vmatpush.bf16.msra.mxu0 0
      %2682 = vmatpush.bf16.msra.mxu0 0
      %2683 = vmatpush.bf16.msra.mxu0 0
      %2684 = vmatpush.bf16.msra.mxu0 %v2675
      %2685 = vmatmul.bf16.gmra.mxu0 %v2630
      %v2686 = vpop.f32.mrf.mxu0
      %v2687 = vadd.f32 0.0, %v2686
      %v2688 = vpop.f32.mrf.mxu0
      %v2689 = vadd.f32 0.0, %v2688
      %2690 = vmatmul.bf16.gmra.mxu0 %v2633
      %v2691 = vpop.f32.mrf.mxu0
      %v2692 = vadd.f32 0.0, %v2691
      %v2693 = vpop.f32.mrf.mxu0
      %v2694 = vadd.f32 0.0, %v2693
      %2695 = vmatmul.bf16.gmra.mxu0 %v2636
      %v2696 = vpop.f32.mrf.mxu0
      %v2697 = vadd.f32 0.0, %v2696
      %v2698 = vpop.f32.mrf.mxu0
      %v2699 = vadd.f32 0.0, %v2698
      %2700 = vmatmul.bf16.gmra.mxu0 %v2639
      %v2701 = vpop.f32.mrf.mxu0
      %v2702 = vadd.f32 0.0, %v2701
      %v2703 = vpop.f32.mrf.mxu0
      %v2704 = vadd.f32 0.0, %v2703
      %2705 = vmatmul.bf16.gmra.mxu0 %v2642
      %v2706 = vpop.f32.mrf.mxu0
      %v2707 = vadd.f32 0.0, %v2706
      %v2708 = vpop.f32.mrf.mxu0
      %v2709 = vadd.f32 0.0, %v2708
      %2710 = vmatmul.bf16.gmra.mxu0 %v2645
      %v2711 = vpop.f32.mrf.mxu0
      %v2712 = vadd.f32 0.0, %v2711
      %v2713 = vpop.f32.mrf.mxu0
      %v2714 = vadd.f32 0.0, %v2713
      %2715 = vmatmul.bf16.gmra.mxu0 %v2648
      %v2716 = vpop.f32.mrf.mxu0
      %v2717 = vadd.f32 0.0, %v2716
      %v2718 = vpop.f32.mrf.mxu0
      %v2719 = vadd.f32 0.0, %v2718
      %2720 = vmatmul.bf16.gmra.mxu0 %v2651
      %v2721 = vpop.f32.mrf.mxu0
      %v2722 = vadd.f32 0.0, %v2721
      %v2723 = vpop.f32.mrf.mxu0
      %v2724 = vadd.f32 0.0, %v2723
      %2725 = vmatmul.bf16.gmra.mxu0 %v2654
      %v2726 = vpop.f32.mrf.mxu0
      %v2727 = vadd.f32 0.0, %v2726
      %v2728 = vpop.f32.mrf.mxu0
      %v2729 = vadd.f32 0.0, %v2728
      %2730 = vmatmul.bf16.gmra.mxu0 %v2657
      %v2731 = vpop.f32.mrf.mxu0
      %v2732 = vadd.f32 0.0, %v2731
      %v2733 = vpop.f32.mrf.mxu0
      %v2734 = vadd.f32 0.0, %v2733
      %2735 = vmatmul.bf16.gmra.mxu0 %v2660
      %v2736 = vpop.f32.mrf.mxu0
      %v2737 = vadd.f32 0.0, %v2736
      %v2738 = vpop.f32.mrf.mxu0
      %v2739 = vadd.f32 0.0, %v2738
      %2740 = vmatmul.bf16.gmra.mxu0 %v2663
      %v2741 = vpop.f32.mrf.mxu0
      %v2742 = vadd.f32 0.0, %v2741
      %v2743 = vpop.f32.mrf.mxu0
      %v2744 = vadd.f32 0.0, %v2743
      %2745 = vmatmul.bf16.gmra.mxu0 %v2666
      %v2746 = vpop.f32.mrf.mxu0
      %v2747 = vadd.f32 0.0, %v2746
      %v2748 = vpop.f32.mrf.mxu0
      %v2749 = vadd.f32 0.0, %v2748
      %2750 = vmatmul.bf16.gmra.mxu0 %v2669
      %v2751 = vpop.f32.mrf.mxu0
      %v2752 = vadd.f32 0.0, %v2751
      %v2753 = vpop.f32.mrf.mxu0
      %v2754 = vadd.f32 0.0, %v2753
      %2755 = vmatmul.bf16.gmra.mxu0 %v2672
      %v2756 = vpop.f32.mrf.mxu0
      %v2757 = vadd.f32 0.0, %v2756
      %v2758 = vpop.f32.mrf.mxu0
      %v2759 = vadd.f32 0.0, %v2758
      %2760 = vdwg.mxu0
      %v2761 = vadd.f32 %v2561, %v2687
      %v2762 = vadd.f32 %v2562, %v2689
      %v2763 = vadd.f32 %v2563, %v2692
      %v2764 = vadd.f32 %v2564, %v2694
      %v2765 = vadd.f32 %v2565, %v2697
      %v2766 = vadd.f32 %v2566, %v2699
      %v2767 = vadd.f32 %v2567, %v2702
      %v2768 = vadd.f32 %v2568, %v2704
      %v2769 = vadd.f32 %v2569, %v2707
      %v2770 = vadd.f32 %v2570, %v2709
      %v2771 = vadd.f32 %v2571, %v2712
      %v2772 = vadd.f32 %v2572, %v2714
      %v2773 = vadd.f32 %v2573, %v2717
      %v2774 = vadd.f32 %v2574, %v2719
      %v2775 = vadd.f32 %v2575, %v2722
      %v2776 = vadd.f32 %v2576, %v2724
      %v2777 = vadd.f32 %v2577, %v2727
      %v2778 = vadd.f32 %v2578, %v2729
      %v2779 = vadd.f32 %v2579, %v2732
      %v2780 = vadd.f32 %v2580, %v2734
      %v2781 = vadd.f32 %v2581, %v2737
      %v2782 = vadd.f32 %v2582, %v2739
      %v2783 = vadd.f32 %v2583, %v2742
      %v2784 = vadd.f32 %v2584, %v2744
      %v2785 = vadd.f32 %v2585, %v2747
      %v2786 = vadd.f32 %v2586, %v2749
      %v2787 = vadd.f32 %v2587, %v2752
      %v2788 = vadd.f32 %v2588, %v2754
      %v2789 = vadd.f32 %v2589, %v2757
      %v2790 = vadd.f32 %v2590, %v2759
      %v2791 = vld [vmem:[%s385] sm:$0xf]
      %v2792 = vld [vmem:[%s385 + $0x4] sm:$0xf]
      %v2793 = vld [vmem:[%s385 + $0x8] sm:$0xf]
      %v2794 = vld [vmem:[%s385 + $0xc] sm:$0xf]
      %v2795 = vld [vmem:[%s385 + $0x10] sm:$0xf]
      %v2796 = vld [vmem:[%s385 + $0x14] sm:$0xf]
      %v2797 = vld [vmem:[%s385 + $0x18] sm:$0xf]
      %v2798 = vld [vmem:[%s385 + $0x1c] sm:$0xf]
      %v2799 = vld [vmem:[%s385 + $0x20] sm:$0xf]
      %v2800 = vld [vmem:[%s385 + $0x24] sm:$0xf]
      %v2801 = vld [vmem:[%s385 + $0x28] sm:$0xf]
      %v2802 = vld [vmem:[%s385 + $0x2c] sm:$0xf]
      %v2803 = vld [vmem:[%s385 + $0x30] sm:$0xf]
      %v2804 = vld [vmem:[%s385 + $0x34] sm:$0xf]
      %v2805 = vld [vmem:[%s385 + $0x38] sm:$0xf]
      %v2806 = vld [vmem:[%s385 + $0x3c] sm:$0xf]
      %v2807 = vld [vmem:[%s385 + $0x40] sm:$0xf]
      %v2808 = vld [vmem:[%s385 + $0x44] sm:$0xf]
      %v2809 = vld [vmem:[%s385 + $0x48] sm:$0xf]
      %v2810 = vld [vmem:[%s385 + $0x4c] sm:$0xf]
      %v2811 = vld [vmem:[%s385 + $0x50] sm:$0xf]
      %v2812 = vld [vmem:[%s385 + $0x54] sm:$0xf]
      %v2813 = vld [vmem:[%s385 + $0x58] sm:$0xf]
      %v2814 = vld [vmem:[%s385 + $0x5c] sm:$0xf]
      %v2815 = vld [vmem:[%s385 + $0x60] sm:$0xf]
      %v2816 = vld [vmem:[%s385 + $0x64] sm:$0xf]
      %v2817 = vld [vmem:[%s385 + $0x68] sm:$0xf]
      %v2818 = vld [vmem:[%s385 + $0x6c] sm:$0xf]
      %v2819 = vld [vmem:[%s385 + $0x70] sm:$0xf]
      %v2820 = vld [vmem:[%s385 + $0x74] sm:$0xf]
      %v2821 = vld [vmem:[%s5] sm:$0x3]
      %v2852 = vunpack.c.l.b16 %v2791
      %v2853 = vunpack.c.l.b16 %v2792
      %v2854 = vunpack.c.l.b16 %v2793
      %v2855 = vunpack.c.l.b16 %v2794
      %v2856 = vunpack.c.l.b16 %v2795
      %v2857 = vunpack.c.l.b16 %v2796
      %v2858 = vunpack.c.l.b16 %v2797
      %v2859 = vunpack.c.l.b16 %v2798
      %v2860 = vunpack.c.l.b16 %v2799
      %v2861 = vunpack.c.l.b16 %v2800
      %v2862 = vunpack.c.l.b16 %v2801
      %v2863 = vunpack.c.l.b16 %v2802
      %v2864 = vunpack.c.l.b16 %v2803
      %v2865 = vunpack.c.l.b16 %v2804
      %v2866 = vunpack.c.l.b16 %v2805
      %v2867 = vunpack.c.l.b16 %v2806
      %v2868 = vunpack.c.l.b16 %v2807
      %v2869 = vunpack.c.l.b16 %v2808
      %v2870 = vunpack.c.l.b16 %v2809
      %v2871 = vunpack.c.l.b16 %v2810
      %v2872 = vunpack.c.l.b16 %v2811
      %v2873 = vunpack.c.l.b16 %v2812
      %v2874 = vunpack.c.l.b16 %v2813
      %v2875 = vunpack.c.l.b16 %v2814
      %v2876 = vunpack.c.l.b16 %v2815
      %v2877 = vunpack.c.l.b16 %v2816
      %v2878 = vunpack.c.l.b16 %v2817
      %v2879 = vunpack.c.l.b16 %v2818
      %v2880 = vunpack.c.l.b16 %v2819
      %v2881 = vunpack.c.l.b16 %v2820
      %v2882 = vpack.c.b16 %v2853, %v2852
      %v2883 = vpack.c.b16 %v2855, %v2854
      %v2884 = vpack.c.b16 %v2857, %v2856
      %v2885 = vpack.c.b16 %v2859, %v2858
      %v2886 = vpack.c.b16 %v2861, %v2860
      %v2887 = vpack.c.b16 %v2863, %v2862
      %v2888 = vpack.c.b16 %v2865, %v2864
      %v2889 = vpack.c.b16 %v2867, %v2866
      %v2890 = vpack.c.b16 %v2869, %v2868
      %v2891 = vpack.c.b16 %v2871, %v2870
      %v2892 = vpack.c.b16 %v2873, %v2872
      %v2893 = vpack.c.b16 %v2875, %v2874
      %v2894 = vpack.c.b16 %v2877, %v2876
      %v2895 = vpack.c.b16 %v2879, %v2878
      %v2896 = vpack.c.b16 %v2881, %v2880
      %vm2897 = vcmask 31744
      %v2899 = vsel %vm2897, %v2882, 0
      %v2902 = vsel %vm2897, %v2883, 0
      %v2905 = vsel %vm2897, %v2884, 0
      %v2908 = vsel %vm2897, %v2885, 0
      %v2911 = vsel %vm2897, %v2886, 0
      %v2914 = vsel %vm2897, %v2887, 0
      %v2917 = vsel %vm2897, %v2888, 0
      %v2920 = vsel %vm2897, %v2889, 0
      %v2923 = vsel %vm2897, %v2890, 0
      %v2926 = vsel %vm2897, %v2891, 0
      %v2929 = vsel %vm2897, %v2892, 0
      %v2932 = vsel %vm2897, %v2893, 0
      %v2935 = vsel %vm2897, %v2894, 0
      %v2938 = vsel %vm2897, %v2895, 0
      %v2941 = vsel %vm2897, %v2896, 0
      %vm2943 = vcmask 1041408
      %v2945 = vsel %vm2943, %v2821, 0
      %2947 = vmatpush.bf16.msra.mxu0 0
      %2948 = vmatpush.bf16.msra.mxu0 0
      %2949 = vmatpush.bf16.msra.mxu0 0
      %2950 = vmatpush.bf16.msra.mxu0 0
      %2951 = vmatpush.bf16.msra.mxu0 0
      %2952 = vmatpush.bf16.msra.mxu0 0
      %2953 = vmatpush.bf16.msra.mxu0 0
      %2954 = vmatpush.bf16.msra.mxu0 %v2945
      %2955 = vmatmul.bf16.gmra.mxu0 %v2899
      %v2956 = vpop.f32.mrf.mxu0
      %v2957 = vadd.f32 0.0, %v2956
      %v2958 = vpop.f32.mrf.mxu0
      %v2959 = vadd.f32 0.0, %v2958
      %2960 = vmatmul.bf16.gmra.mxu0 %v2902
      %v2961 = vpop.f32.mrf.mxu0
      %v2962 = vadd.f32 0.0, %v2961
      %v2963 = vpop.f32.mrf.mxu0
      %v2964 = vadd.f32 0.0, %v2963
      %2965 = vmatmul.bf16.gmra.mxu0 %v2905
      %v2966 = vpop.f32.mrf.mxu0
      %v2967 = vadd.f32 0.0, %v2966
      %v2968 = vpop.f32.mrf.mxu0
      %v2969 = vadd.f32 0.0, %v2968
      %2970 = vmatmul.bf16.gmra.mxu0 %v2908
      %v2971 = vpop.f32.mrf.mxu0
      %v2972 = vadd.f32 0.0, %v2971
      %v2973 = vpop.f32.mrf.mxu0
      %v2974 = vadd.f32 0.0, %v2973
      %2975 = vmatmul.bf16.gmra.mxu0 %v2911
      %v2976 = vpop.f32.mrf.mxu0
      %v2977 = vadd.f32 0.0, %v2976
      %v2978 = vpop.f32.mrf.mxu0
      %v2979 = vadd.f32 0.0, %v2978
      %2980 = vmatmul.bf16.gmra.mxu0 %v2914
      %v2981 = vpop.f32.mrf.mxu0
      %v2982 = vadd.f32 0.0, %v2981
      %v2983 = vpop.f32.mrf.mxu0
      %v2984 = vadd.f32 0.0, %v2983
      %2985 = vmatmul.bf16.gmra.mxu0 %v2917
      %v2986 = vpop.f32.mrf.mxu0
      %v2987 = vadd.f32 0.0, %v2986
      %v2988 = vpop.f32.mrf.mxu0
      %v2989 = vadd.f32 0.0, %v2988
      %2990 = vmatmul.bf16.gmra.mxu0 %v2920
      %v2991 = vpop.f32.mrf.mxu0
      %v2992 = vadd.f32 0.0, %v2991
      %v2993 = vpop.f32.mrf.mxu0
      %v2994 = vadd.f32 0.0, %v2993
      %2995 = vmatmul.bf16.gmra.mxu0 %v2923
      %v2996 = vpop.f32.mrf.mxu0
      %v2997 = vadd.f32 0.0, %v2996
      %v2998 = vpop.f32.mrf.mxu0
      %v2999 = vadd.f32 0.0, %v2998
      %3000 = vmatmul.bf16.gmra.mxu0 %v2926
      %v3001 = vpop.f32.mrf.mxu0
      %v3002 = vadd.f32 0.0, %v3001
      %v3003 = vpop.f32.mrf.mxu0
      %v3004 = vadd.f32 0.0, %v3003
      %3005 = vmatmul.bf16.gmra.mxu0 %v2929
      %v3006 = vpop.f32.mrf.mxu0
      %v3007 = vadd.f32 0.0, %v3006
      %v3008 = vpop.f32.mrf.mxu0
      %v3009 = vadd.f32 0.0, %v3008
      %3010 = vmatmul.bf16.gmra.mxu0 %v2932
      %v3011 = vpop.f32.mrf.mxu0
      %v3012 = vadd.f32 0.0, %v3011
      %v3013 = vpop.f32.mrf.mxu0
      %v3014 = vadd.f32 0.0, %v3013
      %3015 = vmatmul.bf16.gmra.mxu0 %v2935
      %v3016 = vpop.f32.mrf.mxu0
      %v3017 = vadd.f32 0.0, %v3016
      %v3018 = vpop.f32.mrf.mxu0
      %v3019 = vadd.f32 0.0, %v3018
      %3020 = vmatmul.bf16.gmra.mxu0 %v2938
      %v3021 = vpop.f32.mrf.mxu0
      %v3022 = vadd.f32 0.0, %v3021
      %v3023 = vpop.f32.mrf.mxu0
      %v3024 = vadd.f32 0.0, %v3023
      %3025 = vmatmul.bf16.gmra.mxu0 %v2941
      %v3026 = vpop.f32.mrf.mxu0
      %v3027 = vadd.f32 0.0, %v3026
      %v3028 = vpop.f32.mrf.mxu0
      %v3029 = vadd.f32 0.0, %v3028
      %3030 = vdwg.mxu0
      %v3031 = vadd.f32 %v2761, %v2957
      %v3032 = vadd.f32 %v2762, %v2959
      %v3033 = vadd.f32 %v2763, %v2962
      %v3034 = vadd.f32 %v2764, %v2964
      %v3035 = vadd.f32 %v2765, %v2967
      %v3036 = vadd.f32 %v2766, %v2969
      %v3037 = vadd.f32 %v2767, %v2972
      %v3038 = vadd.f32 %v2768, %v2974
      %v3039 = vadd.f32 %v2769, %v2977
      %v3040 = vadd.f32 %v2770, %v2979
      %v3041 = vadd.f32 %v2771, %v2982
      %v3042 = vadd.f32 %v2772, %v2984
      %v3043 = vadd.f32 %v2773, %v2987
      %v3044 = vadd.f32 %v2774, %v2989
      %v3045 = vadd.f32 %v2775, %v2992
      %v3046 = vadd.f32 %v2776, %v2994
      %v3047 = vadd.f32 %v2777, %v2997
      %v3048 = vadd.f32 %v2778, %v2999
      %v3049 = vadd.f32 %v2779, %v3002
      %v3050 = vadd.f32 %v2780, %v3004
      %v3051 = vadd.f32 %v2781, %v3007
      %v3052 = vadd.f32 %v2782, %v3009
      %v3053 = vadd.f32 %v2783, %v3012
      %v3054 = vadd.f32 %v2784, %v3014
      %v3055 = vadd.f32 %v2785, %v3017
      %v3056 = vadd.f32 %v2786, %v3019
      %v3057 = vadd.f32 %v2787, %v3022
      %v3058 = vadd.f32 %v2788, %v3024
      %v3059 = vadd.f32 %v2789, %v3027
      %v3060 = vadd.f32 %v2790, %v3029
      %v3061 = vld [vmem:[%s3] sm:$0x1]
      %v3063 = vperm.slane %v3061, 0
      %v3065 = vadd.f32 %v3031, %v3063
      %v3066 = vadd.f32 %v3032, %v3063
      %v3067 = vadd.f32 %v3033, %v3063
      %v3068 = vadd.f32 %v3034, %v3063
      %v3069 = vadd.f32 %v3035, %v3063
      %v3070 = vadd.f32 %v3036, %v3063
      %v3071 = vadd.f32 %v3037, %v3063
      %v3072 = vadd.f32 %v3038, %v3063
      %v3073 = vadd.f32 %v3039, %v3063
      %v3074 = vadd.f32 %v3040, %v3063
      %v3075 = vadd.f32 %v3041, %v3063
      %v3076 = vadd.f32 %v3042, %v3063
      %v3077 = vadd.f32 %v3043, %v3063
      %v3078 = vadd.f32 %v3044, %v3063
      %v3079 = vadd.f32 %v3045, %v3063
      %v3080 = vadd.f32 %v3046, %v3063
      %v3081 = vadd.f32 %v3047, %v3063
      %v3082 = vadd.f32 %v3048, %v3063
      %v3083 = vadd.f32 %v3049, %v3063
      %v3084 = vadd.f32 %v3050, %v3063
      %v3085 = vadd.f32 %v3051, %v3063
      %v3086 = vadd.f32 %v3052, %v3063
      %v3087 = vadd.f32 %v3053, %v3063
      %v3088 = vadd.f32 %v3054, %v3063
      %v3089 = vadd.f32 %v3055, %v3063
      %v3090 = vadd.f32 %v3056, %v3063
      %v3091 = vadd.f32 %v3057, %v3063
      %v3092 = vadd.f32 %v3058, %v3063
      %v3093 = vadd.f32 %v3059, %v3063
      %v3094 = vadd.f32 %v3060, %v3063
      %v3095 = vmax.f32 %v3065, 0.0
      %v3096 = vmax.f32 %v3066, 0.0
      %v3097 = vmax.f32 %v3067, 0.0
      %v3098 = vmax.f32 %v3068, 0.0
      %v3099 = vmax.f32 %v3069, 0.0
      %v3100 = vmax.f32 %v3070, 0.0
      %v3101 = vmax.f32 %v3071, 0.0
      %v3102 = vmax.f32 %v3072, 0.0
      %v3103 = vmax.f32 %v3073, 0.0
      %v3104 = vmax.f32 %v3074, 0.0
      %v3105 = vmax.f32 %v3075, 0.0
      %v3106 = vmax.f32 %v3076, 0.0
      %v3107 = vmax.f32 %v3077, 0.0
      %v3108 = vmax.f32 %v3078, 0.0
      %v3109 = vmax.f32 %v3079, 0.0
      %v3110 = vmax.f32 %v3080, 0.0
      %v3111 = vmax.f32 %v3081, 0.0
      %v3112 = vmax.f32 %v3082, 0.0
      %v3113 = vmax.f32 %v3083, 0.0
      %v3114 = vmax.f32 %v3084, 0.0
      %v3115 = vmax.f32 %v3085, 0.0
      %v3116 = vmax.f32 %v3086, 0.0
      %v3117 = vmax.f32 %v3087, 0.0
      %v3118 = vmax.f32 %v3088, 0.0
      %v3119 = vmax.f32 %v3089, 0.0
      %v3120 = vmax.f32 %v3090, 0.0
      %v3121 = vmax.f32 %v3091, 0.0
      %v3122 = vmax.f32 %v3092, 0.0
      %v3123 = vmax.f32 %v3093, 0.0
      %v3124 = vmax.f32 %v3094, 0.0
      %v3125 = vpack.c.bf16 %v3095, %v3095
      %v3126 = vpack.c.bf16 %v3096, %v3096
      %v3127 = vpack.c.bf16 %v3097, %v3097
      %v3128 = vpack.c.bf16 %v3098, %v3098
      %v3129 = vpack.c.bf16 %v3099, %v3099
      %v3130 = vpack.c.bf16 %v3100, %v3100
      %v3131 = vpack.c.bf16 %v3101, %v3101
      %v3132 = vpack.c.bf16 %v3102, %v3102
      %v3133 = vpack.c.bf16 %v3103, %v3103
      %v3134 = vpack.c.bf16 %v3104, %v3104
      %v3135 = vpack.c.bf16 %v3105, %v3105
      %v3136 = vpack.c.bf16 %v3106, %v3106
      %v3137 = vpack.c.bf16 %v3107, %v3107
      %v3138 = vpack.c.bf16 %v3108, %v3108
      %v3139 = vpack.c.bf16 %v3109, %v3109
      %v3140 = vpack.c.bf16 %v3110, %v3110
      %v3141 = vpack.c.bf16 %v3111, %v3111
      %v3142 = vpack.c.bf16 %v3112, %v3112
      %v3143 = vpack.c.bf16 %v3113, %v3113
      %v3144 = vpack.c.bf16 %v3114, %v3114
      %v3145 = vpack.c.bf16 %v3115, %v3115
      %v3146 = vpack.c.bf16 %v3116, %v3116
      %v3147 = vpack.c.bf16 %v3117, %v3117
      %v3148 = vpack.c.bf16 %v3118, %v3118
      %v3149 = vpack.c.bf16 %v3119, %v3119
      %v3150 = vpack.c.bf16 %v3120, %v3120
      %v3151 = vpack.c.bf16 %v3121, %v3121
      %v3152 = vpack.c.bf16 %v3122, %v3122
      %v3153 = vpack.c.bf16 %v3123, %v3123
      %v3154 = vpack.c.bf16 %v3124, %v3124
      %3155 = vst [vmem:[%s395] sm:$0xf] %v3125
      %3156 = vst [vmem:[%s395 + $0x4] sm:$0xf] %v3126
      %3157 = vst [vmem:[%s395 + $0x8] sm:$0xf] %v3127
      %3158 = vst [vmem:[%s395 + $0xc] sm:$0xf] %v3128
      %3159 = vst [vmem:[%s395 + $0x10] sm:$0xf] %v3129
      %3160 = vst [vmem:[%s395 + $0x14] sm:$0xf] %v3130
      %3161 = vst [vmem:[%s395 + $0x18] sm:$0xf] %v3131
      %3162 = vst [vmem:[%s395 + $0x1c] sm:$0xf] %v3132
      %3163 = vst [vmem:[%s395 + $0x20] sm:$0xf] %v3133
      %3164 = vst [vmem:[%s395 + $0x24] sm:$0xf] %v3134
      %3165 = vst [vmem:[%s395 + $0x28] sm:$0xf] %v3135
      %3166 = vst [vmem:[%s395 + $0x2c] sm:$0xf] %v3136
      %3167 = vst [vmem:[%s395 + $0x30] sm:$0xf] %v3137
      %3168 = vst [vmem:[%s395 + $0x34] sm:$0xf] %v3138
      %3169 = vst [vmem:[%s395 + $0x38] sm:$0xf] %v3139
      %3170 = vst [vmem:[%s395 + $0x3c] sm:$0xf] %v3140
      %3171 = vst [vmem:[%s395 + $0x40] sm:$0xf] %v3141
      %3172 = vst [vmem:[%s395 + $0x44] sm:$0xf] %v3142
      %3173 = vst [vmem:[%s395 + $0x48] sm:$0xf] %v3143
      %3174 = vst [vmem:[%s395 + $0x4c] sm:$0xf] %v3144
      %3175 = vst [vmem:[%s395 + $0x50] sm:$0xf] %v3145
      %3176 = vst [vmem:[%s395 + $0x54] sm:$0xf] %v3146
      %3177 = vst [vmem:[%s395 + $0x58] sm:$0xf] %v3147
      %3178 = vst [vmem:[%s395 + $0x5c] sm:$0xf] %v3148
      %3179 = vst [vmem:[%s395 + $0x60] sm:$0xf] %v3149
      %3180 = vst [vmem:[%s395 + $0x64] sm:$0xf] %v3150
      %3181 = vst [vmem:[%s395 + $0x68] sm:$0xf] %v3151
      %3182 = vst [vmem:[%s395 + $0x6c] sm:$0xf] %v3152
      %3183 = vst [vmem:[%s395 + $0x70] sm:$0xf] %v3153
      %3184 = vst [vmem:[%s395 + $0x74] sm:$0xf] %v3154
      %s3185 = smul.u32 30, %s22
      %p3186 = scmp.lt.s32.totalorder %s21, 1
      %s3187 = scalar_select %p3186, %s21, 1
      %p3188 = scmp.lt.s32.totalorder %s3185, 59
      %s3189 = scalar_select %p3188, %s3185, 59
      %s3190 = smul.addr %s3187, 60
      %s3191 = sadd.s32 %s3189, %s3190
      %s3192 = smul.addr %s3191, 4
      %s3193 = scalar_lea.vmem %s6, %s3192
      // Predicated region
      $region45: #{residual_block_forward.3} parent=43 // pred_check
        %p3194 = pneg %p200
      $region46: #{residual_block_forward.3} parent=43 // pred_check_branch
        %3196 = sbr.rel (%p3194) target = $region48
      $region47: #{residual_block_forward.3} parent=43 // pred_region
        %s3197 = smul.u32 30, %s22
      $region48: #{residual_block_forward.3} parent=43 // pred_fallthru
        _
    $region44: #{residual_block_forward.3} parent=5 // pred_fallthru
      _
    %p3198 = scmp.le.s32.totalorder 2, %s12
    // Predicated region
    $region49: #{residual_block_forward.3} parent=5 // pred_check
      %p3199 = pneg %p3198
    $region50: #{residual_block_forward.3} parent=5 // pred_check_branch
      %3201 = sbr.rel (%p3199) target = $region52
    $region51: #{residual_block_forward.3} parent=5 // pred_region
      %s3202 = ssub.s32 %s12, 2
      // Predicated region
      $region53: #{residual_block_forward.3} parent=51 // pred_check
        %p3203 = pneg %p206
      $region54: #{residual_block_forward.3} parent=51 // pred_check_branch
        %3205 = sbr.rel (%p3203) target = $region56
      $region55: #{residual_block_forward.3} parent=51 // pred_region
        %s3206 = smul.u32 30, %s24
        %p3207 = scmp.lt.s32.totalorder %s23, 1
        %s3208 = scalar_select %p3207, %s23, 1
        %p3209 = scmp.lt.s32.totalorder %s3206, 59
        %s3210 = scalar_select %p3209, %s3206, 59
        %s3211 = smul.addr %s3208, 60
        %s3212 = sadd.s32 %s3210, %s3211
        %s3213 = smul.addr %s3212, 4
        %s3214 = scalar_lea.vmem %s6, %s3213
      $region56: #{residual_block_forward.3} parent=51 // pred_fallthru
        _
    $region52: #{residual_block_forward.3} parent=5 // pred_fallthru
      _
  $region6: #{residual_block_forward.3} parent=0 // loop_footer
    %s16 = sadd.s32 1, %s12
  $region7: #{residual_block_forward.3} parent=0 // loop_footer_branch
    %11 = sbr.rel target = $region3
  $region8: #{residual_block_forward.3} parent=0 // loop_exit
    _

</llo_original>
